<compile_context>
chip_gen: v5e
topology: v5e:2x2
jax: 0.10.0
libtpu: 0.0.40
codegen_flags: <defaults>
</compile_context>

<pallas_src>
import jax
import jax.numpy as jnp
from jax.experimental import pallas as pl
from jax.experimental.pallas import tpu as pltpu

NUM_CLASSES = 3
C_PAD = 128          # lane-padded width of the head / kernel output


# ---------------------------------------------------------------------------
# Fused Pallas kernel: full LSTM stack (both directions) + decoder head.
# ---------------------------------------------------------------------------
def make_fused_kernel(T, Bp, H, num_layers):
    H3, H4 = 3 * H, 4 * H

    def kernel(*refs):
        x_ref = refs[0]
        layer_refs = refs[1:1 + 6 * num_layers]
        wd1_ref, bd1_ref, wd2_ref, bd2_ref = refs[1 + 6 * num_layers:5 + 6 * num_layers]
        out_ref = refs[5 + 6 * num_layers]
        gxf_scr = refs[6 + 6 * num_layers]
        gxb_scr = refs[7 + 6 * num_layers]

        def run_dir(gx_scr, whh, reverse):
            """One LSTM direction; h/c stay in registers, fully unrolled over T."""
            h = jnp.zeros((Bp, H), jnp.float32)
            c = jnp.zeros((Bp, H), jnp.float32)
            hs = [None] * T
            for s in range(T):
                t = T - 1 - s if reverse else s
                g = gx_scr[t] + jnp.dot(h, whh, preferred_element_type=jnp.float32)
                sg = jax.nn.sigmoid(g[:, :H3])        # i | f | o  (contiguous slab)
                gg = jnp.tanh(g[:, H3:])              # g gate
                c = sg[:, H:2 * H] * c + sg[:, :H] * gg
                h = sg[:, 2 * H:H3] * jnp.tanh(c)
                hs[t] = h
            return hs                                  # natural time order

        # ---- bidirectional LSTM stack ---------------------------------------
        x = x_ref[...].reshape(T * Bp, -1)             # current layer input (T*Bp, Din)
        enc = None
        for layer in range(num_layers):
            wih_f, whh_f, b_f, wih_b, whh_b, b_b = layer_refs[6 * layer:6 * layer + 6]

            # Input contribution for all timesteps, both directions: two big MXU
            # matmuls, parked in VMEM scratch (not held live across the T loop).
            gxf_scr[...] = (jnp.dot(x, wih_f[...], preferred_element_type=jnp.float32)
                            + b_f[...]).reshape(T, Bp, H4)
            gxb_scr[...] = (jnp.dot(x, wih_b[...], preferred_element_type=jnp.float32)
                            + b_b[...]).reshape(T, Bp, H4)

            hs_f = run_dir(gxf_scr, whh_f[...], reverse=False)
            hs_b = run_dir(gxb_scr, whh_b[...], reverse=True)

            if layer + 1 < num_layers:
                # next layer input: per-timestep [h_fwd, h_bwd]
                x = jnp.concatenate([jnp.stack(hs_f, 0), jnp.stack(hs_b, 0)],
                                    axis=-1).reshape(T * Bp, 2 * H)
            else:
                # encoding = cat(outputs[0], outputs[-1], -1) -> (Bp, 4H)
                enc = jnp.concatenate(
                    [hs_f[0], hs_b[0], hs_f[T - 1], hs_b[T - 1]], axis=-1)

        # ---- decoder1 -> decoder2 -> log_softmax (lane-padded to 128) --------
        h1 = jnp.dot(enc, wd1_ref[...], preferred_element_type=jnp.float32) + bd1_ref[...]
        logits = jnp.dot(h1, wd2_ref[...], preferred_element_type=jnp.float32) + bd2_ref[...]
        col = jax.lax.broadcasted_iota(jnp.int32, logits.shape, 1)
        logits = jnp.where(col < NUM_CLASSES, logits, -1e30)   # mask padded classes
        m = jnp.max(logits, axis=-1, keepdims=True)
        z = logits - m
        lse = jnp.log(jnp.sum(jnp.exp(z), axis=-1, keepdims=True))
        out_ref[...] = z - lse                                  # (Bp, 128) full tile

    return kernel


def _vmem():
    return pl.BlockSpec(memory_space=pltpu.MemorySpace.VMEM)


# ---------------------------------------------------------------------------
# Forward pass wrapper (matches lsRNN.forward semantics).
# ---------------------------------------------------------------------------
def lsrnn_forward(params, tokens):
    """tokens: (B, T) int32 token ids -> (B, 3) log-probabilities."""
    B, T = tokens.shape
    H = params["lstm"][0]["fwd"][1].shape[0]          # whh_t is (H, 4H)
    L = len(params["lstm"])
    Bp = ((B + 7) // 8) * 8                           # sublane-pad the batch

    # embedding(inputs.permute(1, 0)) -> (T, B, E), zero-pad batch to Bp.
    x = jnp.take(params["embedding"], tokens.T, axis=0)
    x = jnp.pad(x, ((0, 0), (0, Bp - B), (0, 0)))

    flat = [x]
    for lp in params["lstm"]:
        flat.extend(lp["fwd"])
        flat.extend(lp["bwd"])
    flat.extend(params["head"])

    out_padded = pl.pallas_call(
        make_fused_kernel(T, Bp, H, L),
        out_shape=jax.ShapeDtypeStruct((Bp, C_PAD), jnp.float32),
        in_specs=[_vmem()] * len(flat),
        out_specs=_vmem(),
        scratch_shapes=[pltpu.VMEM((T, Bp, 4 * H), jnp.float32),   # gx fwd
                        pltpu.VMEM((T, Bp, 4 * H), jnp.float32)],  # gx bwd
    )(*flat)
    return out_padded[:B, :NUM_CLASSES]


# ---------------------------------------------------------------------------
# Parameter init (deterministic, synthetic), pre-transposed / gate-reordered.
# ---------------------------------------------------------------------------
def init_params(key, vocab_size, embed_size, num_hiddens, num_layers):
    H = num_hiddens

    def nrm(k, shape, scale=0.1):
        return scale * jax.random.normal(k, shape, dtype=jnp.float32)

    def reorder(w):
        # PyTorch gate order (i, f, g, o) -> kernel order (i, f, o, g) along dim 0.
        i, f, g, o = w[:H], w[H:2 * H], w[2 * H:3 * H], w[3 * H:4 * H]
        return jnp.concatenate([i, f, o, g], axis=0)

    n_keys = 1 + num_layers * 2 * 4 + 4                # embedding + LSTM + head
    keys = iter(jax.random.split(key, n_keys))

    params = {"embedding": nrm(next(keys), (vocab_size, embed_size))}

    lstm = []
    for layer in range(num_layers):
        in_size = embed_size if layer == 0 else 2 * H
        layer_p = {}
        for name in ("fwd", "bwd"):
            w_ih = nrm(next(keys), (4 * H, in_size))   # PyTorch layout
            w_hh = nrm(next(keys), (4 * H, H))
            b_ih = nrm(next(keys), (4 * H,))
            b_hh = nrm(next(keys), (4 * H,))
            layer_p[name] = (
                jnp.transpose(reorder(w_ih)),                  # (in, 4H)
                jnp.transpose(reorder(w_hh)),                  # (H, 4H)
                reorder(b_ih + b_hh).reshape(1, 4 * H),        # (1, 4H)
            )
        lstm.append(layer_p)
    params["lstm"] = lstm

    # decoder1: Linear(4H, 100), decoder2: Linear(100, 3) -- zero-padded to 128 lanes.
    w1 = nrm(next(keys), (100, 4 * H))
    b1 = nrm(next(keys), (100,))
    w2 = nrm(next(keys), (NUM_CLASSES, 100))
    b2 = nrm(next(keys), (NUM_CLASSES,))
    wd1 = jnp.zeros((4 * H, C_PAD), jnp.float32).at[:, :100].set(w1.T)
    bd1 = jnp.zeros((1, C_PAD), jnp.float32).at[:, :100].set(b1)
    wd2 = jnp.zeros((C_PAD, C_PAD), jnp.float32).at[:100, :NUM_CLASSES].set(w2.T)
    bd2 = jnp.zeros((1, C_PAD), jnp.float32).at[:, :NUM_CLASSES].set(b2)
    params["head"] = (wd1, bd1, wd2, bd2)
    return params


# ---------------------------------------------------------------------------
if __name__ == "__main__":
    vocab_size = 50
    embed_size = 32
    num_hiddens = 32
    num_layers = 2
    batch = 4
    seq_len = 8

    root = jax.random.PRNGKey(0)
    k_param, k_tok = jax.random.split(root)

    params = init_params(k_param, vocab_size, embed_size, num_hiddens, num_layers)
    tokens = jax.random.randint(k_tok, (batch, seq_len), 0, vocab_size, dtype=jnp.int32)

    out = jax.jit(lsrnn_forward)(params, tokens)
    out = jax.block_until_ready(out)

    assert out.shape == (batch, NUM_CLASSES)
    assert bool(jnp.all(jnp.isfinite(out)))
    # log-softmax rows should sum (in prob space) to ~1
    assert bool(jnp.allclose(jnp.sum(jnp.exp(out), axis=1), 1.0, atol=1e-4))

    print("KERNEL_OK")
</pallas_src>

<mosaic_0001>
module attributes {stable_mosaic.version = 11 : i64} {
  func.func @kernel(%arg0: memref<8x8x32xf32, #tpu.memory_space<vmem>>, %arg1: memref<32x128xf32, #tpu.memory_space<vmem>>, %arg2: memref<32x128xf32, #tpu.memory_space<vmem>>, %arg3: memref<1x128xf32, #tpu.memory_space<vmem>>, %arg4: memref<32x128xf32, #tpu.memory_space<vmem>>, %arg5: memref<32x128xf32, #tpu.memory_space<vmem>>, %arg6: memref<1x128xf32, #tpu.memory_space<vmem>>, %arg7: memref<64x128xf32, #tpu.memory_space<vmem>>, %arg8: memref<32x128xf32, #tpu.memory_space<vmem>>, %arg9: memref<1x128xf32, #tpu.memory_space<vmem>>, %arg10: memref<64x128xf32, #tpu.memory_space<vmem>>, %arg11: memref<32x128xf32, #tpu.memory_space<vmem>>, %arg12: memref<1x128xf32, #tpu.memory_space<vmem>>, %arg13: memref<128x128xf32, #tpu.memory_space<vmem>>, %arg14: memref<1x128xf32, #tpu.memory_space<vmem>>, %arg15: memref<128x128xf32, #tpu.memory_space<vmem>>, %arg16: memref<1x128xf32, #tpu.memory_space<vmem>>, %arg17: memref<8x128xf32, #tpu.memory_space<vmem>>, %arg18: memref<8x8x128xf32, #tpu.memory_space<vmem>>, %arg19: memref<8x8x128xf32, #tpu.memory_space<vmem>>) attributes {dimension_semantics = [], scalar_prefetch = 0 : i64, scratch_operands = 2 : i64, tpu.core_type = #tpu.core_type<tc>} {
    %c0 = arith.constant 0 : index
    %c0_0 = arith.constant 0 : index
    %c0_1 = arith.constant 0 : index
    %0 = vector.load %arg0[%c0, %c0_0, %c0_1] : memref<8x8x32xf32, #tpu.memory_space<vmem>>, vector<8x8x32xf32>
    %1 = vector.shape_cast %0 : vector<8x8x32xf32> to vector<64x32xf32>
    %c0_2 = arith.constant 0 : index
    %c0_3 = arith.constant 0 : index
    %2 = vector.load %arg1[%c0_2, %c0_3] : memref<32x128xf32, #tpu.memory_space<vmem>>, vector<32x128xf32>
    %cst = arith.constant dense<0.000000e+00> : vector<64x128xf32>
    %3 = tpu.matmul %1, %2, %cst {dimension_numbers = #tpu.dot_dimension_numbers<[1], [0], [0], [1], [0, 0, 1, 1], [], []>} : vector<64x32xf32>, vector<32x128xf32>, vector<64x128xf32> -> vector<64x128xf32>
    %c0_4 = arith.constant 0 : index
    %c0_5 = arith.constant 0 : index
    %4 = vector.load %arg3[%c0_4, %c0_5] : memref<1x128xf32, #tpu.memory_space<vmem>>, vector<1x128xf32>
    %5 = vector.broadcast %4 : vector<1x128xf32> to vector<64x128xf32>
    %6 = arith.addf %3, %5 : vector<64x128xf32>
    %7 = vector.shape_cast %6 : vector<64x128xf32> to vector<8x8x128xf32>
    %c0_6 = arith.constant 0 : index
    %c0_7 = arith.constant 0 : index
    %c0_8 = arith.constant 0 : index
    %8 = vector.load %arg18[%c0_6, %c0_7, %c0_8] : memref<8x8x128xf32, #tpu.memory_space<vmem>>, vector<8x8x128xf32>
    tpu.vector_store %arg18[%c0_6, %c0_7, %c0_8], %7 {strides = array<i32>} : memref<8x8x128xf32, #tpu.memory_space<vmem>>, vector<8x8x128xf32>,
    %c0_9 = arith.constant 0 : index
    %c0_10 = arith.constant 0 : index
    %9 = vector.load %arg4[%c0_9, %c0_10] : memref<32x128xf32, #tpu.memory_space<vmem>>, vector<32x128xf32>
    %cst_11 = arith.constant dense<0.000000e+00> : vector<64x128xf32>
    %10 = tpu.matmul %1, %9, %cst_11 {dimension_numbers = #tpu.dot_dimension_numbers<[1], [0], [0], [1], [0, 0, 1, 1], [], []>} : vector<64x32xf32>, vector<32x128xf32>, vector<64x128xf32> -> vector<64x128xf32>
    %c0_12 = arith.constant 0 : index
    %c0_13 = arith.constant 0 : index
    %11 = vector.load %arg6[%c0_12, %c0_13] : memref<1x128xf32, #tpu.memory_space<vmem>>, vector<1x128xf32>
    %12 = vector.broadcast %11 : vector<1x128xf32> to vector<64x128xf32>
    %13 = arith.addf %10, %12 : vector<64x128xf32>
    %14 = vector.shape_cast %13 : vector<64x128xf32> to vector<8x8x128xf32>
    %c0_14 = arith.constant 0 : index
    %c0_15 = arith.constant 0 : index
    %c0_16 = arith.constant 0 : index
    %15 = vector.load %arg19[%c0_14, %c0_15, %c0_16] : memref<8x8x128xf32, #tpu.memory_space<vmem>>, vector<8x8x128xf32>
    tpu.vector_store %arg19[%c0_14, %c0_15, %c0_16], %14 {strides = array<i32>} : memref<8x8x128xf32, #tpu.memory_space<vmem>>, vector<8x8x128xf32>,
    %c0_17 = arith.constant 0 : index
    %c0_18 = arith.constant 0 : index
    %16 = vector.load %arg2[%c0_17, %c0_18] : memref<32x128xf32, #tpu.memory_space<vmem>>, vector<32x128xf32>
    %cst_19 = arith.constant 0.000000e+00 : f32
    %17 = vector.broadcast %cst_19 : f32 to vector<8x32xf32>
    %cst_20 = arith.constant 0.000000e+00 : f32
    %18 = vector.broadcast %cst_20 : f32 to vector<8x32xf32>
    %c0_21 = arith.constant 0 : index
    %c0_22 = arith.constant 0 : index
    %c0_23 = arith.constant 0 : index
    %19 = vector.load %arg18[%c0_21, %c0_22, %c0_23] : memref<8x8x128xf32, #tpu.memory_space<vmem>>, vector<1x8x128xf32>
    %20 = vector.shape_cast %19 : vector<1x8x128xf32> to vector<8x128xf32>
    %cst_24 = arith.constant dense<0.000000e+00> : vector<8x128xf32>
    %21 = tpu.matmul %17, %16, %cst_24 {dimension_numbers = #tpu.dot_dimension_numbers<[1], [0], [0], [1], [0, 0, 1, 1], [], []>} : vector<8x32xf32>, vector<32x128xf32>, vector<8x128xf32> -> vector<8x128xf32>
    %22 = arith.addf %20, %21 : vector<8x128xf32>
    %23 = vector.extract_strided_slice %22 {offsets = [0, 0], sizes = [8, 96], strides = [1, 1]} : vector<8x128xf32> to vector<8x96xf32>
    %24 = arith.negf %23 : vector<8x96xf32>
    %25 = math.exp %24 : vector<8x96xf32>
    %cst_25 = arith.constant 1.000000e+00 : f32
    %26 = vector.broadcast %cst_25 : f32 to vector<8x96xf32>
    %27 = arith.addf %26, %25 : vector<8x96xf32>
    %28 = arith.divf %26, %27 : vector<8x96xf32>
    %29 = vector.extract_strided_slice %22 {offsets = [0, 96], sizes = [8, 32], strides = [1, 1]} : vector<8x128xf32> to vector<8x32xf32>
    %30 = math.tanh %29 : vector<8x32xf32>
    %31 = vector.extract_strided_slice %28 {offsets = [0, 32], sizes = [8, 32], strides = [1, 1]} : vector<8x96xf32> to vector<8x32xf32>
    %32 = arith.mulf %31, %18 : vector<8x32xf32>
    %33 = vector.extract_strided_slice %28 {offsets = [0, 0], sizes = [8, 32], strides = [1, 1]} : vector<8x96xf32> to vector<8x32xf32>
    %34 = arith.mulf %33, %30 : vector<8x32xf32>
    %35 = arith.addf %32, %34 : vector<8x32xf32>
    %36 = vector.extract_strided_slice %28 {offsets = [0, 64], sizes = [8, 32], strides = [1, 1]} : vector<8x96xf32> to vector<8x32xf32>
    %37 = math.tanh %35 : vector<8x32xf32>
    %38 = arith.mulf %36, %37 : vector<8x32xf32>
    %c1 = arith.constant 1 : index
    %c0_26 = arith.constant 0 : index
    %c0_27 = arith.constant 0 : index
    %39 = vector.load %arg18[%c1, %c0_26, %c0_27] : memref<8x8x128xf32, #tpu.memory_space<vmem>>, vector<1x8x128xf32>
    %40 = vector.shape_cast %39 : vector<1x8x128xf32> to vector<8x128xf32>
    %cst_28 = arith.constant dense<0.000000e+00> : vector<8x128xf32>
    %41 = tpu.matmul %38, %16, %cst_28 {dimension_numbers = #tpu.dot_dimension_numbers<[1], [0], [0], [1], [0, 0, 1, 1], [], []>} : vector<8x32xf32>, vector<32x128xf32>, vector<8x128xf32> -> vector<8x128xf32>
    %42 = arith.addf %40, %41 : vector<8x128xf32>
    %43 = vector.extract_strided_slice %42 {offsets = [0, 0], sizes = [8, 96], strides = [1, 1]} : vector<8x128xf32> to vector<8x96xf32>
    %44 = arith.negf %43 : vector<8x96xf32>
    %45 = math.exp %44 : vector<8x96xf32>
    %cst_29 = arith.constant 1.000000e+00 : f32
    %46 = vector.broadcast %cst_29 : f32 to vector<8x96xf32>
    %47 = arith.addf %46, %45 : vector<8x96xf32>
    %48 = arith.divf %46, %47 : vector<8x96xf32>
    %49 = vector.extract_strided_slice %42 {offsets = [0, 96], sizes = [8, 32], strides = [1, 1]} : vector<8x128xf32> to vector<8x32xf32>
    %50 = math.tanh %49 : vector<8x32xf32>
    %51 = vector.extract_strided_slice %48 {offsets = [0, 32], sizes = [8, 32], strides = [1, 1]} : vector<8x96xf32> to vector<8x32xf32>
    %52 = arith.mulf %51, %35 : vector<8x32xf32>
    %53 = vector.extract_strided_slice %48 {offsets = [0, 0], sizes = [8, 32], strides = [1, 1]} : vector<8x96xf32> to vector<8x32xf32>
    %54 = arith.mulf %53, %50 : vector<8x32xf32>
    %55 = arith.addf %52, %54 : vector<8x32xf32>
    %56 = vector.extract_strided_slice %48 {offsets = [0, 64], sizes = [8, 32], strides = [1, 1]} : vector<8x96xf32> to vector<8x32xf32>
    %57 = math.tanh %55 : vector<8x32xf32>
    %58 = arith.mulf %56, %57 : vector<8x32xf32>
    %c2 = arith.constant 2 : index
    %c0_30 = arith.constant 0 : index
    %c0_31 = arith.constant 0 : index
    %59 = vector.load %arg18[%c2, %c0_30, %c0_31] : memref<8x8x128xf32, #tpu.memory_space<vmem>>, vector<1x8x128xf32>
    %60 = vector.shape_cast %59 : vector<1x8x128xf32> to vector<8x128xf32>
    %cst_32 = arith.constant dense<0.000000e+00> : vector<8x128xf32>
    %61 = tpu.matmul %58, %16, %cst_32 {dimension_numbers = #tpu.dot_dimension_numbers<[1], [0], [0], [1], [0, 0, 1, 1], [], []>} : vector<8x32xf32>, vector<32x128xf32>, vector<8x128xf32> -> vector<8x128xf32>
    %62 = arith.addf %60, %61 : vector<8x128xf32>
    %63 = vector.extract_strided_slice %62 {offsets = [0, 0], sizes = [8, 96], strides = [1, 1]} : vector<8x128xf32> to vector<8x96xf32>
    %64 = arith.negf %63 : vector<8x96xf32>
    %65 = math.exp %64 : vector<8x96xf32>
    %cst_33 = arith.constant 1.000000e+00 : f32
    %66 = vector.broadcast %cst_33 : f32 to vector<8x96xf32>
    %67 = arith.addf %66, %65 : vector<8x96xf32>
    %68 = arith.divf %66, %67 : vector<8x96xf32>
    %69 = vector.extract_strided_slice %62 {offsets = [0, 96], sizes = [8, 32], strides = [1, 1]} : vector<8x128xf32> to vector<8x32xf32>
    %70 = math.tanh %69 : vector<8x32xf32>
    %71 = vector.extract_strided_slice %68 {offsets = [0, 32], sizes = [8, 32], strides = [1, 1]} : vector<8x96xf32> to vector<8x32xf32>
    %72 = arith.mulf %71, %55 : vector<8x32xf32>
    %73 = vector.extract_strided_slice %68 {offsets = [0, 0], sizes = [8, 32], strides = [1, 1]} : vector<8x96xf32> to vector<8x32xf32>
    %74 = arith.mulf %73, %70 : vector<8x32xf32>
    %75 = arith.addf %72, %74 : vector<8x32xf32>
    %76 = vector.extract_strided_slice %68 {offsets = [0, 64], sizes = [8, 32], strides = [1, 1]} : vector<8x96xf32> to vector<8x32xf32>
    %77 = math.tanh %75 : vector<8x32xf32>
    %78 = arith.mulf %76, %77 : vector<8x32xf32>
    %c3 = arith.constant 3 : index
    %c0_34 = arith.constant 0 : index
    %c0_35 = arith.constant 0 : index
    %79 = vector.load %arg18[%c3, %c0_34, %c0_35] : memref<8x8x128xf32, #tpu.memory_space<vmem>>, vector<1x8x128xf32>
    %80 = vector.shape_cast %79 : vector<1x8x128xf32> to vector<8x128xf32>
    %cst_36 = arith.constant dense<0.000000e+00> : vector<8x128xf32>
    %81 = tpu.matmul %78, %16, %cst_36 {dimension_numbers = #tpu.dot_dimension_numbers<[1], [0], [0], [1], [0, 0, 1, 1], [], []>} : vector<8x32xf32>, vector<32x128xf32>, vector<8x128xf32> -> vector<8x128xf32>
    %82 = arith.addf %80, %81 : vector<8x128xf32>
    %83 = vector.extract_strided_slice %82 {offsets = [0, 0], sizes = [8, 96], strides = [1, 1]} : vector<8x128xf32> to vector<8x96xf32>
    %84 = arith.negf %83 : vector<8x96xf32>
    %85 = math.exp %84 : vector<8x96xf32>
    %cst_37 = arith.constant 1.000000e+00 : f32
    %86 = vector.broadcast %cst_37 : f32 to vector<8x96xf32>
    %87 = arith.addf %86, %85 : vector<8x96xf32>
    %88 = arith.divf %86, %87 : vector<8x96xf32>
    %89 = vector.extract_strided_slice %82 {offsets = [0, 96], sizes = [8, 32], strides = [1, 1]} : vector<8x128xf32> to vector<8x32xf32>
    %90 = math.tanh %89 : vector<8x32xf32>
    %91 = vector.extract_strided_slice %88 {offsets = [0, 32], sizes = [8, 32], strides = [1, 1]} : vector<8x96xf32> to vector<8x32xf32>
    %92 = arith.mulf %91, %75 : vector<8x32xf32>
    %93 = vector.extract_strided_slice %88 {offsets = [0, 0], sizes = [8, 32], strides = [1, 1]} : vector<8x96xf32> to vector<8x32xf32>
    %94 = arith.mulf %93, %90 : vector<8x32xf32>
    %95 = arith.addf %92, %94 : vector<8x32xf32>
    %96 = vector.extract_strided_slice %88 {offsets = [0, 64], sizes = [8, 32], strides = [1, 1]} : vector<8x96xf32> to vector<8x32xf32>
    %97 = math.tanh %95 : vector<8x32xf32>
    %98 = arith.mulf %96, %97 : vector<8x32xf32>
    %c4 = arith.constant 4 : index
    %c0_38 = arith.constant 0 : index
    %c0_39 = arith.constant 0 : index
    %99 = vector.load %arg18[%c4, %c0_38, %c0_39] : memref<8x8x128xf32, #tpu.memory_space<vmem>>, vector<1x8x128xf32>
    %100 = vector.shape_cast %99 : vector<1x8x128xf32> to vector<8x128xf32>
    %cst_40 = arith.constant dense<0.000000e+00> : vector<8x128xf32>
    %101 = tpu.matmul %98, %16, %cst_40 {dimension_numbers = #tpu.dot_dimension_numbers<[1], [0], [0], [1], [0, 0, 1, 1], [], []>} : vector<8x32xf32>, vector<32x128xf32>, vector<8x128xf32> -> vector<8x128xf32>
    %102 = arith.addf %100, %101 : vector<8x128xf32>
    %103 = vector.extract_strided_slice %102 {offsets = [0, 0], sizes = [8, 96], strides = [1, 1]} : vector<8x128xf32> to vector<8x96xf32>
    %104 = arith.negf %103 : vector<8x96xf32>
    %105 = math.exp %104 : vector<8x96xf32>
    %cst_41 = arith.constant 1.000000e+00 : f32
    %106 = vector.broadcast %cst_41 : f32 to vector<8x96xf32>
    %107 = arith.addf %106, %105 : vector<8x96xf32>
    %108 = arith.divf %106, %107 : vector<8x96xf32>
    %109 = vector.extract_strided_slice %102 {offsets = [0, 96], sizes = [8, 32], strides = [1, 1]} : vector<8x128xf32> to vector<8x32xf32>
    %110 = math.tanh %109 : vector<8x32xf32>
    %111 = vector.extract_strided_slice %108 {offsets = [0, 32], sizes = [8, 32], strides = [1, 1]} : vector<8x96xf32> to vector<8x32xf32>
    %112 = arith.mulf %111, %95 : vector<8x32xf32>
    %113 = vector.extract_strided_slice %108 {offsets = [0, 0], sizes = [8, 32], strides = [1, 1]} : vector<8x96xf32> to vector<8x32xf32>
    %114 = arith.mulf %113, %110 : vector<8x32xf32>
    %115 = arith.addf %112, %114 : vector<8x32xf32>
    %116 = vector.extract_strided_slice %108 {offsets = [0, 64], sizes = [8, 32], strides = [1, 1]} : vector<8x96xf32> to vector<8x32xf32>
    %117 = math.tanh %115 : vector<8x32xf32>
    %118 = arith.mulf %116, %117 : vector<8x32xf32>
    %c5 = arith.constant 5 : index
    %c0_42 = arith.constant 0 : index
    %c0_43 = arith.constant 0 : index
    %119 = vector.load %arg18[%c5, %c0_42, %c0_43] : memref<8x8x128xf32, #tpu.memory_space<vmem>>, vector<1x8x128xf32>
    %120 = vector.shape_cast %119 : vector<1x8x128xf32> to vector<8x128xf32>
    %cst_44 = arith.constant dense<0.000000e+00> : vector<8x128xf32>
    %121 = tpu.matmul %118, %16, %cst_44 {dimension_numbers = #tpu.dot_dimension_numbers<[1], [0], [0], [1], [0, 0, 1, 1], [], []>} : vector<8x32xf32>, vector<32x128xf32>, vector<8x128xf32> -> vector<8x128xf32>
    %122 = arith.addf %120, %121 : vector<8x128xf32>
    %123 = vector.extract_strided_slice %122 {offsets = [0, 0], sizes = [8, 96], strides = [1, 1]} : vector<8x128xf32> to vector<8x96xf32>
    %124 = arith.negf %123 : vector<8x96xf32>
    %125 = math.exp %124 : vector<8x96xf32>
    %cst_45 = arith.constant 1.000000e+00 : f32
    %126 = vector.broadcast %cst_45 : f32 to vector<8x96xf32>
    %127 = arith.addf %126, %125 : vector<8x96xf32>
    %128 = arith.divf %126, %127 : vector<8x96xf32>
    %129 = vector.extract_strided_slice %122 {offsets = [0, 96], sizes = [8, 32], strides = [1, 1]} : vector<8x128xf32> to vector<8x32xf32>
    %130 = math.tanh %129 : vector<8x32xf32>
    %131 = vector.extract_strided_slice %128 {offsets = [0, 32], sizes = [8, 32], strides = [1, 1]} : vector<8x96xf32> to vector<8x32xf32>
    %132 = arith.mulf %131, %115 : vector<8x32xf32>
    %133 = vector.extract_strided_slice %128 {offsets = [0, 0], sizes = [8, 32], strides = [1, 1]} : vector<8x96xf32> to vector<8x32xf32>
    %134 = arith.mulf %133, %130 : vector<8x32xf32>
    %135 = arith.addf %132, %134 : vector<8x32xf32>
    %136 = vector.extract_strided_slice %128 {offsets = [0, 64], sizes = [8, 32], strides = [1, 1]} : vector<8x96xf32> to vector<8x32xf32>
    %137 = math.tanh %135 : vector<8x32xf32>
    %138 = arith.mulf %136, %137 : vector<8x32xf32>
    %c6 = arith.constant 6 : index
    %c0_46 = arith.constant 0 : index
    %c0_47 = arith.constant 0 : index
    %139 = vector.load %arg18[%c6, %c0_46, %c0_47] : memref<8x8x128xf32, #tpu.memory_space<vmem>>, vector<1x8x128xf32>
    %140 = vector.shape_cast %139 : vector<1x8x128xf32> to vector<8x128xf32>
    %cst_48 = arith.constant dense<0.000000e+00> : vector<8x128xf32>
    %141 = tpu.matmul %138, %16, %cst_48 {dimension_numbers = #tpu.dot_dimension_numbers<[1], [0], [0], [1], [0, 0, 1, 1], [], []>} : vector<8x32xf32>, vector<32x128xf32>, vector<8x128xf32> -> vector<8x128xf32>
    %142 = arith.addf %140, %141 : vector<8x128xf32>
    %143 = vector.extract_strided_slice %142 {offsets = [0, 0], sizes = [8, 96], strides = [1, 1]} : vector<8x128xf32> to vector<8x96xf32>
    %144 = arith.negf %143 : vector<8x96xf32>
    %145 = math.exp %144 : vector<8x96xf32>
    %cst_49 = arith.constant 1.000000e+00 : f32
    %146 = vector.broadcast %cst_49 : f32 to vector<8x96xf32>
    %147 = arith.addf %146, %145 : vector<8x96xf32>
    %148 = arith.divf %146, %147 : vector<8x96xf32>
    %149 = vector.extract_strided_slice %142 {offsets = [0, 96], sizes = [8, 32], strides = [1, 1]} : vector<8x128xf32> to vector<8x32xf32>
    %150 = math.tanh %149 : vector<8x32xf32>
    %151 = vector.extract_strided_slice %148 {offsets = [0, 32], sizes = [8, 32], strides = [1, 1]} : vector<8x96xf32> to vector<8x32xf32>
    %152 = arith.mulf %151, %135 : vector<8x32xf32>
    %153 = vector.extract_strided_slice %148 {offsets = [0, 0], sizes = [8, 32], strides = [1, 1]} : vector<8x96xf32> to vector<8x32xf32>
    %154 = arith.mulf %153, %150 : vector<8x32xf32>
    %155 = arith.addf %152, %154 : vector<8x32xf32>
    %156 = vector.extract_strided_slice %148 {offsets = [0, 64], sizes = [8, 32], strides = [1, 1]} : vector<8x96xf32> to vector<8x32xf32>
    %157 = math.tanh %155 : vector<8x32xf32>
    %158 = arith.mulf %156, %157 : vector<8x32xf32>
    %c7 = arith.constant 7 : index
    %c0_50 = arith.constant 0 : index
    %c0_51 = arith.constant 0 : index
    %159 = vector.load %arg18[%c7, %c0_50, %c0_51] : memref<8x8x128xf32, #tpu.memory_space<vmem>>, vector<1x8x128xf32>
    %160 = vector.shape_cast %159 : vector<1x8x128xf32> to vector<8x128xf32>
    %cst_52 = arith.constant dense<0.000000e+00> : vector<8x128xf32>
    %161 = tpu.matmul %158, %16, %cst_52 {dimension_numbers = #tpu.dot_dimension_numbers<[1], [0], [0], [1], [0, 0, 1, 1], [], []>} : vector<8x32xf32>, vector<32x128xf32>, vector<8x128xf32> -> vector<8x128xf32>
    %162 = arith.addf %160, %161 : vector<8x128xf32>
    %163 = vector.extract_strided_slice %162 {offsets = [0, 0], sizes = [8, 96], strides = [1, 1]} : vector<8x128xf32> to vector<8x96xf32>
    %164 = arith.negf %163 : vector<8x96xf32>
    %165 = math.exp %164 : vector<8x96xf32>
    %cst_53 = arith.constant 1.000000e+00 : f32
    %166 = vector.broadcast %cst_53 : f32 to vector<8x96xf32>
    %167 = arith.addf %166, %165 : vector<8x96xf32>
    %168 = arith.divf %166, %167 : vector<8x96xf32>
    %169 = vector.extract_strided_slice %162 {offsets = [0, 96], sizes = [8, 32], strides = [1, 1]} : vector<8x128xf32> to vector<8x32xf32>
    %170 = math.tanh %169 : vector<8x32xf32>
    %171 = vector.extract_strided_slice %168 {offsets = [0, 32], sizes = [8, 32], strides = [1, 1]} : vector<8x96xf32> to vector<8x32xf32>
    %172 = arith.mulf %171, %155 : vector<8x32xf32>
    %173 = vector.extract_strided_slice %168 {offsets = [0, 0], sizes = [8, 32], strides = [1, 1]} : vector<8x96xf32> to vector<8x32xf32>
    %174 = arith.mulf %173, %170 : vector<8x32xf32>
    %175 = arith.addf %172, %174 : vector<8x32xf32>
    %176 = vector.extract_strided_slice %168 {offsets = [0, 64], sizes = [8, 32], strides = [1, 1]} : vector<8x96xf32> to vector<8x32xf32>
    %177 = math.tanh %175 : vector<8x32xf32>
    %178 = arith.mulf %176, %177 : vector<8x32xf32>
    %c0_54 = arith.constant 0 : index
    %c0_55 = arith.constant 0 : index
    %179 = vector.load %arg5[%c0_54, %c0_55] : memref<32x128xf32, #tpu.memory_space<vmem>>, vector<32x128xf32>
    %cst_56 = arith.constant 0.000000e+00 : f32
    %180 = vector.broadcast %cst_56 : f32 to vector<8x32xf32>
    %cst_57 = arith.constant 0.000000e+00 : f32
    %181 = vector.broadcast %cst_57 : f32 to vector<8x32xf32>
    %c7_58 = arith.constant 7 : index
    %c0_59 = arith.constant 0 : index
    %c0_60 = arith.constant 0 : index
    %182 = vector.load %arg19[%c7_58, %c0_59, %c0_60] : memref<8x8x128xf32, #tpu.memory_space<vmem>>, vector<1x8x128xf32>
    %183 = vector.shape_cast %182 : vector<1x8x128xf32> to vector<8x128xf32>
    %cst_61 = arith.constant dense<0.000000e+00> : vector<8x128xf32>
    %184 = tpu.matmul %180, %179, %cst_61 {dimension_numbers = #tpu.dot_dimension_numbers<[1], [0], [0], [1], [0, 0, 1, 1], [], []>} : vector<8x32xf32>, vector<32x128xf32>, vector<8x128xf32> -> vector<8x128xf32>
    %185 = arith.addf %183, %184 : vector<8x128xf32>
    %186 = vector.extract_strided_slice %185 {offsets = [0, 0], sizes = [8, 96], strides = [1, 1]} : vector<8x128xf32> to vector<8x96xf32>
    %187 = arith.negf %186 : vector<8x96xf32>
    %188 = math.exp %187 : vector<8x96xf32>
    %cst_62 = arith.constant 1.000000e+00 : f32
    %189 = vector.broadcast %cst_62 : f32 to vector<8x96xf32>
    %190 = arith.addf %189, %188 : vector<8x96xf32>
    %191 = arith.divf %189, %190 : vector<8x96xf32>
    %192 = vector.extract_strided_slice %185 {offsets = [0, 96], sizes = [8, 32], strides = [1, 1]} : vector<8x128xf32> to vector<8x32xf32>
    %193 = math.tanh %192 : vector<8x32xf32>
    %194 = vector.extract_strided_slice %191 {offsets = [0, 32], sizes = [8, 32], strides = [1, 1]} : vector<8x96xf32> to vector<8x32xf32>
    %195 = arith.mulf %194, %181 : vector<8x32xf32>
    %196 = vector.extract_strided_slice %191 {offsets = [0, 0], sizes = [8, 32], strides = [1, 1]} : vector<8x96xf32> to vector<8x32xf32>
    %197 = arith.mulf %196, %193 : vector<8x32xf32>
    %198 = arith.addf %195, %197 : vector<8x32xf32>
    %199 = vector.extract_strided_slice %191 {offsets = [0, 64], sizes = [8, 32], strides = [1, 1]} : vector<8x96xf32> to vector<8x32xf32>
    %200 = math.tanh %198 : vector<8x32xf32>
    %201 = arith.mulf %199, %200 : vector<8x32xf32>
    %c6_63 = arith.constant 6 : index
    %c0_64 = arith.constant 0 : index
    %c0_65 = arith.constant 0 : index
    %202 = vector.load %arg19[%c6_63, %c0_64, %c0_65] : memref<8x8x128xf32, #tpu.memory_space<vmem>>, vector<1x8x128xf32>
    %203 = vector.shape_cast %202 : vector<1x8x128xf32> to vector<8x128xf32>
    %cst_66 = arith.constant dense<0.000000e+00> : vector<8x128xf32>
    %204 = tpu.matmul %201, %179, %cst_66 {dimension_numbers = #tpu.dot_dimension_numbers<[1], [0], [0], [1], [0, 0, 1, 1], [], []>} : vector<8x32xf32>, vector<32x128xf32>, vector<8x128xf32> -> vector<8x128xf32>
    %205 = arith.addf %203, %204 : vector<8x128xf32>
    %206 = vector.extract_strided_slice %205 {offsets = [0, 0], sizes = [8, 96], strides = [1, 1]} : vector<8x128xf32> to vector<8x96xf32>
    %207 = arith.negf %206 : vector<8x96xf32>
    %208 = math.exp %207 : vector<8x96xf32>
    %cst_67 = arith.constant 1.000000e+00 : f32
    %209 = vector.broadcast %cst_67 : f32 to vector<8x96xf32>
    %210 = arith.addf %209, %208 : vector<8x96xf32>
    %211 = arith.divf %209, %210 : vector<8x96xf32>
    %212 = vector.extract_strided_slice %205 {offsets = [0, 96], sizes = [8, 32], strides = [1, 1]} : vector<8x128xf32> to vector<8x32xf32>
    %213 = math.tanh %212 : vector<8x32xf32>
    %214 = vector.extract_strided_slice %211 {offsets = [0, 32], sizes = [8, 32], strides = [1, 1]} : vector<8x96xf32> to vector<8x32xf32>
    %215 = arith.mulf %214, %198 : vector<8x32xf32>
    %216 = vector.extract_strided_slice %211 {offsets = [0, 0], sizes = [8, 32], strides = [1, 1]} : vector<8x96xf32> to vector<8x32xf32>
    %217 = arith.mulf %216, %213 : vector<8x32xf32>
    %218 = arith.addf %215, %217 : vector<8x32xf32>
    %219 = vector.extract_strided_slice %211 {offsets = [0, 64], sizes = [8, 32], strides = [1, 1]} : vector<8x96xf32> to vector<8x32xf32>
    %220 = math.tanh %218 : vector<8x32xf32>
    %221 = arith.mulf %219, %220 : vector<8x32xf32>
    %c5_68 = arith.constant 5 : index
    %c0_69 = arith.constant 0 : index
    %c0_70 = arith.constant 0 : index
    %222 = vector.load %arg19[%c5_68, %c0_69, %c0_70] : memref<8x8x128xf32, #tpu.memory_space<vmem>>, vector<1x8x128xf32>
    %223 = vector.shape_cast %222 : vector<1x8x128xf32> to vector<8x128xf32>
    %cst_71 = arith.constant dense<0.000000e+00> : vector<8x128xf32>
    %224 = tpu.matmul %221, %179, %cst_71 {dimension_numbers = #tpu.dot_dimension_numbers<[1], [0], [0], [1], [0, 0, 1, 1], [], []>} : vector<8x32xf32>, vector<32x128xf32>, vector<8x128xf32> -> vector<8x128xf32>
    %225 = arith.addf %223, %224 : vector<8x128xf32>
    %226 = vector.extract_strided_slice %225 {offsets = [0, 0], sizes = [8, 96], strides = [1, 1]} : vector<8x128xf32> to vector<8x96xf32>
    %227 = arith.negf %226 : vector<8x96xf32>
    %228 = math.exp %227 : vector<8x96xf32>
    %cst_72 = arith.constant 1.000000e+00 : f32
    %229 = vector.broadcast %cst_72 : f32 to vector<8x96xf32>
    %230 = arith.addf %229, %228 : vector<8x96xf32>
    %231 = arith.divf %229, %230 : vector<8x96xf32>
    %232 = vector.extract_strided_slice %225 {offsets = [0, 96], sizes = [8, 32], strides = [1, 1]} : vector<8x128xf32> to vector<8x32xf32>
    %233 = math.tanh %232 : vector<8x32xf32>
    %234 = vector.extract_strided_slice %231 {offsets = [0, 32], sizes = [8, 32], strides = [1, 1]} : vector<8x96xf32> to vector<8x32xf32>
    %235 = arith.mulf %234, %218 : vector<8x32xf32>
    %236 = vector.extract_strided_slice %231 {offsets = [0, 0], sizes = [8, 32], strides = [1, 1]} : vector<8x96xf32> to vector<8x32xf32>
    %237 = arith.mulf %236, %233 : vector<8x32xf32>
    %238 = arith.addf %235, %237 : vector<8x32xf32>
    %239 = vector.extract_strided_slice %231 {offsets = [0, 64], sizes = [8, 32], strides = [1, 1]} : vector<8x96xf32> to vector<8x32xf32>
    %240 = math.tanh %238 : vector<8x32xf32>
    %241 = arith.mulf %239, %240 : vector<8x32xf32>
    %c4_73 = arith.constant 4 : index
    %c0_74 = arith.constant 0 : index
    %c0_75 = arith.constant 0 : index
    %242 = vector.load %arg19[%c4_73, %c0_74, %c0_75] : memref<8x8x128xf32, #tpu.memory_space<vmem>>, vector<1x8x128xf32>
    %243 = vector.shape_cast %242 : vector<1x8x128xf32> to vector<8x128xf32>
    %cst_76 = arith.constant dense<0.000000e+00> : vector<8x128xf32>
    %244 = tpu.matmul %241, %179, %cst_76 {dimension_numbers = #tpu.dot_dimension_numbers<[1], [0], [0], [1], [0, 0, 1, 1], [], []>} : vector<8x32xf32>, vector<32x128xf32>, vector<8x128xf32> -> vector<8x128xf32>
    %245 = arith.addf %243, %244 : vector<8x128xf32>
    %246 = vector.extract_strided_slice %245 {offsets = [0, 0], sizes = [8, 96], strides = [1, 1]} : vector<8x128xf32> to vector<8x96xf32>
    %247 = arith.negf %246 : vector<8x96xf32>
    %248 = math.exp %247 : vector<8x96xf32>
    %cst_77 = arith.constant 1.000000e+00 : f32
    %249 = vector.broadcast %cst_77 : f32 to vector<8x96xf32>
    %250 = arith.addf %249, %248 : vector<8x96xf32>
    %251 = arith.divf %249, %250 : vector<8x96xf32>
    %252 = vector.extract_strided_slice %245 {offsets = [0, 96], sizes = [8, 32], strides = [1, 1]} : vector<8x128xf32> to vector<8x32xf32>
    %253 = math.tanh %252 : vector<8x32xf32>
    %254 = vector.extract_strided_slice %251 {offsets = [0, 32], sizes = [8, 32], strides = [1, 1]} : vector<8x96xf32> to vector<8x32xf32>
    %255 = arith.mulf %254, %238 : vector<8x32xf32>
    %256 = vector.extract_strided_slice %251 {offsets = [0, 0], sizes = [8, 32], strides = [1, 1]} : vector<8x96xf32> to vector<8x32xf32>
    %257 = arith.mulf %256, %253 : vector<8x32xf32>
    %258 = arith.addf %255, %257 : vector<8x32xf32>
    %259 = vector.extract_strided_slice %251 {offsets = [0, 64], sizes = [8, 32], strides = [1, 1]} : vector<8x96xf32> to vector<8x32xf32>
    %260 = math.tanh %258 : vector<8x32xf32>
    %261 = arith.mulf %259, %260 : vector<8x32xf32>
    %c3_78 = arith.constant 3 : index
    %c0_79 = arith.constant 0 : index
    %c0_80 = arith.constant 0 : index
    %262 = vector.load %arg19[%c3_78, %c0_79, %c0_80] : memref<8x8x128xf32, #tpu.memory_space<vmem>>, vector<1x8x128xf32>
    %263 = vector.shape_cast %262 : vector<1x8x128xf32> to vector<8x128xf32>
    %cst_81 = arith.constant dense<0.000000e+00> : vector<8x128xf32>
    %264 = tpu.matmul %261, %179, %cst_81 {dimension_numbers = #tpu.dot_dimension_numbers<[1], [0], [0], [1], [0, 0, 1, 1], [], []>} : vector<8x32xf32>, vector<32x128xf32>, vector<8x128xf32> -> vector<8x128xf32>
    %265 = arith.addf %263, %264 : vector<8x128xf32>
    %266 = vector.extract_strided_slice %265 {offsets = [0, 0], sizes = [8, 96], strides = [1, 1]} : vector<8x128xf32> to vector<8x96xf32>
    %267 = arith.negf %266 : vector<8x96xf32>
    %268 = math.exp %267 : vector<8x96xf32>
    %cst_82 = arith.constant 1.000000e+00 : f32
    %269 = vector.broadcast %cst_82 : f32 to vector<8x96xf32>
    %270 = arith.addf %269, %268 : vector<8x96xf32>
    %271 = arith.divf %269, %270 : vector<8x96xf32>
    %272 = vector.extract_strided_slice %265 {offsets = [0, 96], sizes = [8, 32], strides = [1, 1]} : vector<8x128xf32> to vector<8x32xf32>
    %273 = math.tanh %272 : vector<8x32xf32>
    %274 = vector.extract_strided_slice %271 {offsets = [0, 32], sizes = [8, 32], strides = [1, 1]} : vector<8x96xf32> to vector<8x32xf32>
    %275 = arith.mulf %274, %258 : vector<8x32xf32>
    %276 = vector.extract_strided_slice %271 {offsets = [0, 0], sizes = [8, 32], strides = [1, 1]} : vector<8x96xf32> to vector<8x32xf32>
    %277 = arith.mulf %276, %273 : vector<8x32xf32>
    %278 = arith.addf %275, %277 : vector<8x32xf32>
    %279 = vector.extract_strided_slice %271 {offsets = [0, 64], sizes = [8, 32], strides = [1, 1]} : vector<8x96xf32> to vector<8x32xf32>
    %280 = math.tanh %278 : vector<8x32xf32>
    %281 = arith.mulf %279, %280 : vector<8x32xf32>
    %c2_83 = arith.constant 2 : index
    %c0_84 = arith.constant 0 : index
    %c0_85 = arith.constant 0 : index
    %282 = vector.load %arg19[%c2_83, %c0_84, %c0_85] : memref<8x8x128xf32, #tpu.memory_space<vmem>>, vector<1x8x128xf32>
    %283 = vector.shape_cast %282 : vector<1x8x128xf32> to vector<8x128xf32>
    %cst_86 = arith.constant dense<0.000000e+00> : vector<8x128xf32>
    %284 = tpu.matmul %281, %179, %cst_86 {dimension_numbers = #tpu.dot_dimension_numbers<[1], [0], [0], [1], [0, 0, 1, 1], [], []>} : vector<8x32xf32>, vector<32x128xf32>, vector<8x128xf32> -> vector<8x128xf32>
    %285 = arith.addf %283, %284 : vector<8x128xf32>
    %286 = vector.extract_strided_slice %285 {offsets = [0, 0], sizes = [8, 96], strides = [1, 1]} : vector<8x128xf32> to vector<8x96xf32>
    %287 = arith.negf %286 : vector<8x96xf32>
    %288 = math.exp %287 : vector<8x96xf32>
    %cst_87 = arith.constant 1.000000e+00 : f32
    %289 = vector.broadcast %cst_87 : f32 to vector<8x96xf32>
    %290 = arith.addf %289, %288 : vector<8x96xf32>
    %291 = arith.divf %289, %290 : vector<8x96xf32>
    %292 = vector.extract_strided_slice %285 {offsets = [0, 96], sizes = [8, 32], strides = [1, 1]} : vector<8x128xf32> to vector<8x32xf32>
    %293 = math.tanh %292 : vector<8x32xf32>
    %294 = vector.extract_strided_slice %291 {offsets = [0, 32], sizes = [8, 32], strides = [1, 1]} : vector<8x96xf32> to vector<8x32xf32>
    %295 = arith.mulf %294, %278 : vector<8x32xf32>
    %296 = vector.extract_strided_slice %291 {offsets = [0, 0], sizes = [8, 32], strides = [1, 1]} : vector<8x96xf32> to vector<8x32xf32>
    %297 = arith.mulf %296, %293 : vector<8x32xf32>
    %298 = arith.addf %295, %297 : vector<8x32xf32>
    %299 = vector.extract_strided_slice %291 {offsets = [0, 64], sizes = [8, 32], strides = [1, 1]} : vector<8x96xf32> to vector<8x32xf32>
    %300 = math.tanh %298 : vector<8x32xf32>
    %301 = arith.mulf %299, %300 : vector<8x32xf32>
    %c1_88 = arith.constant 1 : index
    %c0_89 = arith.constant 0 : index
    %c0_90 = arith.constant 0 : index
    %302 = vector.load %arg19[%c1_88, %c0_89, %c0_90] : memref<8x8x128xf32, #tpu.memory_space<vmem>>, vector<1x8x128xf32>
    %303 = vector.shape_cast %302 : vector<1x8x128xf32> to vector<8x128xf32>
    %cst_91 = arith.constant dense<0.000000e+00> : vector<8x128xf32>
    %304 = tpu.matmul %301, %179, %cst_91 {dimension_numbers = #tpu.dot_dimension_numbers<[1], [0], [0], [1], [0, 0, 1, 1], [], []>} : vector<8x32xf32>, vector<32x128xf32>, vector<8x128xf32> -> vector<8x128xf32>
    %305 = arith.addf %303, %304 : vector<8x128xf32>
    %306 = vector.extract_strided_slice %305 {offsets = [0, 0], sizes = [8, 96], strides = [1, 1]} : vector<8x128xf32> to vector<8x96xf32>
    %307 = arith.negf %306 : vector<8x96xf32>
    %308 = math.exp %307 : vector<8x96xf32>
    %cst_92 = arith.constant 1.000000e+00 : f32
    %309 = vector.broadcast %cst_92 : f32 to vector<8x96xf32>
    %310 = arith.addf %309, %308 : vector<8x96xf32>
    %311 = arith.divf %309, %310 : vector<8x96xf32>
    %312 = vector.extract_strided_slice %305 {offsets = [0, 96], sizes = [8, 32], strides = [1, 1]} : vector<8x128xf32> to vector<8x32xf32>
    %313 = math.tanh %312 : vector<8x32xf32>
    %314 = vector.extract_strided_slice %311 {offsets = [0, 32], sizes = [8, 32], strides = [1, 1]} : vector<8x96xf32> to vector<8x32xf32>
    %315 = arith.mulf %314, %298 : vector<8x32xf32>
    %316 = vector.extract_strided_slice %311 {offsets = [0, 0], sizes = [8, 32], strides = [1, 1]} : vector<8x96xf32> to vector<8x32xf32>
    %317 = arith.mulf %316, %313 : vector<8x32xf32>
    %318 = arith.addf %315, %317 : vector<8x32xf32>
    %319 = vector.extract_strided_slice %311 {offsets = [0, 64], sizes = [8, 32], strides = [1, 1]} : vector<8x96xf32> to vector<8x32xf32>
    %320 = math.tanh %318 : vector<8x32xf32>
    %321 = arith.mulf %319, %320 : vector<8x32xf32>
    %c0_93 = arith.constant 0 : index
    %c0_94 = arith.constant 0 : index
    %c0_95 = arith.constant 0 : index
    %322 = vector.load %arg19[%c0_93, %c0_94, %c0_95] : memref<8x8x128xf32, #tpu.memory_space<vmem>>, vector<1x8x128xf32>
    %323 = vector.shape_cast %322 : vector<1x8x128xf32> to vector<8x128xf32>
    %cst_96 = arith.constant dense<0.000000e+00> : vector<8x128xf32>
    %324 = tpu.matmul %321, %179, %cst_96 {dimension_numbers = #tpu.dot_dimension_numbers<[1], [0], [0], [1], [0, 0, 1, 1], [], []>} : vector<8x32xf32>, vector<32x128xf32>, vector<8x128xf32> -> vector<8x128xf32>
    %325 = arith.addf %323, %324 : vector<8x128xf32>
    %326 = vector.extract_strided_slice %325 {offsets = [0, 0], sizes = [8, 96], strides = [1, 1]} : vector<8x128xf32> to vector<8x96xf32>
    %327 = arith.negf %326 : vector<8x96xf32>
    %328 = math.exp %327 : vector<8x96xf32>
    %cst_97 = arith.constant 1.000000e+00 : f32
    %329 = vector.broadcast %cst_97 : f32 to vector<8x96xf32>
    %330 = arith.addf %329, %328 : vector<8x96xf32>
    %331 = arith.divf %329, %330 : vector<8x96xf32>
    %332 = vector.extract_strided_slice %325 {offsets = [0, 96], sizes = [8, 32], strides = [1, 1]} : vector<8x128xf32> to vector<8x32xf32>
    %333 = math.tanh %332 : vector<8x32xf32>
    %334 = vector.extract_strided_slice %331 {offsets = [0, 32], sizes = [8, 32], strides = [1, 1]} : vector<8x96xf32> to vector<8x32xf32>
    %335 = arith.mulf %334, %318 : vector<8x32xf32>
    %336 = vector.extract_strided_slice %331 {offsets = [0, 0], sizes = [8, 32], strides = [1, 1]} : vector<8x96xf32> to vector<8x32xf32>
    %337 = arith.mulf %336, %333 : vector<8x32xf32>
    %338 = arith.addf %335, %337 : vector<8x32xf32>
    %339 = vector.extract_strided_slice %331 {offsets = [0, 64], sizes = [8, 32], strides = [1, 1]} : vector<8x96xf32> to vector<8x32xf32>
    %340 = math.tanh %338 : vector<8x32xf32>
    %341 = arith.mulf %339, %340 : vector<8x32xf32>
    %342 = vector.shape_cast %38 : vector<8x32xf32> to vector<1x8x32xf32>
    %343 = vector.shape_cast %58 : vector<8x32xf32> to vector<1x8x32xf32>
    %344 = vector.shape_cast %78 : vector<8x32xf32> to vector<1x8x32xf32>
    %345 = vector.shape_cast %98 : vector<8x32xf32> to vector<1x8x32xf32>
    %346 = vector.shape_cast %118 : vector<8x32xf32> to vector<1x8x32xf32>
    %347 = vector.shape_cast %138 : vector<8x32xf32> to vector<1x8x32xf32>
    %348 = vector.shape_cast %158 : vector<8x32xf32> to vector<1x8x32xf32>
    %349 = vector.shape_cast %178 : vector<8x32xf32> to vector<1x8x32xf32>
    %350 = tpu.concatenate %342, %343, %344, %345, %346, %347, %348, %349 in 0 : vector<1x8x32xf32>, vector<1x8x32xf32>, vector<1x8x32xf32>, vector<1x8x32xf32>, vector<1x8x32xf32>, vector<1x8x32xf32>, vector<1x8x32xf32>, vector<1x8x32xf32> -> vector<8x8x32xf32>
    %351 = vector.shape_cast %341 : vector<8x32xf32> to vector<1x8x32xf32>
    %352 = vector.shape_cast %321 : vector<8x32xf32> to vector<1x8x32xf32>
    %353 = vector.shape_cast %301 : vector<8x32xf32> to vector<1x8x32xf32>
    %354 = vector.shape_cast %281 : vector<8x32xf32> to vector<1x8x32xf32>
    %355 = vector.shape_cast %261 : vector<8x32xf32> to vector<1x8x32xf32>
    %356 = vector.shape_cast %241 : vector<8x32xf32> to vector<1x8x32xf32>
    %357 = vector.shape_cast %221 : vector<8x32xf32> to vector<1x8x32xf32>
    %358 = vector.shape_cast %201 : vector<8x32xf32> to vector<1x8x32xf32>
    %359 = tpu.concatenate %351, %352, %353, %354, %355, %356, %357, %358 in 0 : vector<1x8x32xf32>, vector<1x8x32xf32>, vector<1x8x32xf32>, vector<1x8x32xf32>, vector<1x8x32xf32>, vector<1x8x32xf32>, vector<1x8x32xf32>, vector<1x8x32xf32> -> vector<8x8x32xf32>
    %360 = tpu.concatenate %350, %359 in 2 : vector<8x8x32xf32>, vector<8x8x32xf32> -> vector<8x8x64xf32>
    %361 = vector.shape_cast %360 : vector<8x8x64xf32> to vector<64x64xf32>
    %c0_98 = arith.constant 0 : index
    %c0_99 = arith.constant 0 : index
    %362 = vector.load %arg7[%c0_98, %c0_99] : memref<64x128xf32, #tpu.memory_space<vmem>>, vector<64x128xf32>
    %cst_100 = arith.constant dense<0.000000e+00> : vector<64x128xf32>
    %363 = tpu.matmul %361, %362, %cst_100 {dimension_numbers = #tpu.dot_dimension_numbers<[1], [0], [0], [1], [0, 0, 1, 1], [], []>} : vector<64x64xf32>, vector<64x128xf32>, vector<64x128xf32> -> vector<64x128xf32>
    %c0_101 = arith.constant 0 : index
    %c0_102 = arith.constant 0 : index
    %364 = vector.load %arg9[%c0_101, %c0_102] : memref<1x128xf32, #tpu.memory_space<vmem>>, vector<1x128xf32>
    %365 = vector.broadcast %364 : vector<1x128xf32> to vector<64x128xf32>
    %366 = arith.addf %363, %365 : vector<64x128xf32>
    %367 = vector.shape_cast %366 : vector<64x128xf32> to vector<8x8x128xf32>
    %c0_103 = arith.constant 0 : index
    %c0_104 = arith.constant 0 : index
    %c0_105 = arith.constant 0 : index
    %368 = vector.load %arg18[%c0_103, %c0_104, %c0_105] : memref<8x8x128xf32, #tpu.memory_space<vmem>>, vector<8x8x128xf32>
    tpu.vector_store %arg18[%c0_103, %c0_104, %c0_105], %367 {strides = array<i32>} : memref<8x8x128xf32, #tpu.memory_space<vmem>>, vector<8x8x128xf32>,
    %c0_106 = arith.constant 0 : index
    %c0_107 = arith.constant 0 : index
    %369 = vector.load %arg10[%c0_106, %c0_107] : memref<64x128xf32, #tpu.memory_space<vmem>>, vector<64x128xf32>
    %cst_108 = arith.constant dense<0.000000e+00> : vector<64x128xf32>
    %370 = tpu.matmul %361, %369, %cst_108 {dimension_numbers = #tpu.dot_dimension_numbers<[1], [0], [0], [1], [0, 0, 1, 1], [], []>} : vector<64x64xf32>, vector<64x128xf32>, vector<64x128xf32> -> vector<64x128xf32>
    %c0_109 = arith.constant 0 : index
    %c0_110 = arith.constant 0 : index
    %371 = vector.load %arg12[%c0_109, %c0_110] : memref<1x128xf32, #tpu.memory_space<vmem>>, vector<1x128xf32>
    %372 = vector.broadcast %371 : vector<1x128xf32> to vector<64x128xf32>
    %373 = arith.addf %370, %372 : vector<64x128xf32>
    %374 = vector.shape_cast %373 : vector<64x128xf32> to vector<8x8x128xf32>
    %c0_111 = arith.constant 0 : index
    %c0_112 = arith.constant 0 : index
    %c0_113 = arith.constant 0 : index
    %375 = vector.load %arg19[%c0_111, %c0_112, %c0_113] : memref<8x8x128xf32, #tpu.memory_space<vmem>>, vector<8x8x128xf32>
    tpu.vector_store %arg19[%c0_111, %c0_112, %c0_113], %374 {strides = array<i32>} : memref<8x8x128xf32, #tpu.memory_space<vmem>>, vector<8x8x128xf32>,
    %c0_114 = arith.constant 0 : index
    %c0_115 = arith.constant 0 : index
    %376 = vector.load %arg8[%c0_114, %c0_115] : memref<32x128xf32, #tpu.memory_space<vmem>>, vector<32x128xf32>
    %cst_116 = arith.constant 0.000000e+00 : f32
    %377 = vector.broadcast %cst_116 : f32 to vector<8x32xf32>
    %cst_117 = arith.constant 0.000000e+00 : f32
    %378 = vector.broadcast %cst_117 : f32 to vector<8x32xf32>
    %c0_118 = arith.constant 0 : index
    %c0_119 = arith.constant 0 : index
    %c0_120 = arith.constant 0 : index
    %379 = vector.load %arg18[%c0_118, %c0_119, %c0_120] : memref<8x8x128xf32, #tpu.memory_space<vmem>>, vector<1x8x128xf32>
    %380 = vector.shape_cast %379 : vector<1x8x128xf32> to vector<8x128xf32>
    %cst_121 = arith.constant dense<0.000000e+00> : vector<8x128xf32>
    %381 = tpu.matmul %377, %376, %cst_121 {dimension_numbers = #tpu.dot_dimension_numbers<[1], [0], [0], [1], [0, 0, 1, 1], [], []>} : vector<8x32xf32>, vector<32x128xf32>, vector<8x128xf32> -> vector<8x128xf32>
    %382 = arith.addf %380, %381 : vector<8x128xf32>
    %383 = vector.extract_strided_slice %382 {offsets = [0, 0], sizes = [8, 96], strides = [1, 1]} : vector<8x128xf32> to vector<8x96xf32>
    %384 = arith.negf %383 : vector<8x96xf32>
    %385 = math.exp %384 : vector<8x96xf32>
    %cst_122 = arith.constant 1.000000e+00 : f32
    %386 = vector.broadcast %cst_122 : f32 to vector<8x96xf32>
    %387 = arith.addf %386, %385 : vector<8x96xf32>
    %388 = arith.divf %386, %387 : vector<8x96xf32>
    %389 = vector.extract_strided_slice %382 {offsets = [0, 96], sizes = [8, 32], strides = [1, 1]} : vector<8x128xf32> to vector<8x32xf32>
    %390 = math.tanh %389 : vector<8x32xf32>
    %391 = vector.extract_strided_slice %388 {offsets = [0, 32], sizes = [8, 32], strides = [1, 1]} : vector<8x96xf32> to vector<8x32xf32>
    %392 = arith.mulf %391, %378 : vector<8x32xf32>
    %393 = vector.extract_strided_slice %388 {offsets = [0, 0], sizes = [8, 32], strides = [1, 1]} : vector<8x96xf32> to vector<8x32xf32>
    %394 = arith.mulf %393, %390 : vector<8x32xf32>
    %395 = arith.addf %392, %394 : vector<8x32xf32>
    %396 = vector.extract_strided_slice %388 {offsets = [0, 64], sizes = [8, 32], strides = [1, 1]} : vector<8x96xf32> to vector<8x32xf32>
    %397 = math.tanh %395 : vector<8x32xf32>
    %398 = arith.mulf %396, %397 : vector<8x32xf32>
    %c1_123 = arith.constant 1 : index
    %c0_124 = arith.constant 0 : index
    %c0_125 = arith.constant 0 : index
    %399 = vector.load %arg18[%c1_123, %c0_124, %c0_125] : memref<8x8x128xf32, #tpu.memory_space<vmem>>, vector<1x8x128xf32>
    %400 = vector.shape_cast %399 : vector<1x8x128xf32> to vector<8x128xf32>
    %cst_126 = arith.constant dense<0.000000e+00> : vector<8x128xf32>
    %401 = tpu.matmul %398, %376, %cst_126 {dimension_numbers = #tpu.dot_dimension_numbers<[1], [0], [0], [1], [0, 0, 1, 1], [], []>} : vector<8x32xf32>, vector<32x128xf32>, vector<8x128xf32> -> vector<8x128xf32>
    %402 = arith.addf %400, %401 : vector<8x128xf32>
    %403 = vector.extract_strided_slice %402 {offsets = [0, 0], sizes = [8, 96], strides = [1, 1]} : vector<8x128xf32> to vector<8x96xf32>
    %404 = arith.negf %403 : vector<8x96xf32>
    %405 = math.exp %404 : vector<8x96xf32>
    %cst_127 = arith.constant 1.000000e+00 : f32
    %406 = vector.broadcast %cst_127 : f32 to vector<8x96xf32>
    %407 = arith.addf %406, %405 : vector<8x96xf32>
    %408 = arith.divf %406, %407 : vector<8x96xf32>
    %409 = vector.extract_strided_slice %402 {offsets = [0, 96], sizes = [8, 32], strides = [1, 1]} : vector<8x128xf32> to vector<8x32xf32>
    %410 = math.tanh %409 : vector<8x32xf32>
    %411 = vector.extract_strided_slice %408 {offsets = [0, 32], sizes = [8, 32], strides = [1, 1]} : vector<8x96xf32> to vector<8x32xf32>
    %412 = arith.mulf %411, %395 : vector<8x32xf32>
    %413 = vector.extract_strided_slice %408 {offsets = [0, 0], sizes = [8, 32], strides = [1, 1]} : vector<8x96xf32> to vector<8x32xf32>
    %414 = arith.mulf %413, %410 : vector<8x32xf32>
    %415 = arith.addf %412, %414 : vector<8x32xf32>
    %416 = vector.extract_strided_slice %408 {offsets = [0, 64], sizes = [8, 32], strides = [1, 1]} : vector<8x96xf32> to vector<8x32xf32>
    %417 = math.tanh %415 : vector<8x32xf32>
    %418 = arith.mulf %416, %417 : vector<8x32xf32>
    %c2_128 = arith.constant 2 : index
    %c0_129 = arith.constant 0 : index
    %c0_130 = arith.constant 0 : index
    %419 = vector.load %arg18[%c2_128, %c0_129, %c0_130] : memref<8x8x128xf32, #tpu.memory_space<vmem>>, vector<1x8x128xf32>
    %420 = vector.shape_cast %419 : vector<1x8x128xf32> to vector<8x128xf32>
    %cst_131 = arith.constant dense<0.000000e+00> : vector<8x128xf32>
    %421 = tpu.matmul %418, %376, %cst_131 {dimension_numbers = #tpu.dot_dimension_numbers<[1], [0], [0], [1], [0, 0, 1, 1], [], []>} : vector<8x32xf32>, vector<32x128xf32>, vector<8x128xf32> -> vector<8x128xf32>
    %422 = arith.addf %420, %421 : vector<8x128xf32>
    %423 = vector.extract_strided_slice %422 {offsets = [0, 0], sizes = [8, 96], strides = [1, 1]} : vector<8x128xf32> to vector<8x96xf32>
    %424 = arith.negf %423 : vector<8x96xf32>
    %425 = math.exp %424 : vector<8x96xf32>
    %cst_132 = arith.constant 1.000000e+00 : f32
    %426 = vector.broadcast %cst_132 : f32 to vector<8x96xf32>
    %427 = arith.addf %426, %425 : vector<8x96xf32>
    %428 = arith.divf %426, %427 : vector<8x96xf32>
    %429 = vector.extract_strided_slice %422 {offsets = [0, 96], sizes = [8, 32], strides = [1, 1]} : vector<8x128xf32> to vector<8x32xf32>
    %430 = math.tanh %429 : vector<8x32xf32>
    %431 = vector.extract_strided_slice %428 {offsets = [0, 32], sizes = [8, 32], strides = [1, 1]} : vector<8x96xf32> to vector<8x32xf32>
    %432 = arith.mulf %431, %415 : vector<8x32xf32>
    %433 = vector.extract_strided_slice %428 {offsets = [0, 0], sizes = [8, 32], strides = [1, 1]} : vector<8x96xf32> to vector<8x32xf32>
    %434 = arith.mulf %433, %430 : vector<8x32xf32>
    %435 = arith.addf %432, %434 : vector<8x32xf32>
    %436 = vector.extract_strided_slice %428 {offsets = [0, 64], sizes = [8, 32], strides = [1, 1]} : vector<8x96xf32> to vector<8x32xf32>
    %437 = math.tanh %435 : vector<8x32xf32>
    %438 = arith.mulf %436, %437 : vector<8x32xf32>
    %c3_133 = arith.constant 3 : index
    %c0_134 = arith.constant 0 : index
    %c0_135 = arith.constant 0 : index
    %439 = vector.load %arg18[%c3_133, %c0_134, %c0_135] : memref<8x8x128xf32, #tpu.memory_space<vmem>>, vector<1x8x128xf32>
    %440 = vector.shape_cast %439 : vector<1x8x128xf32> to vector<8x128xf32>
    %cst_136 = arith.constant dense<0.000000e+00> : vector<8x128xf32>
    %441 = tpu.matmul %438, %376, %cst_136 {dimension_numbers = #tpu.dot_dimension_numbers<[1], [0], [0], [1], [0, 0, 1, 1], [], []>} : vector<8x32xf32>, vector<32x128xf32>, vector<8x128xf32> -> vector<8x128xf32>
    %442 = arith.addf %440, %441 : vector<8x128xf32>
    %443 = vector.extract_strided_slice %442 {offsets = [0, 0], sizes = [8, 96], strides = [1, 1]} : vector<8x128xf32> to vector<8x96xf32>
    %444 = arith.negf %443 : vector<8x96xf32>
    %445 = math.exp %444 : vector<8x96xf32>
    %cst_137 = arith.constant 1.000000e+00 : f32
    %446 = vector.broadcast %cst_137 : f32 to vector<8x96xf32>
    %447 = arith.addf %446, %445 : vector<8x96xf32>
    %448 = arith.divf %446, %447 : vector<8x96xf32>
    %449 = vector.extract_strided_slice %442 {offsets = [0, 96], sizes = [8, 32], strides = [1, 1]} : vector<8x128xf32> to vector<8x32xf32>
    %450 = math.tanh %449 : vector<8x32xf32>
    %451 = vector.extract_strided_slice %448 {offsets = [0, 32], sizes = [8, 32], strides = [1, 1]} : vector<8x96xf32> to vector<8x32xf32>
    %452 = arith.mulf %451, %435 : vector<8x32xf32>
    %453 = vector.extract_strided_slice %448 {offsets = [0, 0], sizes = [8, 32], strides = [1, 1]} : vector<8x96xf32> to vector<8x32xf32>
    %454 = arith.mulf %453, %450 : vector<8x32xf32>
    %455 = arith.addf %452, %454 : vector<8x32xf32>
    %456 = vector.extract_strided_slice %448 {offsets = [0, 64], sizes = [8, 32], strides = [1, 1]} : vector<8x96xf32> to vector<8x32xf32>
    %457 = math.tanh %455 : vector<8x32xf32>
    %458 = arith.mulf %456, %457 : vector<8x32xf32>
    %c4_138 = arith.constant 4 : index
    %c0_139 = arith.constant 0 : index
    %c0_140 = arith.constant 0 : index
    %459 = vector.load %arg18[%c4_138, %c0_139, %c0_140] : memref<8x8x128xf32, #tpu.memory_space<vmem>>, vector<1x8x128xf32>
    %460 = vector.shape_cast %459 : vector<1x8x128xf32> to vector<8x128xf32>
    %cst_141 = arith.constant dense<0.000000e+00> : vector<8x128xf32>
    %461 = tpu.matmul %458, %376, %cst_141 {dimension_numbers = #tpu.dot_dimension_numbers<[1], [0], [0], [1], [0, 0, 1, 1], [], []>} : vector<8x32xf32>, vector<32x128xf32>, vector<8x128xf32> -> vector<8x128xf32>
    %462 = arith.addf %460, %461 : vector<8x128xf32>
    %463 = vector.extract_strided_slice %462 {offsets = [0, 0], sizes = [8, 96], strides = [1, 1]} : vector<8x128xf32> to vector<8x96xf32>
    %464 = arith.negf %463 : vector<8x96xf32>
    %465 = math.exp %464 : vector<8x96xf32>
    %cst_142 = arith.constant 1.000000e+00 : f32
    %466 = vector.broadcast %cst_142 : f32 to vector<8x96xf32>
    %467 = arith.addf %466, %465 : vector<8x96xf32>
    %468 = arith.divf %466, %467 : vector<8x96xf32>
    %469 = vector.extract_strided_slice %462 {offsets = [0, 96], sizes = [8, 32], strides = [1, 1]} : vector<8x128xf32> to vector<8x32xf32>
    %470 = math.tanh %469 : vector<8x32xf32>
    %471 = vector.extract_strided_slice %468 {offsets = [0, 32], sizes = [8, 32], strides = [1, 1]} : vector<8x96xf32> to vector<8x32xf32>
    %472 = arith.mulf %471, %455 : vector<8x32xf32>
    %473 = vector.extract_strided_slice %468 {offsets = [0, 0], sizes = [8, 32], strides = [1, 1]} : vector<8x96xf32> to vector<8x32xf32>
    %474 = arith.mulf %473, %470 : vector<8x32xf32>
    %475 = arith.addf %472, %474 : vector<8x32xf32>
    %476 = vector.extract_strided_slice %468 {offsets = [0, 64], sizes = [8, 32], strides = [1, 1]} : vector<8x96xf32> to vector<8x32xf32>
    %477 = math.tanh %475 : vector<8x32xf32>
    %478 = arith.mulf %476, %477 : vector<8x32xf32>
    %c5_143 = arith.constant 5 : index
    %c0_144 = arith.constant 0 : index
    %c0_145 = arith.constant 0 : index
    %479 = vector.load %arg18[%c5_143, %c0_144, %c0_145] : memref<8x8x128xf32, #tpu.memory_space<vmem>>, vector<1x8x128xf32>
    %480 = vector.shape_cast %479 : vector<1x8x128xf32> to vector<8x128xf32>
    %cst_146 = arith.constant dense<0.000000e+00> : vector<8x128xf32>
    %481 = tpu.matmul %478, %376, %cst_146 {dimension_numbers = #tpu.dot_dimension_numbers<[1], [0], [0], [1], [0, 0, 1, 1], [], []>} : vector<8x32xf32>, vector<32x128xf32>, vector<8x128xf32> -> vector<8x128xf32>
    %482 = arith.addf %480, %481 : vector<8x128xf32>
    %483 = vector.extract_strided_slice %482 {offsets = [0, 0], sizes = [8, 96], strides = [1, 1]} : vector<8x128xf32> to vector<8x96xf32>
    %484 = arith.negf %483 : vector<8x96xf32>
    %485 = math.exp %484 : vector<8x96xf32>
    %cst_147 = arith.constant 1.000000e+00 : f32
    %486 = vector.broadcast %cst_147 : f32 to vector<8x96xf32>
    %487 = arith.addf %486, %485 : vector<8x96xf32>
    %488 = arith.divf %486, %487 : vector<8x96xf32>
    %489 = vector.extract_strided_slice %482 {offsets = [0, 96], sizes = [8, 32], strides = [1, 1]} : vector<8x128xf32> to vector<8x32xf32>
    %490 = math.tanh %489 : vector<8x32xf32>
    %491 = vector.extract_strided_slice %488 {offsets = [0, 32], sizes = [8, 32], strides = [1, 1]} : vector<8x96xf32> to vector<8x32xf32>
    %492 = arith.mulf %491, %475 : vector<8x32xf32>
    %493 = vector.extract_strided_slice %488 {offsets = [0, 0], sizes = [8, 32], strides = [1, 1]} : vector<8x96xf32> to vector<8x32xf32>
    %494 = arith.mulf %493, %490 : vector<8x32xf32>
    %495 = arith.addf %492, %494 : vector<8x32xf32>
    %496 = vector.extract_strided_slice %488 {offsets = [0, 64], sizes = [8, 32], strides = [1, 1]} : vector<8x96xf32> to vector<8x32xf32>
    %497 = math.tanh %495 : vector<8x32xf32>
    %498 = arith.mulf %496, %497 : vector<8x32xf32>
    %c6_148 = arith.constant 6 : index
    %c0_149 = arith.constant 0 : index
    %c0_150 = arith.constant 0 : index
    %499 = vector.load %arg18[%c6_148, %c0_149, %c0_150] : memref<8x8x128xf32, #tpu.memory_space<vmem>>, vector<1x8x128xf32>
    %500 = vector.shape_cast %499 : vector<1x8x128xf32> to vector<8x128xf32>
    %cst_151 = arith.constant dense<0.000000e+00> : vector<8x128xf32>
    %501 = tpu.matmul %498, %376, %cst_151 {dimension_numbers = #tpu.dot_dimension_numbers<[1], [0], [0], [1], [0, 0, 1, 1], [], []>} : vector<8x32xf32>, vector<32x128xf32>, vector<8x128xf32> -> vector<8x128xf32>
    %502 = arith.addf %500, %501 : vector<8x128xf32>
    %503 = vector.extract_strided_slice %502 {offsets = [0, 0], sizes = [8, 96], strides = [1, 1]} : vector<8x128xf32> to vector<8x96xf32>
    %504 = arith.negf %503 : vector<8x96xf32>
    %505 = math.exp %504 : vector<8x96xf32>
    %cst_152 = arith.constant 1.000000e+00 : f32
    %506 = vector.broadcast %cst_152 : f32 to vector<8x96xf32>
    %507 = arith.addf %506, %505 : vector<8x96xf32>
    %508 = arith.divf %506, %507 : vector<8x96xf32>
    %509 = vector.extract_strided_slice %502 {offsets = [0, 96], sizes = [8, 32], strides = [1, 1]} : vector<8x128xf32> to vector<8x32xf32>
    %510 = math.tanh %509 : vector<8x32xf32>
    %511 = vector.extract_strided_slice %508 {offsets = [0, 32], sizes = [8, 32], strides = [1, 1]} : vector<8x96xf32> to vector<8x32xf32>
    %512 = arith.mulf %511, %495 : vector<8x32xf32>
    %513 = vector.extract_strided_slice %508 {offsets = [0, 0], sizes = [8, 32], strides = [1, 1]} : vector<8x96xf32> to vector<8x32xf32>
    %514 = arith.mulf %513, %510 : vector<8x32xf32>
    %515 = arith.addf %512, %514 : vector<8x32xf32>
    %516 = vector.extract_strided_slice %508 {offsets = [0, 64], sizes = [8, 32], strides = [1, 1]} : vector<8x96xf32> to vector<8x32xf32>
    %517 = math.tanh %515 : vector<8x32xf32>
    %518 = arith.mulf %516, %517 : vector<8x32xf32>
    %c7_153 = arith.constant 7 : index
    %c0_154 = arith.constant 0 : index
    %c0_155 = arith.constant 0 : index
    %519 = vector.load %arg18[%c7_153, %c0_154, %c0_155] : memref<8x8x128xf32, #tpu.memory_space<vmem>>, vector<1x8x128xf32>
    %520 = vector.shape_cast %519 : vector<1x8x128xf32> to vector<8x128xf32>
    %cst_156 = arith.constant dense<0.000000e+00> : vector<8x128xf32>
    %521 = tpu.matmul %518, %376, %cst_156 {dimension_numbers = #tpu.dot_dimension_numbers<[1], [0], [0], [1], [0, 0, 1, 1], [], []>} : vector<8x32xf32>, vector<32x128xf32>, vector<8x128xf32> -> vector<8x128xf32>
    %522 = arith.addf %520, %521 : vector<8x128xf32>
    %523 = vector.extract_strided_slice %522 {offsets = [0, 0], sizes = [8, 96], strides = [1, 1]} : vector<8x128xf32> to vector<8x96xf32>
    %524 = arith.negf %523 : vector<8x96xf32>
    %525 = math.exp %524 : vector<8x96xf32>
    %cst_157 = arith.constant 1.000000e+00 : f32
    %526 = vector.broadcast %cst_157 : f32 to vector<8x96xf32>
    %527 = arith.addf %526, %525 : vector<8x96xf32>
    %528 = arith.divf %526, %527 : vector<8x96xf32>
    %529 = vector.extract_strided_slice %522 {offsets = [0, 96], sizes = [8, 32], strides = [1, 1]} : vector<8x128xf32> to vector<8x32xf32>
    %530 = math.tanh %529 : vector<8x32xf32>
    %531 = vector.extract_strided_slice %528 {offsets = [0, 32], sizes = [8, 32], strides = [1, 1]} : vector<8x96xf32> to vector<8x32xf32>
    %532 = arith.mulf %531, %515 : vector<8x32xf32>
    %533 = vector.extract_strided_slice %528 {offsets = [0, 0], sizes = [8, 32], strides = [1, 1]} : vector<8x96xf32> to vector<8x32xf32>
    %534 = arith.mulf %533, %530 : vector<8x32xf32>
    %535 = arith.addf %532, %534 : vector<8x32xf32>
    %536 = vector.extract_strided_slice %528 {offsets = [0, 64], sizes = [8, 32], strides = [1, 1]} : vector<8x96xf32> to vector<8x32xf32>
    %537 = math.tanh %535 : vector<8x32xf32>
    %538 = arith.mulf %536, %537 : vector<8x32xf32>
    %c0_158 = arith.constant 0 : index
    %c0_159 = arith.constant 0 : index
    %539 = vector.load %arg11[%c0_158, %c0_159] : memref<32x128xf32, #tpu.memory_space<vmem>>, vector<32x128xf32>
    %cst_160 = arith.constant 0.000000e+00 : f32
    %540 = vector.broadcast %cst_160 : f32 to vector<8x32xf32>
    %cst_161 = arith.constant 0.000000e+00 : f32
    %541 = vector.broadcast %cst_161 : f32 to vector<8x32xf32>
    %c7_162 = arith.constant 7 : index
    %c0_163 = arith.constant 0 : index
    %c0_164 = arith.constant 0 : index
    %542 = vector.load %arg19[%c7_162, %c0_163, %c0_164] : memref<8x8x128xf32, #tpu.memory_space<vmem>>, vector<1x8x128xf32>
    %543 = vector.shape_cast %542 : vector<1x8x128xf32> to vector<8x128xf32>
    %cst_165 = arith.constant dense<0.000000e+00> : vector<8x128xf32>
    %544 = tpu.matmul %540, %539, %cst_165 {dimension_numbers = #tpu.dot_dimension_numbers<[1], [0], [0], [1], [0, 0, 1, 1], [], []>} : vector<8x32xf32>, vector<32x128xf32>, vector<8x128xf32> -> vector<8x128xf32>
    %545 = arith.addf %543, %544 : vector<8x128xf32>
    %546 = vector.extract_strided_slice %545 {offsets = [0, 0], sizes = [8, 96], strides = [1, 1]} : vector<8x128xf32> to vector<8x96xf32>
    %547 = arith.negf %546 : vector<8x96xf32>
    %548 = math.exp %547 : vector<8x96xf32>
    %cst_166 = arith.constant 1.000000e+00 : f32
    %549 = vector.broadcast %cst_166 : f32 to vector<8x96xf32>
    %550 = arith.addf %549, %548 : vector<8x96xf32>
    %551 = arith.divf %549, %550 : vector<8x96xf32>
    %552 = vector.extract_strided_slice %545 {offsets = [0, 96], sizes = [8, 32], strides = [1, 1]} : vector<8x128xf32> to vector<8x32xf32>
    %553 = math.tanh %552 : vector<8x32xf32>
    %554 = vector.extract_strided_slice %551 {offsets = [0, 32], sizes = [8, 32], strides = [1, 1]} : vector<8x96xf32> to vector<8x32xf32>
    %555 = arith.mulf %554, %541 : vector<8x32xf32>
    %556 = vector.extract_strided_slice %551 {offsets = [0, 0], sizes = [8, 32], strides = [1, 1]} : vector<8x96xf32> to vector<8x32xf32>
    %557 = arith.mulf %556, %553 : vector<8x32xf32>
    %558 = arith.addf %555, %557 : vector<8x32xf32>
    %559 = vector.extract_strided_slice %551 {offsets = [0, 64], sizes = [8, 32], strides = [1, 1]} : vector<8x96xf32> to vector<8x32xf32>
    %560 = math.tanh %558 : vector<8x32xf32>
    %561 = arith.mulf %559, %560 : vector<8x32xf32>
    %c6_167 = arith.constant 6 : index
    %c0_168 = arith.constant 0 : index
    %c0_169 = arith.constant 0 : index
    %562 = vector.load %arg19[%c6_167, %c0_168, %c0_169] : memref<8x8x128xf32, #tpu.memory_space<vmem>>, vector<1x8x128xf32>
    %563 = vector.shape_cast %562 : vector<1x8x128xf32> to vector<8x128xf32>
    %cst_170 = arith.constant dense<0.000000e+00> : vector<8x128xf32>
    %564 = tpu.matmul %561, %539, %cst_170 {dimension_numbers = #tpu.dot_dimension_numbers<[1], [0], [0], [1], [0, 0, 1, 1], [], []>} : vector<8x32xf32>, vector<32x128xf32>, vector<8x128xf32> -> vector<8x128xf32>
    %565 = arith.addf %563, %564 : vector<8x128xf32>
    %566 = vector.extract_strided_slice %565 {offsets = [0, 0], sizes = [8, 96], strides = [1, 1]} : vector<8x128xf32> to vector<8x96xf32>
    %567 = arith.negf %566 : vector<8x96xf32>
    %568 = math.exp %567 : vector<8x96xf32>
    %cst_171 = arith.constant 1.000000e+00 : f32
    %569 = vector.broadcast %cst_171 : f32 to vector<8x96xf32>
    %570 = arith.addf %569, %568 : vector<8x96xf32>
    %571 = arith.divf %569, %570 : vector<8x96xf32>
    %572 = vector.extract_strided_slice %565 {offsets = [0, 96], sizes = [8, 32], strides = [1, 1]} : vector<8x128xf32> to vector<8x32xf32>
    %573 = math.tanh %572 : vector<8x32xf32>
    %574 = vector.extract_strided_slice %571 {offsets = [0, 32], sizes = [8, 32], strides = [1, 1]} : vector<8x96xf32> to vector<8x32xf32>
    %575 = arith.mulf %574, %558 : vector<8x32xf32>
    %576 = vector.extract_strided_slice %571 {offsets = [0, 0], sizes = [8, 32], strides = [1, 1]} : vector<8x96xf32> to vector<8x32xf32>
    %577 = arith.mulf %576, %573 : vector<8x32xf32>
    %578 = arith.addf %575, %577 : vector<8x32xf32>
    %579 = vector.extract_strided_slice %571 {offsets = [0, 64], sizes = [8, 32], strides = [1, 1]} : vector<8x96xf32> to vector<8x32xf32>
    %580 = math.tanh %578 : vector<8x32xf32>
    %581 = arith.mulf %579, %580 : vector<8x32xf32>
    %c5_172 = arith.constant 5 : index
    %c0_173 = arith.constant 0 : index
    %c0_174 = arith.constant 0 : index
    %582 = vector.load %arg19[%c5_172, %c0_173, %c0_174] : memref<8x8x128xf32, #tpu.memory_space<vmem>>, vector<1x8x128xf32>
    %583 = vector.shape_cast %582 : vector<1x8x128xf32> to vector<8x128xf32>
    %cst_175 = arith.constant dense<0.000000e+00> : vector<8x128xf32>
    %584 = tpu.matmul %581, %539, %cst_175 {dimension_numbers = #tpu.dot_dimension_numbers<[1], [0], [0], [1], [0, 0, 1, 1], [], []>} : vector<8x32xf32>, vector<32x128xf32>, vector<8x128xf32> -> vector<8x128xf32>
    %585 = arith.addf %583, %584 : vector<8x128xf32>
    %586 = vector.extract_strided_slice %585 {offsets = [0, 0], sizes = [8, 96], strides = [1, 1]} : vector<8x128xf32> to vector<8x96xf32>
    %587 = arith.negf %586 : vector<8x96xf32>
    %588 = math.exp %587 : vector<8x96xf32>
    %cst_176 = arith.constant 1.000000e+00 : f32
    %589 = vector.broadcast %cst_176 : f32 to vector<8x96xf32>
    %590 = arith.addf %589, %588 : vector<8x96xf32>
    %591 = arith.divf %589, %590 : vector<8x96xf32>
    %592 = vector.extract_strided_slice %585 {offsets = [0, 96], sizes = [8, 32], strides = [1, 1]} : vector<8x128xf32> to vector<8x32xf32>
    %593 = math.tanh %592 : vector<8x32xf32>
    %594 = vector.extract_strided_slice %591 {offsets = [0, 32], sizes = [8, 32], strides = [1, 1]} : vector<8x96xf32> to vector<8x32xf32>
    %595 = arith.mulf %594, %578 : vector<8x32xf32>
    %596 = vector.extract_strided_slice %591 {offsets = [0, 0], sizes = [8, 32], strides = [1, 1]} : vector<8x96xf32> to vector<8x32xf32>
    %597 = arith.mulf %596, %593 : vector<8x32xf32>
    %598 = arith.addf %595, %597 : vector<8x32xf32>
    %599 = vector.extract_strided_slice %591 {offsets = [0, 64], sizes = [8, 32], strides = [1, 1]} : vector<8x96xf32> to vector<8x32xf32>
    %600 = math.tanh %598 : vector<8x32xf32>
    %601 = arith.mulf %599, %600 : vector<8x32xf32>
    %c4_177 = arith.constant 4 : index
    %c0_178 = arith.constant 0 : index
    %c0_179 = arith.constant 0 : index
    %602 = vector.load %arg19[%c4_177, %c0_178, %c0_179] : memref<8x8x128xf32, #tpu.memory_space<vmem>>, vector<1x8x128xf32>
    %603 = vector.shape_cast %602 : vector<1x8x128xf32> to vector<8x128xf32>
    %cst_180 = arith.constant dense<0.000000e+00> : vector<8x128xf32>
    %604 = tpu.matmul %601, %539, %cst_180 {dimension_numbers = #tpu.dot_dimension_numbers<[1], [0], [0], [1], [0, 0, 1, 1], [], []>} : vector<8x32xf32>, vector<32x128xf32>, vector<8x128xf32> -> vector<8x128xf32>
    %605 = arith.addf %603, %604 : vector<8x128xf32>
    %606 = vector.extract_strided_slice %605 {offsets = [0, 0], sizes = [8, 96], strides = [1, 1]} : vector<8x128xf32> to vector<8x96xf32>
    %607 = arith.negf %606 : vector<8x96xf32>
    %608 = math.exp %607 : vector<8x96xf32>
    %cst_181 = arith.constant 1.000000e+00 : f32
    %609 = vector.broadcast %cst_181 : f32 to vector<8x96xf32>
    %610 = arith.addf %609, %608 : vector<8x96xf32>
    %611 = arith.divf %609, %610 : vector<8x96xf32>
    %612 = vector.extract_strided_slice %605 {offsets = [0, 96], sizes = [8, 32], strides = [1, 1]} : vector<8x128xf32> to vector<8x32xf32>
    %613 = math.tanh %612 : vector<8x32xf32>
    %614 = vector.extract_strided_slice %611 {offsets = [0, 32], sizes = [8, 32], strides = [1, 1]} : vector<8x96xf32> to vector<8x32xf32>
    %615 = arith.mulf %614, %598 : vector<8x32xf32>
    %616 = vector.extract_strided_slice %611 {offsets = [0, 0], sizes = [8, 32], strides = [1, 1]} : vector<8x96xf32> to vector<8x32xf32>
    %617 = arith.mulf %616, %613 : vector<8x32xf32>
    %618 = arith.addf %615, %617 : vector<8x32xf32>
    %619 = vector.extract_strided_slice %611 {offsets = [0, 64], sizes = [8, 32], strides = [1, 1]} : vector<8x96xf32> to vector<8x32xf32>
    %620 = math.tanh %618 : vector<8x32xf32>
    %621 = arith.mulf %619, %620 : vector<8x32xf32>
    %c3_182 = arith.constant 3 : index
    %c0_183 = arith.constant 0 : index
    %c0_184 = arith.constant 0 : index
    %622 = vector.load %arg19[%c3_182, %c0_183, %c0_184] : memref<8x8x128xf32, #tpu.memory_space<vmem>>, vector<1x8x128xf32>
    %623 = vector.shape_cast %622 : vector<1x8x128xf32> to vector<8x128xf32>
    %cst_185 = arith.constant dense<0.000000e+00> : vector<8x128xf32>
    %624 = tpu.matmul %621, %539, %cst_185 {dimension_numbers = #tpu.dot_dimension_numbers<[1], [0], [0], [1], [0, 0, 1, 1], [], []>} : vector<8x32xf32>, vector<32x128xf32>, vector<8x128xf32> -> vector<8x128xf32>
    %625 = arith.addf %623, %624 : vector<8x128xf32>
    %626 = vector.extract_strided_slice %625 {offsets = [0, 0], sizes = [8, 96], strides = [1, 1]} : vector<8x128xf32> to vector<8x96xf32>
    %627 = arith.negf %626 : vector<8x96xf32>
    %628 = math.exp %627 : vector<8x96xf32>
    %cst_186 = arith.constant 1.000000e+00 : f32
    %629 = vector.broadcast %cst_186 : f32 to vector<8x96xf32>
    %630 = arith.addf %629, %628 : vector<8x96xf32>
    %631 = arith.divf %629, %630 : vector<8x96xf32>
    %632 = vector.extract_strided_slice %625 {offsets = [0, 96], sizes = [8, 32], strides = [1, 1]} : vector<8x128xf32> to vector<8x32xf32>
    %633 = math.tanh %632 : vector<8x32xf32>
    %634 = vector.extract_strided_slice %631 {offsets = [0, 32], sizes = [8, 32], strides = [1, 1]} : vector<8x96xf32> to vector<8x32xf32>
    %635 = arith.mulf %634, %618 : vector<8x32xf32>
    %636 = vector.extract_strided_slice %631 {offsets = [0, 0], sizes = [8, 32], strides = [1, 1]} : vector<8x96xf32> to vector<8x32xf32>
    %637 = arith.mulf %636, %633 : vector<8x32xf32>
    %638 = arith.addf %635, %637 : vector<8x32xf32>
    %639 = vector.extract_strided_slice %631 {offsets = [0, 64], sizes = [8, 32], strides = [1, 1]} : vector<8x96xf32> to vector<8x32xf32>
    %640 = math.tanh %638 : vector<8x32xf32>
    %641 = arith.mulf %639, %640 : vector<8x32xf32>
    %c2_187 = arith.constant 2 : index
    %c0_188 = arith.constant 0 : index
    %c0_189 = arith.constant 0 : index
    %642 = vector.load %arg19[%c2_187, %c0_188, %c0_189] : memref<8x8x128xf32, #tpu.memory_space<vmem>>, vector<1x8x128xf32>
    %643 = vector.shape_cast %642 : vector<1x8x128xf32> to vector<8x128xf32>
    %cst_190 = arith.constant dense<0.000000e+00> : vector<8x128xf32>
    %644 = tpu.matmul %641, %539, %cst_190 {dimension_numbers = #tpu.dot_dimension_numbers<[1], [0], [0], [1], [0, 0, 1, 1], [], []>} : vector<8x32xf32>, vector<32x128xf32>, vector<8x128xf32> -> vector<8x128xf32>
    %645 = arith.addf %643, %644 : vector<8x128xf32>
    %646 = vector.extract_strided_slice %645 {offsets = [0, 0], sizes = [8, 96], strides = [1, 1]} : vector<8x128xf32> to vector<8x96xf32>
    %647 = arith.negf %646 : vector<8x96xf32>
    %648 = math.exp %647 : vector<8x96xf32>
    %cst_191 = arith.constant 1.000000e+00 : f32
    %649 = vector.broadcast %cst_191 : f32 to vector<8x96xf32>
    %650 = arith.addf %649, %648 : vector<8x96xf32>
    %651 = arith.divf %649, %650 : vector<8x96xf32>
    %652 = vector.extract_strided_slice %645 {offsets = [0, 96], sizes = [8, 32], strides = [1, 1]} : vector<8x128xf32> to vector<8x32xf32>
    %653 = math.tanh %652 : vector<8x32xf32>
    %654 = vector.extract_strided_slice %651 {offsets = [0, 32], sizes = [8, 32], strides = [1, 1]} : vector<8x96xf32> to vector<8x32xf32>
    %655 = arith.mulf %654, %638 : vector<8x32xf32>
    %656 = vector.extract_strided_slice %651 {offsets = [0, 0], sizes = [8, 32], strides = [1, 1]} : vector<8x96xf32> to vector<8x32xf32>
    %657 = arith.mulf %656, %653 : vector<8x32xf32>
    %658 = arith.addf %655, %657 : vector<8x32xf32>
    %659 = vector.extract_strided_slice %651 {offsets = [0, 64], sizes = [8, 32], strides = [1, 1]} : vector<8x96xf32> to vector<8x32xf32>
    %660 = math.tanh %658 : vector<8x32xf32>
    %661 = arith.mulf %659, %660 : vector<8x32xf32>
    %c1_192 = arith.constant 1 : index
    %c0_193 = arith.constant 0 : index
    %c0_194 = arith.constant 0 : index
    %662 = vector.load %arg19[%c1_192, %c0_193, %c0_194] : memref<8x8x128xf32, #tpu.memory_space<vmem>>, vector<1x8x128xf32>
    %663 = vector.shape_cast %662 : vector<1x8x128xf32> to vector<8x128xf32>
    %cst_195 = arith.constant dense<0.000000e+00> : vector<8x128xf32>
    %664 = tpu.matmul %661, %539, %cst_195 {dimension_numbers = #tpu.dot_dimension_numbers<[1], [0], [0], [1], [0, 0, 1, 1], [], []>} : vector<8x32xf32>, vector<32x128xf32>, vector<8x128xf32> -> vector<8x128xf32>
    %665 = arith.addf %663, %664 : vector<8x128xf32>
    %666 = vector.extract_strided_slice %665 {offsets = [0, 0], sizes = [8, 96], strides = [1, 1]} : vector<8x128xf32> to vector<8x96xf32>
    %667 = arith.negf %666 : vector<8x96xf32>
    %668 = math.exp %667 : vector<8x96xf32>
    %cst_196 = arith.constant 1.000000e+00 : f32
    %669 = vector.broadcast %cst_196 : f32 to vector<8x96xf32>
    %670 = arith.addf %669, %668 : vector<8x96xf32>
    %671 = arith.divf %669, %670 : vector<8x96xf32>
    %672 = vector.extract_strided_slice %665 {offsets = [0, 96], sizes = [8, 32], strides = [1, 1]} : vector<8x128xf32> to vector<8x32xf32>
    %673 = math.tanh %672 : vector<8x32xf32>
    %674 = vector.extract_strided_slice %671 {offsets = [0, 32], sizes = [8, 32], strides = [1, 1]} : vector<8x96xf32> to vector<8x32xf32>
    %675 = arith.mulf %674, %658 : vector<8x32xf32>
    %676 = vector.extract_strided_slice %671 {offsets = [0, 0], sizes = [8, 32], strides = [1, 1]} : vector<8x96xf32> to vector<8x32xf32>
    %677 = arith.mulf %676, %673 : vector<8x32xf32>
    %678 = arith.addf %675, %677 : vector<8x32xf32>
    %679 = vector.extract_strided_slice %671 {offsets = [0, 64], sizes = [8, 32], strides = [1, 1]} : vector<8x96xf32> to vector<8x32xf32>
    %680 = math.tanh %678 : vector<8x32xf32>
    %681 = arith.mulf %679, %680 : vector<8x32xf32>
    %c0_197 = arith.constant 0 : index
    %c0_198 = arith.constant 0 : index
    %c0_199 = arith.constant 0 : index
    %682 = vector.load %arg19[%c0_197, %c0_198, %c0_199] : memref<8x8x128xf32, #tpu.memory_space<vmem>>, vector<1x8x128xf32>
    %683 = vector.shape_cast %682 : vector<1x8x128xf32> to vector<8x128xf32>
    %cst_200 = arith.constant dense<0.000000e+00> : vector<8x128xf32>
    %684 = tpu.matmul %681, %539, %cst_200 {dimension_numbers = #tpu.dot_dimension_numbers<[1], [0], [0], [1], [0, 0, 1, 1], [], []>} : vector<8x32xf32>, vector<32x128xf32>, vector<8x128xf32> -> vector<8x128xf32>
    %685 = arith.addf %683, %684 : vector<8x128xf32>
    %686 = vector.extract_strided_slice %685 {offsets = [0, 0], sizes = [8, 96], strides = [1, 1]} : vector<8x128xf32> to vector<8x96xf32>
    %687 = arith.negf %686 : vector<8x96xf32>
    %688 = math.exp %687 : vector<8x96xf32>
    %cst_201 = arith.constant 1.000000e+00 : f32
    %689 = vector.broadcast %cst_201 : f32 to vector<8x96xf32>
    %690 = arith.addf %689, %688 : vector<8x96xf32>
    %691 = arith.divf %689, %690 : vector<8x96xf32>
    %692 = vector.extract_strided_slice %685 {offsets = [0, 96], sizes = [8, 32], strides = [1, 1]} : vector<8x128xf32> to vector<8x32xf32>
    %693 = math.tanh %692 : vector<8x32xf32>
    %694 = vector.extract_strided_slice %691 {offsets = [0, 32], sizes = [8, 32], strides = [1, 1]} : vector<8x96xf32> to vector<8x32xf32>
    %695 = arith.mulf %694, %678 : vector<8x32xf32>
    %696 = vector.extract_strided_slice %691 {offsets = [0, 0], sizes = [8, 32], strides = [1, 1]} : vector<8x96xf32> to vector<8x32xf32>
    %697 = arith.mulf %696, %693 : vector<8x32xf32>
    %698 = arith.addf %695, %697 : vector<8x32xf32>
    %699 = vector.extract_strided_slice %691 {offsets = [0, 64], sizes = [8, 32], strides = [1, 1]} : vector<8x96xf32> to vector<8x32xf32>
    %700 = math.tanh %698 : vector<8x32xf32>
    %701 = arith.mulf %699, %700 : vector<8x32xf32>
    %702 = tpu.concatenate %398, %701, %538, %561 in 1 : vector<8x32xf32>, vector<8x32xf32>, vector<8x32xf32>, vector<8x32xf32> -> vector<8x128xf32>
    %c0_202 = arith.constant 0 : index
    %c0_203 = arith.constant 0 : index
    %703 = vector.load %arg13[%c0_202, %c0_203] : memref<128x128xf32, #tpu.memory_space<vmem>>, vector<128x128xf32>
    %cst_204 = arith.constant dense<0.000000e+00> : vector<8x128xf32>
    %704 = tpu.matmul %702, %703, %cst_204 {dimension_numbers = #tpu.dot_dimension_numbers<[1], [0], [0], [1], [0, 0, 1, 1], [], []>} : vector<8x128xf32>, vector<128x128xf32>, vector<8x128xf32> -> vector<8x128xf32>
    %c0_205 = arith.constant 0 : index
    %c0_206 = arith.constant 0 : index
    %705 = vector.load %arg14[%c0_205, %c0_206] : memref<1x128xf32, #tpu.memory_space<vmem>>, vector<1x128xf32>
    %706 = vector.broadcast %705 : vector<1x128xf32> to vector<8x128xf32>
    %707 = arith.addf %704, %706 : vector<8x128xf32>
    %c0_207 = arith.constant 0 : index
    %c0_208 = arith.constant 0 : index
    %708 = vector.load %arg15[%c0_207, %c0_208] : memref<128x128xf32, #tpu.memory_space<vmem>>, vector<128x128xf32>
    %cst_209 = arith.constant dense<0.000000e+00> : vector<8x128xf32>
    %709 = tpu.matmul %707, %708, %cst_209 {dimension_numbers = #tpu.dot_dimension_numbers<[1], [0], [0], [1], [0, 0, 1, 1], [], []>} : vector<8x128xf32>, vector<128x128xf32>, vector<8x128xf32> -> vector<8x128xf32>
    %c0_210 = arith.constant 0 : index
    %c0_211 = arith.constant 0 : index
    %710 = vector.load %arg16[%c0_210, %c0_211] : memref<1x128xf32, #tpu.memory_space<vmem>>, vector<1x128xf32>
    %711 = vector.broadcast %710 : vector<1x128xf32> to vector<8x128xf32>
    %712 = arith.addf %709, %711 : vector<8x128xf32>
    %713 = tpu.iota {dimensions = array<i32: 1>} : vector<8x128xi32>
    %c3_i32 = arith.constant 3 : i32
    %714 = vector.broadcast %c3_i32 : i32 to vector<8x128xi32>
    %715 = arith.cmpi slt, %713, %714 : vector<8x128xi32>
    %cst_212 = arith.constant -1.000000e+30 : f32
    %716 = vector.broadcast %cst_212 : f32 to vector<8x128xf32>
    %717 = arith.select %715, %712, %716 : vector<8x128xi1>, vector<8x128xf32>
    %cst_213 = arith.constant dense<0xFF800000> : vector<8xf32>
    %718 = vector.multi_reduction <maximumf>, %717, %cst_213 [1] : vector<8x128xf32> to vector<8xf32>
    %719 = vector.shape_cast %718 : vector<8xf32> to vector<8x1xf32>
    %720 = vector.broadcast %719 : vector<8x1xf32> to vector<8x128xf32>
    %721 = arith.subf %717, %720 : vector<8x128xf32>
    %722 = math.exp %721 : vector<8x128xf32>
    %cst_214 = arith.constant dense<0.000000e+00> : vector<8xf32>
    %723 = vector.multi_reduction <add>, %722, %cst_214 [1] : vector<8x128xf32> to vector<8xf32>
    %724 = vector.shape_cast %723 : vector<8xf32> to vector<8x1xf32>
    %725 = math.log %724 : vector<8x1xf32>
    %726 = vector.broadcast %725 : vector<8x1xf32> to vector<8x128xf32>
    %727 = arith.subf %721, %726 : vector<8x128xf32>
    %c0_215 = arith.constant 0 : index
    %c0_216 = arith.constant 0 : index
    %728 = vector.load %arg17[%c0_215, %c0_216] : memref<8x128xf32, #tpu.memory_space<vmem>>, vector<8x128xf32>
    tpu.vector_store %arg17[%c0_215, %c0_216], %727 {strides = array<i32>} : memref<8x128xf32, #tpu.memory_space<vmem>>, vector<8x128xf32>,
    return
  }
}

</mosaic_0001>

<llo_original>
// kernel: lsrnn_forward.1
$region0: #{lsrnn_forward.1}
  #allocation0 [shape = 'u32[]', space=smem, size = 0x4, offset = 0x4, fixed_abs, tag = 'smem constant byte address 0x4 - core index']
  #allocation1 [shape = 'u32[72,128]{1,0:T(1,128)}', space=vmem, size = 0x9000, scoped, tag = 'internal scratch']
  #allocation2 [shape = 'f32[8,8,128]{2,1,0:T(8,128)}', space=vmem, size = 0x8000, scoped, tag = 'scratch operand']
  #allocation3 [shape = 'f32[8,8,128]{2,1,0:T(8,128)}', space=vmem, size = 0x8000, scoped, tag = 'scratch operand']
  %s0 = inlined_call_operand.vmem [shape: f32[8,8,32], index: 0, kind: input, shape index: {}]
  %s1 = inlined_call_operand.vmem [shape: f32[32,128], index: 1, kind: input, shape index: {}]
  %s2 = inlined_call_operand.vmem [shape: f32[32,128], index: 2, kind: input, shape index: {}]
  %s3 = inlined_call_operand.vmem [shape: f32[1,128], index: 3, kind: input, shape index: {}]
  %s4 = inlined_call_operand.vmem [shape: f32[32,128], index: 4, kind: input, shape index: {}]
  %s5 = inlined_call_operand.vmem [shape: f32[32,128], index: 5, kind: input, shape index: {}]
  %s6 = inlined_call_operand.vmem [shape: f32[1,128], index: 6, kind: input, shape index: {}]
  %s7 = inlined_call_operand.vmem [shape: f32[64,128], index: 7, kind: input, shape index: {}]
  %s8 = inlined_call_operand.vmem [shape: f32[32,128], index: 8, kind: input, shape index: {}]
  %s9 = inlined_call_operand.vmem [shape: f32[1,128], index: 9, kind: input, shape index: {}]
  %s10 = inlined_call_operand.vmem [shape: f32[64,128], index: 10, kind: input, shape index: {}]
  %s11 = inlined_call_operand.vmem [shape: f32[32,128], index: 11, kind: input, shape index: {}]
  %s12 = inlined_call_operand.vmem [shape: f32[1,128], index: 12, kind: input, shape index: {}]
  %s13 = inlined_call_operand.vmem [shape: f32[128,128], index: 13, kind: input, shape index: {}]
  %s14 = inlined_call_operand.vmem [shape: f32[1,128], index: 14, kind: input, shape index: {}]
  %s15 = inlined_call_operand.vmem [shape: f32[128,128], index: 15, kind: input, shape index: {}]
  %s16 = inlined_call_operand.vmem [shape: f32[1,128], index: 16, kind: input, shape index: {}]
  %s17 = inlined_call_operand.vmem [shape: f32[8,128], index: 17, kind: output, shape index: {}]
  %s18 = sld [smem:[#allocation0]]
  $region78: #{lsrnn_forward.1} parent=0
    _
  %s20 = ssub.s32 1, %s18
  %s21 = scalar_select 0, %s20, %s18
  // Predicated region
  $region2: #{lsrnn_forward.1} parent=0 // pred_check
    _
  $region3: #{lsrnn_forward.1} parent=0 // pred_check_branch
    %23 = sbr.rel (0) target = $region5
  $region4: #{lsrnn_forward.1} parent=0 // pred_region
    _
  $region5: #{lsrnn_forward.1} parent=0 // pred_fallthru
    _
  // Predicated region
  $region6: #{lsrnn_forward.1} parent=0 // pred_check
    _
  $region7: #{lsrnn_forward.1} parent=0 // pred_check_branch
    %25 = sbr.rel (0) target = $region9
  $region8: #{lsrnn_forward.1} parent=0 // pred_region
    _
  $region9: #{lsrnn_forward.1} parent=0 // pred_fallthru
    _
  // Predicated region
  $region10: #{lsrnn_forward.1} parent=0 // pred_check
    _
  $region11: #{lsrnn_forward.1} parent=0 // pred_check_branch
    %27 = sbr.rel (0) target = $region13
  $region12: #{lsrnn_forward.1} parent=0 // pred_region
    _
  $region13: #{lsrnn_forward.1} parent=0 // pred_fallthru
    _
  // Predicated region
  $region14: #{lsrnn_forward.1} parent=0 // pred_check
    _
  $region15: #{lsrnn_forward.1} parent=0 // pred_check_branch
    %29 = sbr.rel (0) target = $region17
  $region16: #{lsrnn_forward.1} parent=0 // pred_region
    _
  $region17: #{lsrnn_forward.1} parent=0 // pred_fallthru
    _
  // Predicated region
  $region18: #{lsrnn_forward.1} parent=0 // pred_check
    _
  $region19: #{lsrnn_forward.1} parent=0 // pred_check_branch
    %31 = sbr.rel (0) target = $region21
  $region20: #{lsrnn_forward.1} parent=0 // pred_region
    _
  $region21: #{lsrnn_forward.1} parent=0 // pred_fallthru
    _
  // Predicated region
  $region22: #{lsrnn_forward.1} parent=0 // pred_check
    _
  $region23: #{lsrnn_forward.1} parent=0 // pred_check_branch
    %33 = sbr.rel (0) target = $region25
  $region24: #{lsrnn_forward.1} parent=0 // pred_region
    _
  $region25: #{lsrnn_forward.1} parent=0 // pred_fallthru
    _
  // Predicated region
  $region26: #{lsrnn_forward.1} parent=0 // pred_check
    _
  $region27: #{lsrnn_forward.1} parent=0 // pred_check_branch
    %35 = sbr.rel (0) target = $region29
  $region28: #{lsrnn_forward.1} parent=0 // pred_region
    _
  $region29: #{lsrnn_forward.1} parent=0 // pred_fallthru
    _
  // Predicated region
  $region30: #{lsrnn_forward.1} parent=0 // pred_check
    _
  $region31: #{lsrnn_forward.1} parent=0 // pred_check_branch
    %37 = sbr.rel (0) target = $region33
  $region32: #{lsrnn_forward.1} parent=0 // pred_region
    _
  $region33: #{lsrnn_forward.1} parent=0 // pred_fallthru
    _
  // Predicated region
  $region34: #{lsrnn_forward.1} parent=0 // pred_check
    _
  $region35: #{lsrnn_forward.1} parent=0 // pred_check_branch
    %39 = sbr.rel (0) target = $region37
  $region36: #{lsrnn_forward.1} parent=0 // pred_region
    _
  $region37: #{lsrnn_forward.1} parent=0 // pred_fallthru
    _
  // Predicated region
  $region38: #{lsrnn_forward.1} parent=0 // pred_check
    _
  $region39: #{lsrnn_forward.1} parent=0 // pred_check_branch
    %41 = sbr.rel (0) target = $region41
  $region40: #{lsrnn_forward.1} parent=0 // pred_region
    _
  $region41: #{lsrnn_forward.1} parent=0 // pred_fallthru
    _
  // Predicated region
  $region42: #{lsrnn_forward.1} parent=0 // pred_check
    _
  $region43: #{lsrnn_forward.1} parent=0 // pred_check_branch
    %43 = sbr.rel (0) target = $region45
  $region44: #{lsrnn_forward.1} parent=0 // pred_region
    _
  $region45: #{lsrnn_forward.1} parent=0 // pred_fallthru
    _
  // Predicated region
  $region46: #{lsrnn_forward.1} parent=0 // pred_check
    _
  $region47: #{lsrnn_forward.1} parent=0 // pred_check_branch
    %45 = sbr.rel (0) target = $region49
  $region48: #{lsrnn_forward.1} parent=0 // pred_region
    _
  $region49: #{lsrnn_forward.1} parent=0 // pred_fallthru
    _
  // Predicated region
  $region50: #{lsrnn_forward.1} parent=0 // pred_check
    _
  $region51: #{lsrnn_forward.1} parent=0 // pred_check_branch
    %47 = sbr.rel (0) target = $region53
  $region52: #{lsrnn_forward.1} parent=0 // pred_region
    _
  $region53: #{lsrnn_forward.1} parent=0 // pred_fallthru
    _
  // Predicated region
  $region54: #{lsrnn_forward.1} parent=0 // pred_check
    _
  $region55: #{lsrnn_forward.1} parent=0 // pred_check_branch
    %49 = sbr.rel (0) target = $region57
  $region56: #{lsrnn_forward.1} parent=0 // pred_region
    _
  $region57: #{lsrnn_forward.1} parent=0 // pred_fallthru
    _
  // Predicated region
  $region58: #{lsrnn_forward.1} parent=0 // pred_check
    _
  $region59: #{lsrnn_forward.1} parent=0 // pred_check_branch
    %51 = sbr.rel (0) target = $region61
  $region60: #{lsrnn_forward.1} parent=0 // pred_region
    _
  $region61: #{lsrnn_forward.1} parent=0 // pred_fallthru
    _
  // Predicated region
  $region62: #{lsrnn_forward.1} parent=0 // pred_check
    _
  $region63: #{lsrnn_forward.1} parent=0 // pred_check_branch
    %53 = sbr.rel (0) target = $region65
  $region64: #{lsrnn_forward.1} parent=0 // pred_region
    _
  $region65: #{lsrnn_forward.1} parent=0 // pred_fallthru
    _
  // Predicated region
  $region66: #{lsrnn_forward.1} parent=0 // pred_check
    _
  $region67: #{lsrnn_forward.1} parent=0 // pred_check_branch
    %55 = sbr.rel (0) target = $region69
  $region68: #{lsrnn_forward.1} parent=0 // pred_region
    _
  $region69: #{lsrnn_forward.1} parent=0 // pred_fallthru
    _
  %v56 = vld [vmem:[%s0] sm:$0xff]
  %v57 = vld [vmem:[%s0 + $0x8] sm:$0xff]
  %v58 = vld [vmem:[%s0 + $0x10] sm:$0xff]
  %v59 = vld [vmem:[%s0 + $0x18] sm:$0xff]
  %v60 = vld [vmem:[%s0 + $0x20] sm:$0xff]
  %v61 = vld [vmem:[%s0 + $0x28] sm:$0xff]
  %v62 = vld [vmem:[%s0 + $0x30] sm:$0xff]
  %v63 = vld [vmem:[%s0 + $0x38] sm:$0xff]
  %v64 = vld [vmem:[%s1] sm:$0xff]
  %v65 = vld [vmem:[%s1 + $0x8] sm:$0xff]
  %v66 = vld [vmem:[%s1 + $0x10] sm:$0xff]
  %v67 = vld [vmem:[%s1 + $0x18] sm:$0xff]
  %v68 = vld [vmem:[%s3] sm:$0x1]
  %v70 = vperm.slane %v68, 0
  %vm72 = vcmask 261120
  %v74 = vsel %vm72, %v56, 0
  %v77 = vsel %vm72, %v57, 0
  %v80 = vsel %vm72, %v58, 0
  %v83 = vsel %vm72, %v59, 0
  %v86 = vsel %vm72, %v60, 0
  %v89 = vsel %vm72, %v61, 0
  %v92 = vsel %vm72, %v62, 0
  %v95 = vsel %vm72, %v63, 0
  %97 = vmatpush.msra.mxu0 0.0
  %98 = vmatpush.msra.mxu0 0.0
  %99 = vmatpush.msra.mxu0 0.0
  %100 = vmatpush.msra.mxu0 0.0
  %101 = vmatpush.msra.mxu0 0.0
  %102 = vmatpush.msra.mxu0 0.0
  %103 = vmatpush.msra.mxu0 0.0
  %104 = vmatpush.msra.mxu0 0.0
  %105 = vmatpush.msra.mxu0 0.0
  %106 = vmatpush.msra.mxu0 0.0
  %107 = vmatpush.msra.mxu0 0.0
  %108 = vmatpush.msra.mxu0 0.0
  %109 = vmatpush.msra.mxu0 %v67
  %110 = vmatpush.msra.mxu0 %v66
  %111 = vmatpush.msra.mxu0 %v65
  %112 = vmatpush.msra.mxu0 %v64
  %113 = vmatmul.f32.gmra.mxu0 %v74
  %v114 = vpop.f32.mrf.mxu0
  %v115 = vadd.f32 %v70, %v114
  %116 = vmatmul.f32.gmra.mxu0 %v77
  %v117 = vpop.f32.mrf.mxu0
  %v118 = vadd.f32 %v70, %v117
  %119 = vmatmul.f32.gmra.mxu0 %v80
  %v120 = vpop.f32.mrf.mxu0
  %v121 = vadd.f32 %v70, %v120
  %122 = vmatmul.f32.gmra.mxu0 %v83
  %v123 = vpop.f32.mrf.mxu0
  %v124 = vadd.f32 %v70, %v123
  %125 = vmatmul.f32.gmra.mxu0 %v86
  %v126 = vpop.f32.mrf.mxu0
  %v127 = vadd.f32 %v70, %v126
  %128 = vmatmul.f32.gmra.mxu0 %v89
  %v129 = vpop.f32.mrf.mxu0
  %v130 = vadd.f32 %v70, %v129
  %131 = vmatmul.f32.gmra.mxu0 %v92
  %v132 = vpop.f32.mrf.mxu0
  %v133 = vadd.f32 %v70, %v132
  %134 = vmatmul.f32.gmra.mxu0 %v95
  %v135 = vpop.f32.mrf.mxu0
  %v136 = vadd.f32 %v70, %v135
  %137 = vdwg.mxu0
  %138 = vst [vmem:[#allocation2] sm:$0xff] %v115
  %139 = vst [vmem:[#allocation2 + $0x8] sm:$0xff] %v118
  %140 = vst [vmem:[#allocation2 + $0x10] sm:$0xff] %v121
  %141 = vst [vmem:[#allocation2 + $0x18] sm:$0xff] %v124
  %142 = vst [vmem:[#allocation2 + $0x20] sm:$0xff] %v127
  %143 = vst [vmem:[#allocation2 + $0x28] sm:$0xff] %v130
  %144 = vst [vmem:[#allocation2 + $0x30] sm:$0xff] %v133
  %145 = vst [vmem:[#allocation2 + $0x38] sm:$0xff] %v136
  %v146 = vld [vmem:[%s4] sm:$0xff]
  %v147 = vld [vmem:[%s4 + $0x8] sm:$0xff]
  %v148 = vld [vmem:[%s4 + $0x10] sm:$0xff]
  %v149 = vld [vmem:[%s4 + $0x18] sm:$0xff]
  %v150 = vld [vmem:[%s6] sm:$0x1]
  %v152 = vperm.slane %v150, 0
  %154 = vmatpush.msra.mxu0 0.0
  %155 = vmatpush.msra.mxu0 0.0
  %156 = vmatpush.msra.mxu0 0.0
  %157 = vmatpush.msra.mxu0 0.0
  %158 = vmatpush.msra.mxu0 0.0
  %159 = vmatpush.msra.mxu0 0.0
  %160 = vmatpush.msra.mxu0 0.0
  %161 = vmatpush.msra.mxu0 0.0
  %162 = vmatpush.msra.mxu0 0.0
  %163 = vmatpush.msra.mxu0 0.0
  %164 = vmatpush.msra.mxu0 0.0
  %165 = vmatpush.msra.mxu0 0.0
  %166 = vmatpush.msra.mxu0 %v149
  %167 = vmatpush.msra.mxu0 %v148
  %168 = vmatpush.msra.mxu0 %v147
  %169 = vmatpush.msra.mxu0 %v146
  %170 = vmatmul.f32.gmra.mxu0 %v74
  %v171 = vpop.f32.mrf.mxu0
  %v172 = vadd.f32 %v152, %v171
  %173 = vmatmul.f32.gmra.mxu0 %v77
  %v174 = vpop.f32.mrf.mxu0
  %v175 = vadd.f32 %v152, %v174
  %176 = vmatmul.f32.gmra.mxu0 %v80
  %v177 = vpop.f32.mrf.mxu0
  %v178 = vadd.f32 %v152, %v177
  %179 = vmatmul.f32.gmra.mxu0 %v83
  %v180 = vpop.f32.mrf.mxu0
  %v181 = vadd.f32 %v152, %v180
  %182 = vmatmul.f32.gmra.mxu0 %v86
  %v183 = vpop.f32.mrf.mxu0
  %v184 = vadd.f32 %v152, %v183
  %185 = vmatmul.f32.gmra.mxu0 %v89
  %v186 = vpop.f32.mrf.mxu0
  %v187 = vadd.f32 %v152, %v186
  %188 = vmatmul.f32.gmra.mxu0 %v92
  %v189 = vpop.f32.mrf.mxu0
  %v190 = vadd.f32 %v152, %v189
  %191 = vmatmul.f32.gmra.mxu0 %v95
  %v192 = vpop.f32.mrf.mxu0
  %v193 = vadd.f32 %v152, %v192
  %194 = vdwg.mxu0
  %195 = vst [vmem:[#allocation3] sm:$0xff] %v172
  %196 = vst [vmem:[#allocation3 + $0x8] sm:$0xff] %v175
  %197 = vst [vmem:[#allocation3 + $0x10] sm:$0xff] %v178
  %198 = vst [vmem:[#allocation3 + $0x18] sm:$0xff] %v181
  %199 = vst [vmem:[#allocation3 + $0x20] sm:$0xff] %v184
  %200 = vst [vmem:[#allocation3 + $0x28] sm:$0xff] %v187
  %201 = vst [vmem:[#allocation3 + $0x30] sm:$0xff] %v190
  %202 = vst [vmem:[#allocation3 + $0x38] sm:$0xff] %v193
  %v203 = vld [vmem:[%s2] sm:$0xff]
  %v204 = vld [vmem:[%s2 + $0x8] sm:$0xff]
  %v205 = vld [vmem:[%s2 + $0x10] sm:$0xff]
  %v206 = vld [vmem:[%s2 + $0x18] sm:$0xff]
  %v207 = vld [vmem:[#allocation2] sm:$0xff]
  %v209 = vsel %vm72, 0.0, 0
  %211 = vmatpush.msra.mxu0 0.0
  %212 = vmatpush.msra.mxu0 0.0
  %213 = vmatpush.msra.mxu0 0.0
  %214 = vmatpush.msra.mxu0 0.0
  %215 = vmatpush.msra.mxu0 0.0
  %216 = vmatpush.msra.mxu0 0.0
  %217 = vmatpush.msra.mxu0 0.0
  %218 = vmatpush.msra.mxu0 0.0
  %219 = vmatpush.msra.mxu0 0.0
  %220 = vmatpush.msra.mxu0 0.0
  %221 = vmatpush.msra.mxu0 0.0
  %222 = vmatpush.msra.mxu0 0.0
  %223 = vmatpush.msra.mxu0 %v206
  %224 = vmatpush.msra.mxu0 %v205
  %225 = vmatpush.msra.mxu0 %v204
  %226 = vmatpush.msra.mxu0 %v203
  %227 = vmatmul.f32.gmra.mxu0 %v209
  %v228 = vpop.f32.mrf.mxu0
  %v229 = vadd.f32 0.0, %v228
  %230 = vdwg.mxu0
  %v231 = vadd.f32 %v207, %v229
  %v232 = vxor.u32 %v231, 2147483648
  %v233 = vmul.f32 %v232, 1.442695
  %v234 = vpow.pop %v233
  %v235 = vadd.f32 %v234, 1.0
  %v236 = vrcp.pop %v235
  %v237 = vmul.f32 %v235, %v236
  %v238 = vsub.f32 1.0, %v237
  %v239 = vmul.f32 %v236, %v238
  %v240 = vadd.f32 %v236, %v239
  %vm241 = vweird.f32 %v235
  %vm242 = vweird.f32 %v236
  %vm243 = vmor %vm241, %vm242
  %v244 = vsel %vm243, %v236, %v240
  %v245 = vand.u32 2147483647, %v235
  %vm246 = vcmp.eq.f32.partialorder %v245, 8.507059e+37
  %v247 = vand.u32 %v235, 2147483648
  %v248 = vor.u32 1.1754944e-38, %v247
  %v249 = vsel %vm246, %v248, %v244
  %v250 = vmul.f32 1.0, %v249
  %v251 = vtanh.pop %v231
  %v252 = vmul.f32 %v250, 0.0
  %254 = vrot.lane.b32.xlu0 %v251, 32
  %v255 = vpop.permute.xlu0 %254
  %v257 = vmul.f32 %v250, %v255
  %259 = vrot.lane.b32.xlu0 %v257, 32
  %v260 = vpop.permute.xlu0 %259
  %v262 = vadd.f32 %v252, %v260
  %v263 = vtanh.pop %v262
  %265 = vrot.lane.b32.xlu0 %v263, 32
  %v266 = vpop.permute.xlu0 %265
  %v268 = vmul.f32 %v250, %v266
  %s269 = scalar_lea.vmem [#allocation2], 8
  %v270 = vld [vmem:[%s269] sm:$0xff]
  %272 = vrot.lane.b32.xlu0 %v268, 64
  %v273 = vpop.permute.xlu0 %272
  %v274 = vsel %vm72, %v273, 0
  %276 = vmatpush.msra.mxu0 0.0
  %277 = vmatpush.msra.mxu0 0.0
  %278 = vmatpush.msra.mxu0 0.0
  %279 = vmatpush.msra.mxu0 0.0
  %280 = vmatpush.msra.mxu0 0.0
  %281 = vmatpush.msra.mxu0 0.0
  %282 = vmatpush.msra.mxu0 0.0
  %283 = vmatpush.msra.mxu0 0.0
  %284 = vmatpush.msra.mxu0 0.0
  %285 = vmatpush.msra.mxu0 0.0
  %286 = vmatpush.msra.mxu0 0.0
  %287 = vmatpush.msra.mxu0 0.0
  %288 = vmatpush.msra.mxu0 %v206
  %289 = vmatpush.msra.mxu0 %v205
  %290 = vmatpush.msra.mxu0 %v204
  %291 = vmatpush.msra.mxu0 %v203
  %292 = vmatmul.f32.gmra.mxu0 %v274
  %v293 = vpop.f32.mrf.mxu0
  %v294 = vadd.f32 0.0, %v293
  %295 = vdwg.mxu0
  %v296 = vadd.f32 %v270, %v294
  %v297 = vxor.u32 %v296, 2147483648
  %v298 = vmul.f32 %v297, 1.442695
  %v299 = vpow.pop %v298
  %v300 = vadd.f32 %v299, 1.0
  %v301 = vrcp.pop %v300
  %v302 = vmul.f32 %v300, %v301
  %v303 = vsub.f32 1.0, %v302
  %v304 = vmul.f32 %v301, %v303
  %v305 = vadd.f32 %v301, %v304
  %vm306 = vweird.f32 %v300
  %vm307 = vweird.f32 %v301
  %vm308 = vmor %vm306, %vm307
  %v309 = vsel %vm308, %v301, %v305
  %v310 = vand.u32 2147483647, %v300
  %vm311 = vcmp.eq.f32.partialorder %v310, 8.507059e+37
  %v312 = vand.u32 %v300, 2147483648
  %v313 = vor.u32 1.1754944e-38, %v312
  %v314 = vsel %vm311, %v313, %v309
  %v315 = vmul.f32 1.0, %v314
  %v316 = vtanh.pop %v296
  %v317 = vmul.f32 %v315, %v262
  %319 = vrot.lane.b32.xlu0 %v316, 32
  %v320 = vpop.permute.xlu0 %319
  %v322 = vmul.f32 %v315, %v320
  %324 = vrot.lane.b32.xlu0 %v322, 32
  %v325 = vpop.permute.xlu0 %324
  %v327 = vadd.f32 %v317, %v325
  %v328 = vtanh.pop %v327
  %330 = vrot.lane.b32.xlu0 %v328, 32
  %v331 = vpop.permute.xlu0 %330
  %v333 = vmul.f32 %v315, %v331
  %s334 = scalar_lea.vmem [#allocation2], 16
  %v335 = vld [vmem:[%s334] sm:$0xff]
  %337 = vrot.lane.b32.xlu0 %v333, 64
  %v338 = vpop.permute.xlu0 %337
  %v339 = vsel %vm72, %v338, 0
  %341 = vmatpush.msra.mxu0 0.0
  %342 = vmatpush.msra.mxu0 0.0
  %343 = vmatpush.msra.mxu0 0.0
  %344 = vmatpush.msra.mxu0 0.0
  %345 = vmatpush.msra.mxu0 0.0
  %346 = vmatpush.msra.mxu0 0.0
  %347 = vmatpush.msra.mxu0 0.0
  %348 = vmatpush.msra.mxu0 0.0
  %349 = vmatpush.msra.mxu0 0.0
  %350 = vmatpush.msra.mxu0 0.0
  %351 = vmatpush.msra.mxu0 0.0
  %352 = vmatpush.msra.mxu0 0.0
  %353 = vmatpush.msra.mxu0 %v206
  %354 = vmatpush.msra.mxu0 %v205
  %355 = vmatpush.msra.mxu0 %v204
  %356 = vmatpush.msra.mxu0 %v203
  %357 = vmatmul.f32.gmra.mxu0 %v339
  %v358 = vpop.f32.mrf.mxu0
  %v359 = vadd.f32 0.0, %v358
  %360 = vdwg.mxu0
  %v361 = vadd.f32 %v335, %v359
  %v362 = vxor.u32 %v361, 2147483648
  %v363 = vmul.f32 %v362, 1.442695
  %v364 = vpow.pop %v363
  %v365 = vadd.f32 %v364, 1.0
  %v366 = vrcp.pop %v365
  %v367 = vmul.f32 %v365, %v366
  %v368 = vsub.f32 1.0, %v367
  %v369 = vmul.f32 %v366, %v368
  %v370 = vadd.f32 %v366, %v369
  %vm371 = vweird.f32 %v365
  %vm372 = vweird.f32 %v366
  %vm373 = vmor %vm371, %vm372
  %v374 = vsel %vm373, %v366, %v370
  %v375 = vand.u32 2147483647, %v365
  %vm376 = vcmp.eq.f32.partialorder %v375, 8.507059e+37
  %v377 = vand.u32 %v365, 2147483648
  %v378 = vor.u32 1.1754944e-38, %v377
  %v379 = vsel %vm376, %v378, %v374
  %v380 = vmul.f32 1.0, %v379
  %v381 = vtanh.pop %v361
  %v382 = vmul.f32 %v380, %v327
  %384 = vrot.lane.b32.xlu0 %v381, 32
  %v385 = vpop.permute.xlu0 %384
  %v387 = vmul.f32 %v380, %v385
  %389 = vrot.lane.b32.xlu0 %v387, 32
  %v390 = vpop.permute.xlu0 %389
  %v392 = vadd.f32 %v382, %v390
  %v393 = vtanh.pop %v392
  %395 = vrot.lane.b32.xlu0 %v393, 32
  %v396 = vpop.permute.xlu0 %395
  %v398 = vmul.f32 %v380, %v396
  %s399 = scalar_lea.vmem [#allocation2], 24
  %v400 = vld [vmem:[%s399] sm:$0xff]
  %402 = vrot.lane.b32.xlu0 %v398, 64
  %v403 = vpop.permute.xlu0 %402
  %v404 = vsel %vm72, %v403, 0
  %406 = vmatpush.msra.mxu0 0.0
  %407 = vmatpush.msra.mxu0 0.0
  %408 = vmatpush.msra.mxu0 0.0
  %409 = vmatpush.msra.mxu0 0.0
  %410 = vmatpush.msra.mxu0 0.0
  %411 = vmatpush.msra.mxu0 0.0
  %412 = vmatpush.msra.mxu0 0.0
  %413 = vmatpush.msra.mxu0 0.0
  %414 = vmatpush.msra.mxu0 0.0
  %415 = vmatpush.msra.mxu0 0.0
  %416 = vmatpush.msra.mxu0 0.0
  %417 = vmatpush.msra.mxu0 0.0
  %418 = vmatpush.msra.mxu0 %v206
  %419 = vmatpush.msra.mxu0 %v205
  %420 = vmatpush.msra.mxu0 %v204
  %421 = vmatpush.msra.mxu0 %v203
  %422 = vmatmul.f32.gmra.mxu0 %v404
  %v423 = vpop.f32.mrf.mxu0
  %v424 = vadd.f32 0.0, %v423
  %425 = vdwg.mxu0
  %v426 = vadd.f32 %v400, %v424
  %v427 = vxor.u32 %v426, 2147483648
  %v428 = vmul.f32 %v427, 1.442695
  %v429 = vpow.pop %v428
  %v430 = vadd.f32 %v429, 1.0
  %v431 = vrcp.pop %v430
  %v432 = vmul.f32 %v430, %v431
  %v433 = vsub.f32 1.0, %v432
  %v434 = vmul.f32 %v431, %v433
  %v435 = vadd.f32 %v431, %v434
  %vm436 = vweird.f32 %v430
  %vm437 = vweird.f32 %v431
  %vm438 = vmor %vm436, %vm437
  %v439 = vsel %vm438, %v431, %v435
  %v440 = vand.u32 2147483647, %v430
  %vm441 = vcmp.eq.f32.partialorder %v440, 8.507059e+37
  %v442 = vand.u32 %v430, 2147483648
  %v443 = vor.u32 1.1754944e-38, %v442
  %v444 = vsel %vm441, %v443, %v439
  %v445 = vmul.f32 1.0, %v444
  %v446 = vtanh.pop %v426
  %v447 = vmul.f32 %v445, %v392
  %449 = vrot.lane.b32.xlu0 %v446, 32
  %v450 = vpop.permute.xlu0 %449
  %v452 = vmul.f32 %v445, %v450
  %454 = vrot.lane.b32.xlu0 %v452, 32
  %v455 = vpop.permute.xlu0 %454
  %v457 = vadd.f32 %v447, %v455
  %v458 = vtanh.pop %v457
  %460 = vrot.lane.b32.xlu0 %v458, 32
  %v461 = vpop.permute.xlu0 %460
  %v463 = vmul.f32 %v445, %v461
  %s464 = scalar_lea.vmem [#allocation2], 32
  %v465 = vld [vmem:[%s464] sm:$0xff]
  %467 = vrot.lane.b32.xlu0 %v463, 64
  %v468 = vpop.permute.xlu0 %467
  %v469 = vsel %vm72, %v468, 0
  %471 = vmatpush.msra.mxu0 0.0
  %472 = vmatpush.msra.mxu0 0.0
  %473 = vmatpush.msra.mxu0 0.0
  %474 = vmatpush.msra.mxu0 0.0
  %475 = vmatpush.msra.mxu0 0.0
  %476 = vmatpush.msra.mxu0 0.0
  %477 = vmatpush.msra.mxu0 0.0
  %478 = vmatpush.msra.mxu0 0.0
  %479 = vmatpush.msra.mxu0 0.0
  %480 = vmatpush.msra.mxu0 0.0
  %481 = vmatpush.msra.mxu0 0.0
  %482 = vmatpush.msra.mxu0 0.0
  %483 = vmatpush.msra.mxu0 %v206
  %484 = vmatpush.msra.mxu0 %v205
  %485 = vmatpush.msra.mxu0 %v204
  %486 = vmatpush.msra.mxu0 %v203
  %487 = vmatmul.f32.gmra.mxu0 %v469
  %v488 = vpop.f32.mrf.mxu0
  %v489 = vadd.f32 0.0, %v488
  %490 = vdwg.mxu0
  %v491 = vadd.f32 %v465, %v489
  %v492 = vxor.u32 %v491, 2147483648
  %v493 = vmul.f32 %v492, 1.442695
  %v494 = vpow.pop %v493
  %v495 = vadd.f32 %v494, 1.0
  %v496 = vrcp.pop %v495
  %v497 = vmul.f32 %v495, %v496
  %v498 = vsub.f32 1.0, %v497
  %v499 = vmul.f32 %v496, %v498
  %v500 = vadd.f32 %v496, %v499
  %vm501 = vweird.f32 %v495
  %vm502 = vweird.f32 %v496
  %vm503 = vmor %vm501, %vm502
  %v504 = vsel %vm503, %v496, %v500
  %v505 = vand.u32 2147483647, %v495
  %vm506 = vcmp.eq.f32.partialorder %v505, 8.507059e+37
  %v507 = vand.u32 %v495, 2147483648
  %v508 = vor.u32 1.1754944e-38, %v507
  %v509 = vsel %vm506, %v508, %v504
  %v510 = vmul.f32 1.0, %v509
  %v511 = vtanh.pop %v491
  %v512 = vmul.f32 %v510, %v457
  %514 = vrot.lane.b32.xlu0 %v511, 32
  %v515 = vpop.permute.xlu0 %514
  %v517 = vmul.f32 %v510, %v515
  %519 = vrot.lane.b32.xlu0 %v517, 32
  %v520 = vpop.permute.xlu0 %519
  %v522 = vadd.f32 %v512, %v520
  %v523 = vtanh.pop %v522
  %525 = vrot.lane.b32.xlu0 %v523, 32
  %v526 = vpop.permute.xlu0 %525
  %v528 = vmul.f32 %v510, %v526
  %s529 = scalar_lea.vmem [#allocation2], 40
  %v530 = vld [vmem:[%s529] sm:$0xff]
  %532 = vrot.lane.b32.xlu0 %v528, 64
  %v533 = vpop.permute.xlu0 %532
  %v534 = vsel %vm72, %v533, 0
  %536 = vmatpush.msra.mxu0 0.0
  %537 = vmatpush.msra.mxu0 0.0
  %538 = vmatpush.msra.mxu0 0.0
  %539 = vmatpush.msra.mxu0 0.0
  %540 = vmatpush.msra.mxu0 0.0
  %541 = vmatpush.msra.mxu0 0.0
  %542 = vmatpush.msra.mxu0 0.0
  %543 = vmatpush.msra.mxu0 0.0
  %544 = vmatpush.msra.mxu0 0.0
  %545 = vmatpush.msra.mxu0 0.0
  %546 = vmatpush.msra.mxu0 0.0
  %547 = vmatpush.msra.mxu0 0.0
  %548 = vmatpush.msra.mxu0 %v206
  %549 = vmatpush.msra.mxu0 %v205
  %550 = vmatpush.msra.mxu0 %v204
  %551 = vmatpush.msra.mxu0 %v203
  %552 = vmatmul.f32.gmra.mxu0 %v534
  %v553 = vpop.f32.mrf.mxu0
  %v554 = vadd.f32 0.0, %v553
  %555 = vdwg.mxu0
  %v556 = vadd.f32 %v530, %v554
  %v557 = vxor.u32 %v556, 2147483648
  %v558 = vmul.f32 %v557, 1.442695
  %v559 = vpow.pop %v558
  %v560 = vadd.f32 %v559, 1.0
  %v561 = vrcp.pop %v560
  %v562 = vmul.f32 %v560, %v561
  %v563 = vsub.f32 1.0, %v562
  %v564 = vmul.f32 %v561, %v563
  %v565 = vadd.f32 %v561, %v564
  %vm566 = vweird.f32 %v560
  %vm567 = vweird.f32 %v561
  %vm568 = vmor %vm566, %vm567
  %v569 = vsel %vm568, %v561, %v565
  %v570 = vand.u32 2147483647, %v560
  %vm571 = vcmp.eq.f32.partialorder %v570, 8.507059e+37
  %v572 = vand.u32 %v560, 2147483648
  %v573 = vor.u32 1.1754944e-38, %v572
  %v574 = vsel %vm571, %v573, %v569
  %v575 = vmul.f32 1.0, %v574
  %v576 = vtanh.pop %v556
  %v577 = vmul.f32 %v575, %v522
  %579 = vrot.lane.b32.xlu0 %v576, 32
  %v580 = vpop.permute.xlu0 %579
  %v582 = vmul.f32 %v575, %v580
  %584 = vrot.lane.b32.xlu0 %v582, 32
  %v585 = vpop.permute.xlu0 %584
  %v587 = vadd.f32 %v577, %v585
  %v588 = vtanh.pop %v587
  %590 = vrot.lane.b32.xlu0 %v588, 32
  %v591 = vpop.permute.xlu0 %590
  %v593 = vmul.f32 %v575, %v591
  %s594 = scalar_lea.vmem [#allocation2], 48
  %v595 = vld [vmem:[%s594] sm:$0xff]
  %597 = vrot.lane.b32.xlu0 %v593, 64
  %v598 = vpop.permute.xlu0 %597
  %v599 = vsel %vm72, %v598, 0
  %601 = vmatpush.msra.mxu0 0.0
  %602 = vmatpush.msra.mxu0 0.0
  %603 = vmatpush.msra.mxu0 0.0
  %604 = vmatpush.msra.mxu0 0.0
  %605 = vmatpush.msra.mxu0 0.0
  %606 = vmatpush.msra.mxu0 0.0
  %607 = vmatpush.msra.mxu0 0.0
  %608 = vmatpush.msra.mxu0 0.0
  %609 = vmatpush.msra.mxu0 0.0
  %610 = vmatpush.msra.mxu0 0.0
  %611 = vmatpush.msra.mxu0 0.0
  %612 = vmatpush.msra.mxu0 0.0
  %613 = vmatpush.msra.mxu0 %v206
  %614 = vmatpush.msra.mxu0 %v205
  %615 = vmatpush.msra.mxu0 %v204
  %616 = vmatpush.msra.mxu0 %v203
  %617 = vmatmul.f32.gmra.mxu0 %v599
  %v618 = vpop.f32.mrf.mxu0
  %v619 = vadd.f32 0.0, %v618
  %620 = vdwg.mxu0
  %v621 = vadd.f32 %v595, %v619
  %v622 = vxor.u32 %v621, 2147483648
  %v623 = vmul.f32 %v622, 1.442695
  %v624 = vpow.pop %v623
  %v625 = vadd.f32 %v624, 1.0
  %v626 = vrcp.pop %v625
  %v627 = vmul.f32 %v625, %v626
  %v628 = vsub.f32 1.0, %v627
  %v629 = vmul.f32 %v626, %v628
  %v630 = vadd.f32 %v626, %v629
  %vm631 = vweird.f32 %v625
  %vm632 = vweird.f32 %v626
  %vm633 = vmor %vm631, %vm632
  %v634 = vsel %vm633, %v626, %v630
  %v635 = vand.u32 2147483647, %v625
  %vm636 = vcmp.eq.f32.partialorder %v635, 8.507059e+37
  %v637 = vand.u32 %v625, 2147483648
  %v638 = vor.u32 1.1754944e-38, %v637
  %v639 = vsel %vm636, %v638, %v634
  %v640 = vmul.f32 1.0, %v639
  %v641 = vtanh.pop %v621
  %v642 = vmul.f32 %v640, %v587
  %644 = vrot.lane.b32.xlu0 %v641, 32
  %v645 = vpop.permute.xlu0 %644
  %v647 = vmul.f32 %v640, %v645
  %649 = vrot.lane.b32.xlu0 %v647, 32
  %v650 = vpop.permute.xlu0 %649
  %v652 = vadd.f32 %v642, %v650
  %v653 = vtanh.pop %v652
  %655 = vrot.lane.b32.xlu0 %v653, 32
  %v656 = vpop.permute.xlu0 %655
  %v658 = vmul.f32 %v640, %v656
  %s659 = scalar_lea.vmem [#allocation2], 56
  %v660 = vld [vmem:[%s659] sm:$0xff]
  %662 = vrot.lane.b32.xlu0 %v658, 64
  %v663 = vpop.permute.xlu0 %662
  %v664 = vsel %vm72, %v663, 0
  %666 = vmatpush.msra.mxu0 0.0
  %667 = vmatpush.msra.mxu0 0.0
  %668 = vmatpush.msra.mxu0 0.0
  %669 = vmatpush.msra.mxu0 0.0
  %670 = vmatpush.msra.mxu0 0.0
  %671 = vmatpush.msra.mxu0 0.0
  %672 = vmatpush.msra.mxu0 0.0
  %673 = vmatpush.msra.mxu0 0.0
  %674 = vmatpush.msra.mxu0 0.0
  %675 = vmatpush.msra.mxu0 0.0
  %676 = vmatpush.msra.mxu0 0.0
  %677 = vmatpush.msra.mxu0 0.0
  %678 = vmatpush.msra.mxu0 %v206
  %679 = vmatpush.msra.mxu0 %v205
  %680 = vmatpush.msra.mxu0 %v204
  %681 = vmatpush.msra.mxu0 %v203
  %682 = vmatmul.f32.gmra.mxu0 %v664
  %v683 = vpop.f32.mrf.mxu0
  %v684 = vadd.f32 0.0, %v683
  %685 = vdwg.mxu0
  %v686 = vadd.f32 %v660, %v684
  %v687 = vxor.u32 %v686, 2147483648
  %v688 = vmul.f32 %v687, 1.442695
  %v689 = vpow.pop %v688
  %v690 = vadd.f32 %v689, 1.0
  %v691 = vrcp.pop %v690
  %v692 = vmul.f32 %v690, %v691
  %v693 = vsub.f32 1.0, %v692
  %v694 = vmul.f32 %v691, %v693
  %v695 = vadd.f32 %v691, %v694
  %vm696 = vweird.f32 %v690
  %vm697 = vweird.f32 %v691
  %vm698 = vmor %vm696, %vm697
  %v699 = vsel %vm698, %v691, %v695
  %v700 = vand.u32 2147483647, %v690
  %vm701 = vcmp.eq.f32.partialorder %v700, 8.507059e+37
  %v702 = vand.u32 %v690, 2147483648
  %v703 = vor.u32 1.1754944e-38, %v702
  %v704 = vsel %vm701, %v703, %v699
  %v705 = vmul.f32 1.0, %v704
  %v706 = vtanh.pop %v686
  %v707 = vmul.f32 %v705, %v652
  %709 = vrot.lane.b32.xlu0 %v706, 32
  %v710 = vpop.permute.xlu0 %709
  %v712 = vmul.f32 %v705, %v710
  %714 = vrot.lane.b32.xlu0 %v712, 32
  %v715 = vpop.permute.xlu0 %714
  %v717 = vadd.f32 %v707, %v715
  %v718 = vtanh.pop %v717
  %720 = vrot.lane.b32.xlu0 %v718, 32
  %v721 = vpop.permute.xlu0 %720
  %v723 = vmul.f32 %v705, %v721
  %v724 = vld [vmem:[%s5] sm:$0xff]
  %v725 = vld [vmem:[%s5 + $0x8] sm:$0xff]
  %v726 = vld [vmem:[%s5 + $0x10] sm:$0xff]
  %v727 = vld [vmem:[%s5 + $0x18] sm:$0xff]
  %s728 = scalar_lea.vmem [#allocation3], 56
  %v729 = vld [vmem:[%s728] sm:$0xff]
  %730 = vmatpush.msra.mxu0 0.0
  %731 = vmatpush.msra.mxu0 0.0
  %732 = vmatpush.msra.mxu0 0.0
  %733 = vmatpush.msra.mxu0 0.0
  %734 = vmatpush.msra.mxu0 0.0
  %735 = vmatpush.msra.mxu0 0.0
  %736 = vmatpush.msra.mxu0 0.0
  %737 = vmatpush.msra.mxu0 0.0
  %738 = vmatpush.msra.mxu0 0.0
  %739 = vmatpush.msra.mxu0 0.0
  %740 = vmatpush.msra.mxu0 0.0
  %741 = vmatpush.msra.mxu0 0.0
  %742 = vmatpush.msra.mxu0 %v727
  %743 = vmatpush.msra.mxu0 %v726
  %744 = vmatpush.msra.mxu0 %v725
  %745 = vmatpush.msra.mxu0 %v724
  %746 = vmatmul.f32.gmra.mxu0 %v209
  %v747 = vpop.f32.mrf.mxu0
  %v748 = vadd.f32 0.0, %v747
  %749 = vdwg.mxu0
  %v750 = vadd.f32 %v729, %v748
  %v751 = vxor.u32 %v750, 2147483648
  %v752 = vmul.f32 %v751, 1.442695
  %v753 = vpow.pop %v752
  %v754 = vadd.f32 %v753, 1.0
  %v755 = vrcp.pop %v754
  %v756 = vmul.f32 %v754, %v755
  %v757 = vsub.f32 1.0, %v756
  %v758 = vmul.f32 %v755, %v757
  %v759 = vadd.f32 %v755, %v758
  %vm760 = vweird.f32 %v754
  %vm761 = vweird.f32 %v755
  %vm762 = vmor %vm760, %vm761
  %v763 = vsel %vm762, %v755, %v759
  %v764 = vand.u32 2147483647, %v754
  %vm765 = vcmp.eq.f32.partialorder %v764, 8.507059e+37
  %v766 = vand.u32 %v754, 2147483648
  %v767 = vor.u32 1.1754944e-38, %v766
  %v768 = vsel %vm765, %v767, %v763
  %v769 = vmul.f32 1.0, %v768
  %v770 = vtanh.pop %v750
  %v771 = vmul.f32 %v769, 0.0
  %773 = vrot.lane.b32.xlu0 %v770, 32
  %v774 = vpop.permute.xlu0 %773
  %v776 = vmul.f32 %v769, %v774
  %778 = vrot.lane.b32.xlu0 %v776, 32
  %v779 = vpop.permute.xlu0 %778
  %v781 = vadd.f32 %v771, %v779
  %v782 = vtanh.pop %v781
  %784 = vrot.lane.b32.xlu0 %v782, 32
  %v785 = vpop.permute.xlu0 %784
  %v787 = vmul.f32 %v769, %v785
  %s788 = scalar_lea.vmem [#allocation3], 48
  %v789 = vld [vmem:[%s788] sm:$0xff]
  %791 = vrot.lane.b32.xlu0 %v787, 64
  %v792 = vpop.permute.xlu0 %791
  %v793 = vsel %vm72, %v792, 0
  %795 = vmatpush.msra.mxu0 0.0
  %796 = vmatpush.msra.mxu0 0.0
  %797 = vmatpush.msra.mxu0 0.0
  %798 = vmatpush.msra.mxu0 0.0
  %799 = vmatpush.msra.mxu0 0.0
  %800 = vmatpush.msra.mxu0 0.0
  %801 = vmatpush.msra.mxu0 0.0
  %802 = vmatpush.msra.mxu0 0.0
  %803 = vmatpush.msra.mxu0 0.0
  %804 = vmatpush.msra.mxu0 0.0
  %805 = vmatpush.msra.mxu0 0.0
  %806 = vmatpush.msra.mxu0 0.0
  %807 = vmatpush.msra.mxu0 %v727
  %808 = vmatpush.msra.mxu0 %v726
  %809 = vmatpush.msra.mxu0 %v725
  %810 = vmatpush.msra.mxu0 %v724
  %811 = vmatmul.f32.gmra.mxu0 %v793
  %v812 = vpop.f32.mrf.mxu0
  %v813 = vadd.f32 0.0, %v812
  %814 = vdwg.mxu0
  %v815 = vadd.f32 %v789, %v813
  %v816 = vxor.u32 %v815, 2147483648
  %v817 = vmul.f32 %v816, 1.442695
  %v818 = vpow.pop %v817
  %v819 = vadd.f32 %v818, 1.0
  %v820 = vrcp.pop %v819
  %v821 = vmul.f32 %v819, %v820
  %v822 = vsub.f32 1.0, %v821
  %v823 = vmul.f32 %v820, %v822
  %v824 = vadd.f32 %v820, %v823
  %vm825 = vweird.f32 %v819
  %vm826 = vweird.f32 %v820
  %vm827 = vmor %vm825, %vm826
  %v828 = vsel %vm827, %v820, %v824
  %v829 = vand.u32 2147483647, %v819
  %vm830 = vcmp.eq.f32.partialorder %v829, 8.507059e+37
  %v831 = vand.u32 %v819, 2147483648
  %v832 = vor.u32 1.1754944e-38, %v831
  %v833 = vsel %vm830, %v832, %v828
  %v834 = vmul.f32 1.0, %v833
  %v835 = vtanh.pop %v815
  %v836 = vmul.f32 %v834, %v781
  %838 = vrot.lane.b32.xlu0 %v835, 32
  %v839 = vpop.permute.xlu0 %838
  %v841 = vmul.f32 %v834, %v839
  %843 = vrot.lane.b32.xlu0 %v841, 32
  %v844 = vpop.permute.xlu0 %843
  %v846 = vadd.f32 %v836, %v844
  %v847 = vtanh.pop %v846
  %849 = vrot.lane.b32.xlu0 %v847, 32
  %v850 = vpop.permute.xlu0 %849
  %v852 = vmul.f32 %v834, %v850
  %s853 = scalar_lea.vmem [#allocation3], 40
  %v854 = vld [vmem:[%s853] sm:$0xff]
  %856 = vrot.lane.b32.xlu0 %v852, 64
  %v857 = vpop.permute.xlu0 %856
  %v858 = vsel %vm72, %v857, 0
  %860 = vmatpush.msra.mxu0 0.0
  %861 = vmatpush.msra.mxu0 0.0
  %862 = vmatpush.msra.mxu0 0.0
  %863 = vmatpush.msra.mxu0 0.0
  %864 = vmatpush.msra.mxu0 0.0
  %865 = vmatpush.msra.mxu0 0.0
  %866 = vmatpush.msra.mxu0 0.0
  %867 = vmatpush.msra.mxu0 0.0
  %868 = vmatpush.msra.mxu0 0.0
  %869 = vmatpush.msra.mxu0 0.0
  %870 = vmatpush.msra.mxu0 0.0
  %871 = vmatpush.msra.mxu0 0.0
  %872 = vmatpush.msra.mxu0 %v727
  %873 = vmatpush.msra.mxu0 %v726
  %874 = vmatpush.msra.mxu0 %v725
  %875 = vmatpush.msra.mxu0 %v724
  %876 = vmatmul.f32.gmra.mxu0 %v858
  %v877 = vpop.f32.mrf.mxu0
  %v878 = vadd.f32 0.0, %v877
  %879 = vdwg.mxu0
  %v880 = vadd.f32 %v854, %v878
  %v881 = vxor.u32 %v880, 2147483648
  %v882 = vmul.f32 %v881, 1.442695
  %v883 = vpow.pop %v882
  %v884 = vadd.f32 %v883, 1.0
  %v885 = vrcp.pop %v884
  %v886 = vmul.f32 %v884, %v885
  %v887 = vsub.f32 1.0, %v886
  %v888 = vmul.f32 %v885, %v887
  %v889 = vadd.f32 %v885, %v888
  %vm890 = vweird.f32 %v884
  %vm891 = vweird.f32 %v885
  %vm892 = vmor %vm890, %vm891
  %v893 = vsel %vm892, %v885, %v889
  %v894 = vand.u32 2147483647, %v884
  %vm895 = vcmp.eq.f32.partialorder %v894, 8.507059e+37
  %v896 = vand.u32 %v884, 2147483648
  %v897 = vor.u32 1.1754944e-38, %v896
  %v898 = vsel %vm895, %v897, %v893
  %v899 = vmul.f32 1.0, %v898
  %v900 = vtanh.pop %v880
  %v901 = vmul.f32 %v899, %v846
  %903 = vrot.lane.b32.xlu0 %v900, 32
  %v904 = vpop.permute.xlu0 %903
  %v906 = vmul.f32 %v899, %v904
  %908 = vrot.lane.b32.xlu0 %v906, 32
  %v909 = vpop.permute.xlu0 %908
  %v911 = vadd.f32 %v901, %v909
  %v912 = vtanh.pop %v911
  %914 = vrot.lane.b32.xlu0 %v912, 32
  %v915 = vpop.permute.xlu0 %914
  %v917 = vmul.f32 %v899, %v915
  %s918 = scalar_lea.vmem [#allocation3], 32
  %v919 = vld [vmem:[%s918] sm:$0xff]
  %921 = vrot.lane.b32.xlu0 %v917, 64
  %v922 = vpop.permute.xlu0 %921
  %v923 = vsel %vm72, %v922, 0
  %925 = vmatpush.msra.mxu0 0.0
  %926 = vmatpush.msra.mxu0 0.0
  %927 = vmatpush.msra.mxu0 0.0
  %928 = vmatpush.msra.mxu0 0.0
  %929 = vmatpush.msra.mxu0 0.0
  %930 = vmatpush.msra.mxu0 0.0
  %931 = vmatpush.msra.mxu0 0.0
  %932 = vmatpush.msra.mxu0 0.0
  %933 = vmatpush.msra.mxu0 0.0
  %934 = vmatpush.msra.mxu0 0.0
  %935 = vmatpush.msra.mxu0 0.0
  %936 = vmatpush.msra.mxu0 0.0
  %937 = vmatpush.msra.mxu0 %v727
  %938 = vmatpush.msra.mxu0 %v726
  %939 = vmatpush.msra.mxu0 %v725
  %940 = vmatpush.msra.mxu0 %v724
  %941 = vmatmul.f32.gmra.mxu0 %v923
  %v942 = vpop.f32.mrf.mxu0
  %v943 = vadd.f32 0.0, %v942
  %944 = vdwg.mxu0
  %v945 = vadd.f32 %v919, %v943
  %v946 = vxor.u32 %v945, 2147483648
  %v947 = vmul.f32 %v946, 1.442695
  %v948 = vpow.pop %v947
  %v949 = vadd.f32 %v948, 1.0
  %v950 = vrcp.pop %v949
  %v951 = vmul.f32 %v949, %v950
  %v952 = vsub.f32 1.0, %v951
  %v953 = vmul.f32 %v950, %v952
  %v954 = vadd.f32 %v950, %v953
  %vm955 = vweird.f32 %v949
  %vm956 = vweird.f32 %v950
  %vm957 = vmor %vm955, %vm956
  %v958 = vsel %vm957, %v950, %v954
  %v959 = vand.u32 2147483647, %v949
  %vm960 = vcmp.eq.f32.partialorder %v959, 8.507059e+37
  %v961 = vand.u32 %v949, 2147483648
  %v962 = vor.u32 1.1754944e-38, %v961
  %v963 = vsel %vm960, %v962, %v958
  %v964 = vmul.f32 1.0, %v963
  %v965 = vtanh.pop %v945
  %v966 = vmul.f32 %v964, %v911
  %968 = vrot.lane.b32.xlu0 %v965, 32
  %v969 = vpop.permute.xlu0 %968
  %v971 = vmul.f32 %v964, %v969
  %973 = vrot.lane.b32.xlu0 %v971, 32
  %v974 = vpop.permute.xlu0 %973
  %v976 = vadd.f32 %v966, %v974
  %v977 = vtanh.pop %v976
  %979 = vrot.lane.b32.xlu0 %v977, 32
  %v980 = vpop.permute.xlu0 %979
  %v982 = vmul.f32 %v964, %v980
  %s983 = scalar_lea.vmem [#allocation3], 24
  %v984 = vld [vmem:[%s983] sm:$0xff]
  %986 = vrot.lane.b32.xlu0 %v982, 64
  %v987 = vpop.permute.xlu0 %986
  %v988 = vsel %vm72, %v987, 0
  %990 = vmatpush.msra.mxu0 0.0
  %991 = vmatpush.msra.mxu0 0.0
  %992 = vmatpush.msra.mxu0 0.0
  %993 = vmatpush.msra.mxu0 0.0
  %994 = vmatpush.msra.mxu0 0.0
  %995 = vmatpush.msra.mxu0 0.0
  %996 = vmatpush.msra.mxu0 0.0
  %997 = vmatpush.msra.mxu0 0.0
  %998 = vmatpush.msra.mxu0 0.0
  %999 = vmatpush.msra.mxu0 0.0
  %1000 = vmatpush.msra.mxu0 0.0
  %1001 = vmatpush.msra.mxu0 0.0
  %1002 = vmatpush.msra.mxu0 %v727
  %1003 = vmatpush.msra.mxu0 %v726
  %1004 = vmatpush.msra.mxu0 %v725
  %1005 = vmatpush.msra.mxu0 %v724
  %1006 = vmatmul.f32.gmra.mxu0 %v988
  %v1007 = vpop.f32.mrf.mxu0
  %v1008 = vadd.f32 0.0, %v1007
  %1009 = vdwg.mxu0
  %v1010 = vadd.f32 %v984, %v1008
  %v1011 = vxor.u32 %v1010, 2147483648
  %v1012 = vmul.f32 %v1011, 1.442695
  %v1013 = vpow.pop %v1012
  %v1014 = vadd.f32 %v1013, 1.0
  %v1015 = vrcp.pop %v1014
  %v1016 = vmul.f32 %v1014, %v1015
  %v1017 = vsub.f32 1.0, %v1016
  %v1018 = vmul.f32 %v1015, %v1017
  %v1019 = vadd.f32 %v1015, %v1018
  %vm1020 = vweird.f32 %v1014
  %vm1021 = vweird.f32 %v1015
  %vm1022 = vmor %vm1020, %vm1021
  %v1023 = vsel %vm1022, %v1015, %v1019
  %v1024 = vand.u32 2147483647, %v1014
  %vm1025 = vcmp.eq.f32.partialorder %v1024, 8.507059e+37
  %v1026 = vand.u32 %v1014, 2147483648
  %v1027 = vor.u32 1.1754944e-38, %v1026
  %v1028 = vsel %vm1025, %v1027, %v1023
  %v1029 = vmul.f32 1.0, %v1028
  %v1030 = vtanh.pop %v1010
  %v1031 = vmul.f32 %v1029, %v976
  %1033 = vrot.lane.b32.xlu0 %v1030, 32
  %v1034 = vpop.permute.xlu0 %1033
  %v1036 = vmul.f32 %v1029, %v1034
  %1038 = vrot.lane.b32.xlu0 %v1036, 32
  %v1039 = vpop.permute.xlu0 %1038
  %v1041 = vadd.f32 %v1031, %v1039
  %v1042 = vtanh.pop %v1041
  %1044 = vrot.lane.b32.xlu0 %v1042, 32
  %v1045 = vpop.permute.xlu0 %1044
  %v1047 = vmul.f32 %v1029, %v1045
  %s1048 = scalar_lea.vmem [#allocation3], 16
  %v1049 = vld [vmem:[%s1048] sm:$0xff]
  %1051 = vrot.lane.b32.xlu0 %v1047, 64
  %v1052 = vpop.permute.xlu0 %1051
  %v1053 = vsel %vm72, %v1052, 0
  %1055 = vmatpush.msra.mxu0 0.0
  %1056 = vmatpush.msra.mxu0 0.0
  %1057 = vmatpush.msra.mxu0 0.0
  %1058 = vmatpush.msra.mxu0 0.0
  %1059 = vmatpush.msra.mxu0 0.0
  %1060 = vmatpush.msra.mxu0 0.0
  %1061 = vmatpush.msra.mxu0 0.0
  %1062 = vmatpush.msra.mxu0 0.0
  %1063 = vmatpush.msra.mxu0 0.0
  %1064 = vmatpush.msra.mxu0 0.0
  %1065 = vmatpush.msra.mxu0 0.0
  %1066 = vmatpush.msra.mxu0 0.0
  %1067 = vmatpush.msra.mxu0 %v727
  %1068 = vmatpush.msra.mxu0 %v726
  %1069 = vmatpush.msra.mxu0 %v725
  %1070 = vmatpush.msra.mxu0 %v724
  %1071 = vmatmul.f32.gmra.mxu0 %v1053
  %v1072 = vpop.f32.mrf.mxu0
  %v1073 = vadd.f32 0.0, %v1072
  %1074 = vdwg.mxu0
  %v1075 = vadd.f32 %v1049, %v1073
  %v1076 = vxor.u32 %v1075, 2147483648
  %v1077 = vmul.f32 %v1076, 1.442695
  %v1078 = vpow.pop %v1077
  %v1079 = vadd.f32 %v1078, 1.0
  %v1080 = vrcp.pop %v1079
  %v1081 = vmul.f32 %v1079, %v1080
  %v1082 = vsub.f32 1.0, %v1081
  %v1083 = vmul.f32 %v1080, %v1082
  %v1084 = vadd.f32 %v1080, %v1083
  %vm1085 = vweird.f32 %v1079
  %vm1086 = vweird.f32 %v1080
  %vm1087 = vmor %vm1085, %vm1086
  %v1088 = vsel %vm1087, %v1080, %v1084
  %v1089 = vand.u32 2147483647, %v1079
  %vm1090 = vcmp.eq.f32.partialorder %v1089, 8.507059e+37
  %v1091 = vand.u32 %v1079, 2147483648
  %v1092 = vor.u32 1.1754944e-38, %v1091
  %v1093 = vsel %vm1090, %v1092, %v1088
  %v1094 = vmul.f32 1.0, %v1093
  %v1095 = vtanh.pop %v1075
  %v1096 = vmul.f32 %v1094, %v1041
  %1098 = vrot.lane.b32.xlu0 %v1095, 32
  %v1099 = vpop.permute.xlu0 %1098
  %v1101 = vmul.f32 %v1094, %v1099
  %1103 = vrot.lane.b32.xlu0 %v1101, 32
  %v1104 = vpop.permute.xlu0 %1103
  %v1106 = vadd.f32 %v1096, %v1104
  %v1107 = vtanh.pop %v1106
  %1109 = vrot.lane.b32.xlu0 %v1107, 32
  %v1110 = vpop.permute.xlu0 %1109
  %v1112 = vmul.f32 %v1094, %v1110
  %s1113 = scalar_lea.vmem [#allocation3], 8
  %v1114 = vld [vmem:[%s1113] sm:$0xff]
  %1116 = vrot.lane.b32.xlu0 %v1112, 64
  %v1117 = vpop.permute.xlu0 %1116
  %v1118 = vsel %vm72, %v1117, 0
  %1120 = vmatpush.msra.mxu0 0.0
  %1121 = vmatpush.msra.mxu0 0.0
  %1122 = vmatpush.msra.mxu0 0.0
  %1123 = vmatpush.msra.mxu0 0.0
  %1124 = vmatpush.msra.mxu0 0.0
  %1125 = vmatpush.msra.mxu0 0.0
  %1126 = vmatpush.msra.mxu0 0.0
  %1127 = vmatpush.msra.mxu0 0.0
  %1128 = vmatpush.msra.mxu0 0.0
  %1129 = vmatpush.msra.mxu0 0.0
  %1130 = vmatpush.msra.mxu0 0.0
  %1131 = vmatpush.msra.mxu0 0.0
  %1132 = vmatpush.msra.mxu0 %v727
  %1133 = vmatpush.msra.mxu0 %v726
  %1134 = vmatpush.msra.mxu0 %v725
  %1135 = vmatpush.msra.mxu0 %v724
  %1136 = vmatmul.f32.gmra.mxu0 %v1118
  %v1137 = vpop.f32.mrf.mxu0
  %v1138 = vadd.f32 0.0, %v1137
  %1139 = vdwg.mxu0
  %v1140 = vadd.f32 %v1114, %v1138
  %v1141 = vxor.u32 %v1140, 2147483648
  %v1142 = vmul.f32 %v1141, 1.442695
  %v1143 = vpow.pop %v1142
  %v1144 = vadd.f32 %v1143, 1.0
  %v1145 = vrcp.pop %v1144
  %v1146 = vmul.f32 %v1144, %v1145
  %v1147 = vsub.f32 1.0, %v1146
  %v1148 = vmul.f32 %v1145, %v1147
  %v1149 = vadd.f32 %v1145, %v1148
  %vm1150 = vweird.f32 %v1144
  %vm1151 = vweird.f32 %v1145
  %vm1152 = vmor %vm1150, %vm1151
  %v1153 = vsel %vm1152, %v1145, %v1149
  %v1154 = vand.u32 2147483647, %v1144
  %vm1155 = vcmp.eq.f32.partialorder %v1154, 8.507059e+37
  %v1156 = vand.u32 %v1144, 2147483648
  %v1157 = vor.u32 1.1754944e-38, %v1156
  %v1158 = vsel %vm1155, %v1157, %v1153
  %v1159 = vmul.f32 1.0, %v1158
  %v1160 = vtanh.pop %v1140
  %v1161 = vmul.f32 %v1159, %v1106
  %1163 = vrot.lane.b32.xlu0 %v1160, 32
  %v1164 = vpop.permute.xlu0 %1163
  %v1166 = vmul.f32 %v1159, %v1164
  %1168 = vrot.lane.b32.xlu0 %v1166, 32
  %v1169 = vpop.permute.xlu0 %1168
  %v1171 = vadd.f32 %v1161, %v1169
  %v1172 = vtanh.pop %v1171
  %1174 = vrot.lane.b32.xlu0 %v1172, 32
  %v1175 = vpop.permute.xlu0 %1174
  %v1177 = vmul.f32 %v1159, %v1175
  %v1178 = vld [vmem:[#allocation3] sm:$0xff]
  %1180 = vrot.lane.b32.xlu0 %v1177, 64
  %v1181 = vpop.permute.xlu0 %1180
  %v1182 = vsel %vm72, %v1181, 0
  %1184 = vmatpush.msra.mxu0 0.0
  %1185 = vmatpush.msra.mxu0 0.0
  %1186 = vmatpush.msra.mxu0 0.0
  %1187 = vmatpush.msra.mxu0 0.0
  %1188 = vmatpush.msra.mxu0 0.0
  %1189 = vmatpush.msra.mxu0 0.0
  %1190 = vmatpush.msra.mxu0 0.0
  %1191 = vmatpush.msra.mxu0 0.0
  %1192 = vmatpush.msra.mxu0 0.0
  %1193 = vmatpush.msra.mxu0 0.0
  %1194 = vmatpush.msra.mxu0 0.0
  %1195 = vmatpush.msra.mxu0 0.0
  %1196 = vmatpush.msra.mxu0 %v727
  %1197 = vmatpush.msra.mxu0 %v726
  %1198 = vmatpush.msra.mxu0 %v725
  %1199 = vmatpush.msra.mxu0 %v724
  %1200 = vmatmul.f32.gmra.mxu0 %v1182
  %v1201 = vpop.f32.mrf.mxu0
  %v1202 = vadd.f32 0.0, %v1201
  %1203 = vdwg.mxu0
  %v1204 = vadd.f32 %v1178, %v1202
  %v1205 = vxor.u32 %v1204, 2147483648
  %v1206 = vmul.f32 %v1205, 1.442695
  %v1207 = vpow.pop %v1206
  %v1208 = vadd.f32 %v1207, 1.0
  %v1209 = vrcp.pop %v1208
  %v1210 = vmul.f32 %v1208, %v1209
  %v1211 = vsub.f32 1.0, %v1210
  %v1212 = vmul.f32 %v1209, %v1211
  %v1213 = vadd.f32 %v1209, %v1212
  %vm1214 = vweird.f32 %v1208
  %vm1215 = vweird.f32 %v1209
  %vm1216 = vmor %vm1214, %vm1215
  %v1217 = vsel %vm1216, %v1209, %v1213
  %v1218 = vand.u32 2147483647, %v1208
  %vm1219 = vcmp.eq.f32.partialorder %v1218, 8.507059e+37
  %v1220 = vand.u32 %v1208, 2147483648
  %v1221 = vor.u32 1.1754944e-38, %v1220
  %v1222 = vsel %vm1219, %v1221, %v1217
  %v1223 = vmul.f32 1.0, %v1222
  %v1224 = vtanh.pop %v1204
  %v1225 = vmul.f32 %v1223, %v1171
  %1227 = vrot.lane.b32.xlu0 %v1224, 32
  %v1228 = vpop.permute.xlu0 %1227
  %v1230 = vmul.f32 %v1223, %v1228
  %1232 = vrot.lane.b32.xlu0 %v1230, 32
  %v1233 = vpop.permute.xlu0 %1232
  %v1235 = vadd.f32 %v1225, %v1233
  %v1236 = vtanh.pop %v1235
  %1238 = vrot.lane.b32.xlu0 %v1236, 32
  %v1239 = vpop.permute.xlu0 %1238
  %v1241 = vmul.f32 %v1223, %v1239
  %1243 = vrot.lane.b32.xlu0 %v723, 64
  %v1244 = vpop.permute.xlu0 %1243
  %1254 = vrot.lane.b32.xlu0 %v1241, 96
  %v1255 = vpop.permute.xlu0 %1254
  %1256 = vrot.lane.b32.xlu0 %v1177, 96
  %v1257 = vpop.permute.xlu0 %1256
  %1258 = vrot.lane.b32.xlu0 %v1112, 96
  %v1259 = vpop.permute.xlu0 %1258
  %1260 = vrot.lane.b32.xlu0 %v1047, 96
  %v1261 = vpop.permute.xlu0 %1260
  %1262 = vrot.lane.b32.xlu0 %v982, 96
  %v1263 = vpop.permute.xlu0 %1262
  %1264 = vrot.lane.b32.xlu0 %v917, 96
  %v1265 = vpop.permute.xlu0 %1264
  %1266 = vrot.lane.b32.xlu0 %v852, 96
  %v1267 = vpop.permute.xlu0 %1266
  %1268 = vrot.lane.b32.xlu0 %v787, 96
  %v1269 = vpop.permute.xlu0 %1268
  %v1278 = vsel %vm72, %v273, %v1255
  %v1279 = vsel %vm72, %v338, %v1257
  %v1280 = vsel %vm72, %v403, %v1259
  %v1281 = vsel %vm72, %v468, %v1261
  %v1282 = vsel %vm72, %v533, %v1263
  %v1283 = vsel %vm72, %v598, %v1265
  %v1284 = vsel %vm72, %v663, %v1267
  %v1285 = vsel %vm72, %v1244, %v1269
  %v1286 = vld [vmem:[%s7] sm:$0xff]
  %v1287 = vld [vmem:[%s7 + $0x8] sm:$0xff]
  %v1288 = vld [vmem:[%s7 + $0x10] sm:$0xff]
  %v1289 = vld [vmem:[%s7 + $0x18] sm:$0xff]
  %v1290 = vld [vmem:[%s7 + $0x20] sm:$0xff]
  %v1291 = vld [vmem:[%s7 + $0x28] sm:$0xff]
  %v1292 = vld [vmem:[%s7 + $0x30] sm:$0xff]
  %v1293 = vld [vmem:[%s7 + $0x38] sm:$0xff]
  %v1294 = vld [vmem:[%s9] sm:$0x1]
  %v1296 = vperm.slane %v1294, 0
  %vm1298 = vcmask 523264
  %v1300 = vsel %vm1298, %v1278, 0
  %v1303 = vsel %vm1298, %v1279, 0
  %v1306 = vsel %vm1298, %v1280, 0
  %v1309 = vsel %vm1298, %v1281, 0
  %v1312 = vsel %vm1298, %v1282, 0
  %v1315 = vsel %vm1298, %v1283, 0
  %v1318 = vsel %vm1298, %v1284, 0
  %v1321 = vsel %vm1298, %v1285, 0
  %1323 = vmatpush.msra.mxu0 0.0
  %1324 = vmatpush.msra.mxu0 0.0
  %1325 = vmatpush.msra.mxu0 0.0
  %1326 = vmatpush.msra.mxu0 0.0
  %1327 = vmatpush.msra.mxu0 0.0
  %1328 = vmatpush.msra.mxu0 0.0
  %1329 = vmatpush.msra.mxu0 0.0
  %1330 = vmatpush.msra.mxu0 0.0
  %1331 = vmatpush.msra.mxu0 %v1293
  %1332 = vmatpush.msra.mxu0 %v1292
  %1333 = vmatpush.msra.mxu0 %v1291
  %1334 = vmatpush.msra.mxu0 %v1290
  %1335 = vmatpush.msra.mxu0 %v1289
  %1336 = vmatpush.msra.mxu0 %v1288
  %1337 = vmatpush.msra.mxu0 %v1287
  %1338 = vmatpush.msra.mxu0 %v1286
  %1339 = vmatmul.f32.gmra.mxu0 %v1300
  %v1340 = vpop.f32.mrf.mxu0
  %v1341 = vadd.f32 %v1296, %v1340
  %1342 = vmatmul.f32.gmra.mxu0 %v1303
  %v1343 = vpop.f32.mrf.mxu0
  %v1344 = vadd.f32 %v1296, %v1343
  %1345 = vmatmul.f32.gmra.mxu0 %v1306
  %v1346 = vpop.f32.mrf.mxu0
  %v1347 = vadd.f32 %v1296, %v1346
  %1348 = vmatmul.f32.gmra.mxu0 %v1309
  %v1349 = vpop.f32.mrf.mxu0
  %v1350 = vadd.f32 %v1296, %v1349
  %1351 = vmatmul.f32.gmra.mxu0 %v1312
  %v1352 = vpop.f32.mrf.mxu0
  %v1353 = vadd.f32 %v1296, %v1352
  %1354 = vmatmul.f32.gmra.mxu0 %v1315
  %v1355 = vpop.f32.mrf.mxu0
  %v1356 = vadd.f32 %v1296, %v1355
  %1357 = vmatmul.f32.gmra.mxu0 %v1318
  %v1358 = vpop.f32.mrf.mxu0
  %v1359 = vadd.f32 %v1296, %v1358
  %1360 = vmatmul.f32.gmra.mxu0 %v1321
  %v1361 = vpop.f32.mrf.mxu0
  %v1362 = vadd.f32 %v1296, %v1361
  %1363 = vdwg.mxu0
  %1364 = vst [vmem:[#allocation2] sm:$0xff] %v1341
  %1365 = vst [vmem:[#allocation2 + $0x8] sm:$0xff] %v1344
  %1366 = vst [vmem:[#allocation2 + $0x10] sm:$0xff] %v1347
  %1367 = vst [vmem:[#allocation2 + $0x18] sm:$0xff] %v1350
  %1368 = vst [vmem:[#allocation2 + $0x20] sm:$0xff] %v1353
  %1369 = vst [vmem:[#allocation2 + $0x28] sm:$0xff] %v1356
  %1370 = vst [vmem:[#allocation2 + $0x30] sm:$0xff] %v1359
  %1371 = vst [vmem:[#allocation2 + $0x38] sm:$0xff] %v1362
  %v1372 = vld [vmem:[%s10] sm:$0xff]
  %v1373 = vld [vmem:[%s10 + $0x8] sm:$0xff]
  %v1374 = vld [vmem:[%s10 + $0x10] sm:$0xff]
  %v1375 = vld [vmem:[%s10 + $0x18] sm:$0xff]
  %v1376 = vld [vmem:[%s10 + $0x20] sm:$0xff]
  %v1377 = vld [vmem:[%s10 + $0x28] sm:$0xff]
  %v1378 = vld [vmem:[%s10 + $0x30] sm:$0xff]
  %v1379 = vld [vmem:[%s10 + $0x38] sm:$0xff]
  %v1380 = vld [vmem:[%s12] sm:$0x1]
  %v1382 = vperm.slane %v1380, 0
  %1384 = vmatpush.msra.mxu0 0.0
  %1385 = vmatpush.msra.mxu0 0.0
  %1386 = vmatpush.msra.mxu0 0.0
  %1387 = vmatpush.msra.mxu0 0.0
  %1388 = vmatpush.msra.mxu0 0.0
  %1389 = vmatpush.msra.mxu0 0.0
  %1390 = vmatpush.msra.mxu0 0.0
  %1391 = vmatpush.msra.mxu0 0.0
  %1392 = vmatpush.msra.mxu0 %v1379
  %1393 = vmatpush.msra.mxu0 %v1378
  %1394 = vmatpush.msra.mxu0 %v1377
  %1395 = vmatpush.msra.mxu0 %v1376
  %1396 = vmatpush.msra.mxu0 %v1375
  %1397 = vmatpush.msra.mxu0 %v1374
  %1398 = vmatpush.msra.mxu0 %v1373
  %1399 = vmatpush.msra.mxu0 %v1372
  %1400 = vmatmul.f32.gmra.mxu0 %v1300
  %v1401 = vpop.f32.mrf.mxu0
  %v1402 = vadd.f32 %v1382, %v1401
  %1403 = vmatmul.f32.gmra.mxu0 %v1303
  %v1404 = vpop.f32.mrf.mxu0
  %v1405 = vadd.f32 %v1382, %v1404
  %1406 = vmatmul.f32.gmra.mxu0 %v1306
  %v1407 = vpop.f32.mrf.mxu0
  %v1408 = vadd.f32 %v1382, %v1407
  %1409 = vmatmul.f32.gmra.mxu0 %v1309
  %v1410 = vpop.f32.mrf.mxu0
  %v1411 = vadd.f32 %v1382, %v1410
  %1412 = vmatmul.f32.gmra.mxu0 %v1312
  %v1413 = vpop.f32.mrf.mxu0
  %v1414 = vadd.f32 %v1382, %v1413
  %1415 = vmatmul.f32.gmra.mxu0 %v1315
  %v1416 = vpop.f32.mrf.mxu0
  %v1417 = vadd.f32 %v1382, %v1416
  %1418 = vmatmul.f32.gmra.mxu0 %v1318
  %v1419 = vpop.f32.mrf.mxu0
  %v1420 = vadd.f32 %v1382, %v1419
  %1421 = vmatmul.f32.gmra.mxu0 %v1321
  %v1422 = vpop.f32.mrf.mxu0
  %v1423 = vadd.f32 %v1382, %v1422
  %1424 = vdwg.mxu0
  %1425 = vst [vmem:[#allocation3] sm:$0xff] %v1402
  %1426 = vst [vmem:[#allocation3 + $0x8] sm:$0xff] %v1405
  %1427 = vst [vmem:[#allocation3 + $0x10] sm:$0xff] %v1408
  %1428 = vst [vmem:[#allocation3 + $0x18] sm:$0xff] %v1411
  %1429 = vst [vmem:[#allocation3 + $0x20] sm:$0xff] %v1414
  %1430 = vst [vmem:[#allocation3 + $0x28] sm:$0xff] %v1417
  %1431 = vst [vmem:[#allocation3 + $0x30] sm:$0xff] %v1420
  %1432 = vst [vmem:[#allocation3 + $0x38] sm:$0xff] %v1423
  %v1433 = vld [vmem:[%s8] sm:$0xff]
  %v1434 = vld [vmem:[%s8 + $0x8] sm:$0xff]
  %v1435 = vld [vmem:[%s8 + $0x10] sm:$0xff]
  %v1436 = vld [vmem:[%s8 + $0x18] sm:$0xff]
  %v1437 = vld [vmem:[#allocation2] sm:$0xff]
  %1438 = vmatpush.msra.mxu0 0.0
  %1439 = vmatpush.msra.mxu0 0.0
  %1440 = vmatpush.msra.mxu0 0.0
  %1441 = vmatpush.msra.mxu0 0.0
  %1442 = vmatpush.msra.mxu0 0.0
  %1443 = vmatpush.msra.mxu0 0.0
  %1444 = vmatpush.msra.mxu0 0.0
  %1445 = vmatpush.msra.mxu0 0.0
  %1446 = vmatpush.msra.mxu0 0.0
  %1447 = vmatpush.msra.mxu0 0.0
  %1448 = vmatpush.msra.mxu0 0.0
  %1449 = vmatpush.msra.mxu0 0.0
  %1450 = vmatpush.msra.mxu0 %v1436
  %1451 = vmatpush.msra.mxu0 %v1435
  %1452 = vmatpush.msra.mxu0 %v1434
  %1453 = vmatpush.msra.mxu0 %v1433
  %1454 = vmatmul.f32.gmra.mxu0 %v209
  %v1455 = vpop.f32.mrf.mxu0
  %v1456 = vadd.f32 0.0, %v1455
  %1457 = vdwg.mxu0
  %v1458 = vadd.f32 %v1437, %v1456
  %v1459 = vxor.u32 %v1458, 2147483648
  %v1460 = vmul.f32 %v1459, 1.442695
  %v1461 = vpow.pop %v1460
  %v1462 = vadd.f32 %v1461, 1.0
  %v1463 = vrcp.pop %v1462
  %v1464 = vmul.f32 %v1462, %v1463
  %v1465 = vsub.f32 1.0, %v1464
  %v1466 = vmul.f32 %v1463, %v1465
  %v1467 = vadd.f32 %v1463, %v1466
  %vm1468 = vweird.f32 %v1462
  %vm1469 = vweird.f32 %v1463
  %vm1470 = vmor %vm1468, %vm1469
  %v1471 = vsel %vm1470, %v1463, %v1467
  %v1472 = vand.u32 2147483647, %v1462
  %vm1473 = vcmp.eq.f32.partialorder %v1472, 8.507059e+37
  %v1474 = vand.u32 %v1462, 2147483648
  %v1475 = vor.u32 1.1754944e-38, %v1474
  %v1476 = vsel %vm1473, %v1475, %v1471
  %v1477 = vmul.f32 1.0, %v1476
  %v1478 = vtanh.pop %v1458
  %v1479 = vmul.f32 %v1477, 0.0
  %1481 = vrot.lane.b32.xlu0 %v1478, 32
  %v1482 = vpop.permute.xlu0 %1481
  %v1484 = vmul.f32 %v1477, %v1482
  %1486 = vrot.lane.b32.xlu0 %v1484, 32
  %v1487 = vpop.permute.xlu0 %1486
  %v1489 = vadd.f32 %v1479, %v1487
  %v1490 = vtanh.pop %v1489
  %1492 = vrot.lane.b32.xlu0 %v1490, 32
  %v1493 = vpop.permute.xlu0 %1492
  %v1495 = vmul.f32 %v1477, %v1493
  %v1496 = vld [vmem:[%s269] sm:$0xff]
  %1498 = vrot.lane.b32.xlu0 %v1495, 64
  %v1499 = vpop.permute.xlu0 %1498
  %v1500 = vsel %vm72, %v1499, 0
  %1502 = vmatpush.msra.mxu0 0.0
  %1503 = vmatpush.msra.mxu0 0.0
  %1504 = vmatpush.msra.mxu0 0.0
  %1505 = vmatpush.msra.mxu0 0.0
  %1506 = vmatpush.msra.mxu0 0.0
  %1507 = vmatpush.msra.mxu0 0.0
  %1508 = vmatpush.msra.mxu0 0.0
  %1509 = vmatpush.msra.mxu0 0.0
  %1510 = vmatpush.msra.mxu0 0.0
  %1511 = vmatpush.msra.mxu0 0.0
  %1512 = vmatpush.msra.mxu0 0.0
  %1513 = vmatpush.msra.mxu0 0.0
  %1514 = vmatpush.msra.mxu0 %v1436
  %1515 = vmatpush.msra.mxu0 %v1435
  %1516 = vmatpush.msra.mxu0 %v1434
  %1517 = vmatpush.msra.mxu0 %v1433
  %1518 = vmatmul.f32.gmra.mxu0 %v1500
  %v1519 = vpop.f32.mrf.mxu0
  %v1520 = vadd.f32 0.0, %v1519
  %1521 = vdwg.mxu0
  %v1522 = vadd.f32 %v1496, %v1520
  %v1523 = vxor.u32 %v1522, 2147483648
  %v1524 = vmul.f32 %v1523, 1.442695
  %v1525 = vpow.pop %v1524
  %v1526 = vadd.f32 %v1525, 1.0
  %v1527 = vrcp.pop %v1526
  %v1528 = vmul.f32 %v1526, %v1527
  %v1529 = vsub.f32 1.0, %v1528
  %v1530 = vmul.f32 %v1527, %v1529
  %v1531 = vadd.f32 %v1527, %v1530
  %vm1532 = vweird.f32 %v1526
  %vm1533 = vweird.f32 %v1527
  %vm1534 = vmor %vm1532, %vm1533
  %v1535 = vsel %vm1534, %v1527, %v1531
  %v1536 = vand.u32 2147483647, %v1526
  %vm1537 = vcmp.eq.f32.partialorder %v1536, 8.507059e+37
  %v1538 = vand.u32 %v1526, 2147483648
  %v1539 = vor.u32 1.1754944e-38, %v1538
  %v1540 = vsel %vm1537, %v1539, %v1535
  %v1541 = vmul.f32 1.0, %v1540
  %v1542 = vtanh.pop %v1522
  %v1543 = vmul.f32 %v1541, %v1489
  %1545 = vrot.lane.b32.xlu0 %v1542, 32
  %v1546 = vpop.permute.xlu0 %1545
  %v1548 = vmul.f32 %v1541, %v1546
  %1550 = vrot.lane.b32.xlu0 %v1548, 32
  %v1551 = vpop.permute.xlu0 %1550
  %v1553 = vadd.f32 %v1543, %v1551
  %v1554 = vtanh.pop %v1553
  %1556 = vrot.lane.b32.xlu0 %v1554, 32
  %v1557 = vpop.permute.xlu0 %1556
  %v1559 = vmul.f32 %v1541, %v1557
  %v1560 = vld [vmem:[%s334] sm:$0xff]
  %1562 = vrot.lane.b32.xlu0 %v1559, 64
  %v1563 = vpop.permute.xlu0 %1562
  %v1564 = vsel %vm72, %v1563, 0
  %1566 = vmatpush.msra.mxu0 0.0
  %1567 = vmatpush.msra.mxu0 0.0
  %1568 = vmatpush.msra.mxu0 0.0
  %1569 = vmatpush.msra.mxu0 0.0
  %1570 = vmatpush.msra.mxu0 0.0
  %1571 = vmatpush.msra.mxu0 0.0
  %1572 = vmatpush.msra.mxu0 0.0
  %1573 = vmatpush.msra.mxu0 0.0
  %1574 = vmatpush.msra.mxu0 0.0
  %1575 = vmatpush.msra.mxu0 0.0
  %1576 = vmatpush.msra.mxu0 0.0
  %1577 = vmatpush.msra.mxu0 0.0
  %1578 = vmatpush.msra.mxu0 %v1436
  %1579 = vmatpush.msra.mxu0 %v1435
  %1580 = vmatpush.msra.mxu0 %v1434
  %1581 = vmatpush.msra.mxu0 %v1433
  %1582 = vmatmul.f32.gmra.mxu0 %v1564
  %v1583 = vpop.f32.mrf.mxu0
  %v1584 = vadd.f32 0.0, %v1583
  %1585 = vdwg.mxu0
  %v1586 = vadd.f32 %v1560, %v1584
  %v1587 = vxor.u32 %v1586, 2147483648
  %v1588 = vmul.f32 %v1587, 1.442695
  %v1589 = vpow.pop %v1588
  %v1590 = vadd.f32 %v1589, 1.0
  %v1591 = vrcp.pop %v1590
  %v1592 = vmul.f32 %v1590, %v1591
  %v1593 = vsub.f32 1.0, %v1592
  %v1594 = vmul.f32 %v1591, %v1593
  %v1595 = vadd.f32 %v1591, %v1594
  %vm1596 = vweird.f32 %v1590
  %vm1597 = vweird.f32 %v1591
  %vm1598 = vmor %vm1596, %vm1597
  %v1599 = vsel %vm1598, %v1591, %v1595
  %v1600 = vand.u32 2147483647, %v1590
  %vm1601 = vcmp.eq.f32.partialorder %v1600, 8.507059e+37
  %v1602 = vand.u32 %v1590, 2147483648
  %v1603 = vor.u32 1.1754944e-38, %v1602
  %v1604 = vsel %vm1601, %v1603, %v1599
  %v1605 = vmul.f32 1.0, %v1604
  %v1606 = vtanh.pop %v1586
  %v1607 = vmul.f32 %v1605, %v1553
  %1609 = vrot.lane.b32.xlu0 %v1606, 32
  %v1610 = vpop.permute.xlu0 %1609
  %v1612 = vmul.f32 %v1605, %v1610
  %1614 = vrot.lane.b32.xlu0 %v1612, 32
  %v1615 = vpop.permute.xlu0 %1614
  %v1617 = vadd.f32 %v1607, %v1615
  %v1618 = vtanh.pop %v1617
  %1620 = vrot.lane.b32.xlu0 %v1618, 32
  %v1621 = vpop.permute.xlu0 %1620
  %v1623 = vmul.f32 %v1605, %v1621
  %v1624 = vld [vmem:[%s399] sm:$0xff]
  %1626 = vrot.lane.b32.xlu0 %v1623, 64
  %v1627 = vpop.permute.xlu0 %1626
  %v1628 = vsel %vm72, %v1627, 0
  %1630 = vmatpush.msra.mxu0 0.0
  %1631 = vmatpush.msra.mxu0 0.0
  %1632 = vmatpush.msra.mxu0 0.0
  %1633 = vmatpush.msra.mxu0 0.0
  %1634 = vmatpush.msra.mxu0 0.0
  %1635 = vmatpush.msra.mxu0 0.0
  %1636 = vmatpush.msra.mxu0 0.0
  %1637 = vmatpush.msra.mxu0 0.0
  %1638 = vmatpush.msra.mxu0 0.0
  %1639 = vmatpush.msra.mxu0 0.0
  %1640 = vmatpush.msra.mxu0 0.0
  %1641 = vmatpush.msra.mxu0 0.0
  %1642 = vmatpush.msra.mxu0 %v1436
  %1643 = vmatpush.msra.mxu0 %v1435
  %1644 = vmatpush.msra.mxu0 %v1434
  %1645 = vmatpush.msra.mxu0 %v1433
  %1646 = vmatmul.f32.gmra.mxu0 %v1628
  %v1647 = vpop.f32.mrf.mxu0
  %v1648 = vadd.f32 0.0, %v1647
  %1649 = vdwg.mxu0
  %v1650 = vadd.f32 %v1624, %v1648
  %v1651 = vxor.u32 %v1650, 2147483648
  %v1652 = vmul.f32 %v1651, 1.442695
  %v1653 = vpow.pop %v1652
  %v1654 = vadd.f32 %v1653, 1.0
  %v1655 = vrcp.pop %v1654
  %v1656 = vmul.f32 %v1654, %v1655
  %v1657 = vsub.f32 1.0, %v1656
  %v1658 = vmul.f32 %v1655, %v1657
  %v1659 = vadd.f32 %v1655, %v1658
  %vm1660 = vweird.f32 %v1654
  %vm1661 = vweird.f32 %v1655
  %vm1662 = vmor %vm1660, %vm1661
  %v1663 = vsel %vm1662, %v1655, %v1659
  %v1664 = vand.u32 2147483647, %v1654
  %vm1665 = vcmp.eq.f32.partialorder %v1664, 8.507059e+37
  %v1666 = vand.u32 %v1654, 2147483648
  %v1667 = vor.u32 1.1754944e-38, %v1666
  %v1668 = vsel %vm1665, %v1667, %v1663
  %v1669 = vmul.f32 1.0, %v1668
  %v1670 = vtanh.pop %v1650
  %v1671 = vmul.f32 %v1669, %v1617
  %1673 = vrot.lane.b32.xlu0 %v1670, 32
  %v1674 = vpop.permute.xlu0 %1673
  %v1676 = vmul.f32 %v1669, %v1674
  %1678 = vrot.lane.b32.xlu0 %v1676, 32
  %v1679 = vpop.permute.xlu0 %1678
  %v1681 = vadd.f32 %v1671, %v1679
  %v1682 = vtanh.pop %v1681
  %1684 = vrot.lane.b32.xlu0 %v1682, 32
  %v1685 = vpop.permute.xlu0 %1684
  %v1687 = vmul.f32 %v1669, %v1685
  %v1688 = vld [vmem:[%s464] sm:$0xff]
  %1690 = vrot.lane.b32.xlu0 %v1687, 64
  %v1691 = vpop.permute.xlu0 %1690
  %v1692 = vsel %vm72, %v1691, 0
  %1694 = vmatpush.msra.mxu0 0.0
  %1695 = vmatpush.msra.mxu0 0.0
  %1696 = vmatpush.msra.mxu0 0.0
  %1697 = vmatpush.msra.mxu0 0.0
  %1698 = vmatpush.msra.mxu0 0.0
  %1699 = vmatpush.msra.mxu0 0.0
  %1700 = vmatpush.msra.mxu0 0.0
  %1701 = vmatpush.msra.mxu0 0.0
  %1702 = vmatpush.msra.mxu0 0.0
  %1703 = vmatpush.msra.mxu0 0.0
  %1704 = vmatpush.msra.mxu0 0.0
  %1705 = vmatpush.msra.mxu0 0.0
  %1706 = vmatpush.msra.mxu0 %v1436
  %1707 = vmatpush.msra.mxu0 %v1435
  %1708 = vmatpush.msra.mxu0 %v1434
  %1709 = vmatpush.msra.mxu0 %v1433
  %1710 = vmatmul.f32.gmra.mxu0 %v1692
  %v1711 = vpop.f32.mrf.mxu0
  %v1712 = vadd.f32 0.0, %v1711
  %1713 = vdwg.mxu0
  %v1714 = vadd.f32 %v1688, %v1712
  %v1715 = vxor.u32 %v1714, 2147483648
  %v1716 = vmul.f32 %v1715, 1.442695
  %v1717 = vpow.pop %v1716
  %v1718 = vadd.f32 %v1717, 1.0
  %v1719 = vrcp.pop %v1718
  %v1720 = vmul.f32 %v1718, %v1719
  %v1721 = vsub.f32 1.0, %v1720
  %v1722 = vmul.f32 %v1719, %v1721
  %v1723 = vadd.f32 %v1719, %v1722
  %vm1724 = vweird.f32 %v1718
  %vm1725 = vweird.f32 %v1719
  %vm1726 = vmor %vm1724, %vm1725
  %v1727 = vsel %vm1726, %v1719, %v1723
  %v1728 = vand.u32 2147483647, %v1718
  %vm1729 = vcmp.eq.f32.partialorder %v1728, 8.507059e+37
  %v1730 = vand.u32 %v1718, 2147483648
  %v1731 = vor.u32 1.1754944e-38, %v1730
  %v1732 = vsel %vm1729, %v1731, %v1727
  %v1733 = vmul.f32 1.0, %v1732
  %v1734 = vtanh.pop %v1714
  %v1735 = vmul.f32 %v1733, %v1681
  %1737 = vrot.lane.b32.xlu0 %v1734, 32
  %v1738 = vpop.permute.xlu0 %1737
  %v1740 = vmul.f32 %v1733, %v1738
  %1742 = vrot.lane.b32.xlu0 %v1740, 32
  %v1743 = vpop.permute.xlu0 %1742
  %v1745 = vadd.f32 %v1735, %v1743
  %v1746 = vtanh.pop %v1745
  %1748 = vrot.lane.b32.xlu0 %v1746, 32
  %v1749 = vpop.permute.xlu0 %1748
  %v1751 = vmul.f32 %v1733, %v1749
  %v1752 = vld [vmem:[%s529] sm:$0xff]
  %1754 = vrot.lane.b32.xlu0 %v1751, 64
  %v1755 = vpop.permute.xlu0 %1754
  %v1756 = vsel %vm72, %v1755, 0
  %1758 = vmatpush.msra.mxu0 0.0
  %1759 = vmatpush.msra.mxu0 0.0
  %1760 = vmatpush.msra.mxu0 0.0
  %1761 = vmatpush.msra.mxu0 0.0
  %1762 = vmatpush.msra.mxu0 0.0
  %1763 = vmatpush.msra.mxu0 0.0
  %1764 = vmatpush.msra.mxu0 0.0
  %1765 = vmatpush.msra.mxu0 0.0
  %1766 = vmatpush.msra.mxu0 0.0
  %1767 = vmatpush.msra.mxu0 0.0
  %1768 = vmatpush.msra.mxu0 0.0
  %1769 = vmatpush.msra.mxu0 0.0
  %1770 = vmatpush.msra.mxu0 %v1436
  %1771 = vmatpush.msra.mxu0 %v1435
  %1772 = vmatpush.msra.mxu0 %v1434
  %1773 = vmatpush.msra.mxu0 %v1433
  %1774 = vmatmul.f32.gmra.mxu0 %v1756
  %v1775 = vpop.f32.mrf.mxu0
  %v1776 = vadd.f32 0.0, %v1775
  %1777 = vdwg.mxu0
  %v1778 = vadd.f32 %v1752, %v1776
  %v1779 = vxor.u32 %v1778, 2147483648
  %v1780 = vmul.f32 %v1779, 1.442695
  %v1781 = vpow.pop %v1780
  %v1782 = vadd.f32 %v1781, 1.0
  %v1783 = vrcp.pop %v1782
  %v1784 = vmul.f32 %v1782, %v1783
  %v1785 = vsub.f32 1.0, %v1784
  %v1786 = vmul.f32 %v1783, %v1785
  %v1787 = vadd.f32 %v1783, %v1786
  %vm1788 = vweird.f32 %v1782
  %vm1789 = vweird.f32 %v1783
  %vm1790 = vmor %vm1788, %vm1789
  %v1791 = vsel %vm1790, %v1783, %v1787
  %v1792 = vand.u32 2147483647, %v1782
  %vm1793 = vcmp.eq.f32.partialorder %v1792, 8.507059e+37
  %v1794 = vand.u32 %v1782, 2147483648
  %v1795 = vor.u32 1.1754944e-38, %v1794
  %v1796 = vsel %vm1793, %v1795, %v1791
  %v1797 = vmul.f32 1.0, %v1796
  %v1798 = vtanh.pop %v1778
  %v1799 = vmul.f32 %v1797, %v1745
  %1801 = vrot.lane.b32.xlu0 %v1798, 32
  %v1802 = vpop.permute.xlu0 %1801
  %v1804 = vmul.f32 %v1797, %v1802
  %1806 = vrot.lane.b32.xlu0 %v1804, 32
  %v1807 = vpop.permute.xlu0 %1806
  %v1809 = vadd.f32 %v1799, %v1807
  %v1810 = vtanh.pop %v1809
  %1812 = vrot.lane.b32.xlu0 %v1810, 32
  %v1813 = vpop.permute.xlu0 %1812
  %v1815 = vmul.f32 %v1797, %v1813
  %v1816 = vld [vmem:[%s594] sm:$0xff]
  %1818 = vrot.lane.b32.xlu0 %v1815, 64
  %v1819 = vpop.permute.xlu0 %1818
  %v1820 = vsel %vm72, %v1819, 0
  %1822 = vmatpush.msra.mxu0 0.0
  %1823 = vmatpush.msra.mxu0 0.0
  %1824 = vmatpush.msra.mxu0 0.0
  %1825 = vmatpush.msra.mxu0 0.0
  %1826 = vmatpush.msra.mxu0 0.0
  %1827 = vmatpush.msra.mxu0 0.0
  %1828 = vmatpush.msra.mxu0 0.0
  %1829 = vmatpush.msra.mxu0 0.0
  %1830 = vmatpush.msra.mxu0 0.0
  %1831 = vmatpush.msra.mxu0 0.0
  %1832 = vmatpush.msra.mxu0 0.0
  %1833 = vmatpush.msra.mxu0 0.0
  %1834 = vmatpush.msra.mxu0 %v1436
  %1835 = vmatpush.msra.mxu0 %v1435
  %1836 = vmatpush.msra.mxu0 %v1434
  %1837 = vmatpush.msra.mxu0 %v1433
  %1838 = vmatmul.f32.gmra.mxu0 %v1820
  %v1839 = vpop.f32.mrf.mxu0
  %v1840 = vadd.f32 0.0, %v1839
  %1841 = vdwg.mxu0
  %v1842 = vadd.f32 %v1816, %v1840
  %v1843 = vxor.u32 %v1842, 2147483648
  %v1844 = vmul.f32 %v1843, 1.442695
  %v1845 = vpow.pop %v1844
  %v1846 = vadd.f32 %v1845, 1.0
  %v1847 = vrcp.pop %v1846
  %v1848 = vmul.f32 %v1846, %v1847
  %v1849 = vsub.f32 1.0, %v1848
  %v1850 = vmul.f32 %v1847, %v1849
  %v1851 = vadd.f32 %v1847, %v1850
  %vm1852 = vweird.f32 %v1846
  %vm1853 = vweird.f32 %v1847
  %vm1854 = vmor %vm1852, %vm1853
  %v1855 = vsel %vm1854, %v1847, %v1851
  %v1856 = vand.u32 2147483647, %v1846
  %vm1857 = vcmp.eq.f32.partialorder %v1856, 8.507059e+37
  %v1858 = vand.u32 %v1846, 2147483648
  %v1859 = vor.u32 1.1754944e-38, %v1858
  %v1860 = vsel %vm1857, %v1859, %v1855
  %v1861 = vmul.f32 1.0, %v1860
  %v1862 = vtanh.pop %v1842
  %v1863 = vmul.f32 %v1861, %v1809
  %1865 = vrot.lane.b32.xlu0 %v1862, 32
  %v1866 = vpop.permute.xlu0 %1865
  %v1868 = vmul.f32 %v1861, %v1866
  %1870 = vrot.lane.b32.xlu0 %v1868, 32
  %v1871 = vpop.permute.xlu0 %1870
  %v1873 = vadd.f32 %v1863, %v1871
  %v1874 = vtanh.pop %v1873
  %1876 = vrot.lane.b32.xlu0 %v1874, 32
  %v1877 = vpop.permute.xlu0 %1876
  %v1879 = vmul.f32 %v1861, %v1877
  %v1880 = vld [vmem:[%s659] sm:$0xff]
  %1882 = vrot.lane.b32.xlu0 %v1879, 64
  %v1883 = vpop.permute.xlu0 %1882
  %v1884 = vsel %vm72, %v1883, 0
  %1886 = vmatpush.msra.mxu0 0.0
  %1887 = vmatpush.msra.mxu0 0.0
  %1888 = vmatpush.msra.mxu0 0.0
  %1889 = vmatpush.msra.mxu0 0.0
  %1890 = vmatpush.msra.mxu0 0.0
  %1891 = vmatpush.msra.mxu0 0.0
  %1892 = vmatpush.msra.mxu0 0.0
  %1893 = vmatpush.msra.mxu0 0.0
  %1894 = vmatpush.msra.mxu0 0.0
  %1895 = vmatpush.msra.mxu0 0.0
  %1896 = vmatpush.msra.mxu0 0.0
  %1897 = vmatpush.msra.mxu0 0.0
  %1898 = vmatpush.msra.mxu0 %v1436
  %1899 = vmatpush.msra.mxu0 %v1435
  %1900 = vmatpush.msra.mxu0 %v1434
  %1901 = vmatpush.msra.mxu0 %v1433
  %1902 = vmatmul.f32.gmra.mxu0 %v1884
  %v1903 = vpop.f32.mrf.mxu0
  %v1904 = vadd.f32 0.0, %v1903
  %1905 = vdwg.mxu0
  %v1906 = vadd.f32 %v1880, %v1904
  %v1907 = vxor.u32 %v1906, 2147483648
  %v1908 = vmul.f32 %v1907, 1.442695
  %v1909 = vpow.pop %v1908
  %v1910 = vadd.f32 %v1909, 1.0
  %v1911 = vrcp.pop %v1910
  %v1912 = vmul.f32 %v1910, %v1911
  %v1913 = vsub.f32 1.0, %v1912
  %v1914 = vmul.f32 %v1911, %v1913
  %v1915 = vadd.f32 %v1911, %v1914
  %vm1916 = vweird.f32 %v1910
  %vm1917 = vweird.f32 %v1911
  %vm1918 = vmor %vm1916, %vm1917
  %v1919 = vsel %vm1918, %v1911, %v1915
  %v1920 = vand.u32 2147483647, %v1910
  %vm1921 = vcmp.eq.f32.partialorder %v1920, 8.507059e+37
  %v1922 = vand.u32 %v1910, 2147483648
  %v1923 = vor.u32 1.1754944e-38, %v1922
  %v1924 = vsel %vm1921, %v1923, %v1919
  %v1925 = vmul.f32 1.0, %v1924
  %v1926 = vtanh.pop %v1906
  %v1927 = vmul.f32 %v1925, %v1873
  %1929 = vrot.lane.b32.xlu0 %v1926, 32
  %v1930 = vpop.permute.xlu0 %1929
  %v1932 = vmul.f32 %v1925, %v1930
  %1934 = vrot.lane.b32.xlu0 %v1932, 32
  %v1935 = vpop.permute.xlu0 %1934
  %v1937 = vadd.f32 %v1927, %v1935
  %v1938 = vtanh.pop %v1937
  %1940 = vrot.lane.b32.xlu0 %v1938, 32
  %v1941 = vpop.permute.xlu0 %1940
  %v1943 = vmul.f32 %v1925, %v1941
  %v1944 = vld [vmem:[%s11] sm:$0xff]
  %v1945 = vld [vmem:[%s11 + $0x8] sm:$0xff]
  %v1946 = vld [vmem:[%s11 + $0x10] sm:$0xff]
  %v1947 = vld [vmem:[%s11 + $0x18] sm:$0xff]
  %v1948 = vld [vmem:[%s728] sm:$0xff]
  %1949 = vmatpush.msra.mxu0 0.0
  %1950 = vmatpush.msra.mxu0 0.0
  %1951 = vmatpush.msra.mxu0 0.0
  %1952 = vmatpush.msra.mxu0 0.0
  %1953 = vmatpush.msra.mxu0 0.0
  %1954 = vmatpush.msra.mxu0 0.0
  %1955 = vmatpush.msra.mxu0 0.0
  %1956 = vmatpush.msra.mxu0 0.0
  %1957 = vmatpush.msra.mxu0 0.0
  %1958 = vmatpush.msra.mxu0 0.0
  %1959 = vmatpush.msra.mxu0 0.0
  %1960 = vmatpush.msra.mxu0 0.0
  %1961 = vmatpush.msra.mxu0 %v1947
  %1962 = vmatpush.msra.mxu0 %v1946
  %1963 = vmatpush.msra.mxu0 %v1945
  %1964 = vmatpush.msra.mxu0 %v1944
  %1965 = vmatmul.f32.gmra.mxu0 %v209
  %v1966 = vpop.f32.mrf.mxu0
  %v1967 = vadd.f32 0.0, %v1966
  %1968 = vdwg.mxu0
  %v1969 = vadd.f32 %v1948, %v1967
  %v1970 = vxor.u32 %v1969, 2147483648
  %v1971 = vmul.f32 %v1970, 1.442695
  %v1972 = vpow.pop %v1971
  %v1973 = vadd.f32 %v1972, 1.0
  %v1974 = vrcp.pop %v1973
  %v1975 = vmul.f32 %v1973, %v1974
  %v1976 = vsub.f32 1.0, %v1975
  %v1977 = vmul.f32 %v1974, %v1976
  %v1978 = vadd.f32 %v1974, %v1977
  %vm1979 = vweird.f32 %v1973
  %vm1980 = vweird.f32 %v1974
  %vm1981 = vmor %vm1979, %vm1980
  %v1982 = vsel %vm1981, %v1974, %v1978
  %v1983 = vand.u32 2147483647, %v1973
  %vm1984 = vcmp.eq.f32.partialorder %v1983, 8.507059e+37
  %v1985 = vand.u32 %v1973, 2147483648
  %v1986 = vor.u32 1.1754944e-38, %v1985
  %v1987 = vsel %vm1984, %v1986, %v1982
  %v1988 = vmul.f32 1.0, %v1987
  %v1989 = vtanh.pop %v1969
  %v1990 = vmul.f32 %v1988, 0.0
  %1992 = vrot.lane.b32.xlu0 %v1989, 32
  %v1993 = vpop.permute.xlu0 %1992
  %v1995 = vmul.f32 %v1988, %v1993
  %1997 = vrot.lane.b32.xlu0 %v1995, 32
  %v1998 = vpop.permute.xlu0 %1997
  %v2000 = vadd.f32 %v1990, %v1998
  %v2001 = vtanh.pop %v2000
  %2003 = vrot.lane.b32.xlu0 %v2001, 32
  %v2004 = vpop.permute.xlu0 %2003
  %v2006 = vmul.f32 %v1988, %v2004
  %v2007 = vld [vmem:[%s788] sm:$0xff]
  %2009 = vrot.lane.b32.xlu0 %v2006, 64
  %v2010 = vpop.permute.xlu0 %2009
  %v2011 = vsel %vm72, %v2010, 0
  %2013 = vmatpush.msra.mxu0 0.0
  %2014 = vmatpush.msra.mxu0 0.0
  %2015 = vmatpush.msra.mxu0 0.0
  %2016 = vmatpush.msra.mxu0 0.0
  %2017 = vmatpush.msra.mxu0 0.0
  %2018 = vmatpush.msra.mxu0 0.0
  %2019 = vmatpush.msra.mxu0 0.0
  %2020 = vmatpush.msra.mxu0 0.0
  %2021 = vmatpush.msra.mxu0 0.0
  %2022 = vmatpush.msra.mxu0 0.0
  %2023 = vmatpush.msra.mxu0 0.0
  %2024 = vmatpush.msra.mxu0 0.0
  %2025 = vmatpush.msra.mxu0 %v1947
  %2026 = vmatpush.msra.mxu0 %v1946
  %2027 = vmatpush.msra.mxu0 %v1945
  %2028 = vmatpush.msra.mxu0 %v1944
  %2029 = vmatmul.f32.gmra.mxu0 %v2011
  %v2030 = vpop.f32.mrf.mxu0
  %v2031 = vadd.f32 0.0, %v2030
  %2032 = vdwg.mxu0
  %v2033 = vadd.f32 %v2007, %v2031
  %v2034 = vxor.u32 %v2033, 2147483648
  %v2035 = vmul.f32 %v2034, 1.442695
  %v2036 = vpow.pop %v2035
  %v2037 = vadd.f32 %v2036, 1.0
  %v2038 = vrcp.pop %v2037
  %v2039 = vmul.f32 %v2037, %v2038
  %v2040 = vsub.f32 1.0, %v2039
  %v2041 = vmul.f32 %v2038, %v2040
  %v2042 = vadd.f32 %v2038, %v2041
  %vm2043 = vweird.f32 %v2037
  %vm2044 = vweird.f32 %v2038
  %vm2045 = vmor %vm2043, %vm2044
  %v2046 = vsel %vm2045, %v2038, %v2042
  %v2047 = vand.u32 2147483647, %v2037
  %vm2048 = vcmp.eq.f32.partialorder %v2047, 8.507059e+37
  %v2049 = vand.u32 %v2037, 2147483648
  %v2050 = vor.u32 1.1754944e-38, %v2049
  %v2051 = vsel %vm2048, %v2050, %v2046
  %v2052 = vmul.f32 1.0, %v2051
  %v2053 = vtanh.pop %v2033
  %v2054 = vmul.f32 %v2052, %v2000
  %2056 = vrot.lane.b32.xlu0 %v2053, 32
  %v2057 = vpop.permute.xlu0 %2056
  %v2059 = vmul.f32 %v2052, %v2057
  %2061 = vrot.lane.b32.xlu0 %v2059, 32
  %v2062 = vpop.permute.xlu0 %2061
  %v2064 = vadd.f32 %v2054, %v2062
  %v2065 = vtanh.pop %v2064
  %2067 = vrot.lane.b32.xlu0 %v2065, 32
  %v2068 = vpop.permute.xlu0 %2067
  %v2070 = vmul.f32 %v2052, %v2068
  %v2071 = vld [vmem:[%s853] sm:$0xff]
  %2073 = vrot.lane.b32.xlu0 %v2070, 64
  %v2074 = vpop.permute.xlu0 %2073
  %v2075 = vsel %vm72, %v2074, 0
  %2077 = vmatpush.msra.mxu0 0.0
  %2078 = vmatpush.msra.mxu0 0.0
  %2079 = vmatpush.msra.mxu0 0.0
  %2080 = vmatpush.msra.mxu0 0.0
  %2081 = vmatpush.msra.mxu0 0.0
  %2082 = vmatpush.msra.mxu0 0.0
  %2083 = vmatpush.msra.mxu0 0.0
  %2084 = vmatpush.msra.mxu0 0.0
  %2085 = vmatpush.msra.mxu0 0.0
  %2086 = vmatpush.msra.mxu0 0.0
  %2087 = vmatpush.msra.mxu0 0.0
  %2088 = vmatpush.msra.mxu0 0.0
  %2089 = vmatpush.msra.mxu0 %v1947
  %2090 = vmatpush.msra.mxu0 %v1946
  %2091 = vmatpush.msra.mxu0 %v1945
  %2092 = vmatpush.msra.mxu0 %v1944
  %2093 = vmatmul.f32.gmra.mxu0 %v2075
  %v2094 = vpop.f32.mrf.mxu0
  %v2095 = vadd.f32 0.0, %v2094
  %2096 = vdwg.mxu0
  %v2097 = vadd.f32 %v2071, %v2095
  %v2098 = vxor.u32 %v2097, 2147483648
  %v2099 = vmul.f32 %v2098, 1.442695
  %v2100 = vpow.pop %v2099
  %v2101 = vadd.f32 %v2100, 1.0
  %v2102 = vrcp.pop %v2101
  %v2103 = vmul.f32 %v2101, %v2102
  %v2104 = vsub.f32 1.0, %v2103
  %v2105 = vmul.f32 %v2102, %v2104
  %v2106 = vadd.f32 %v2102, %v2105
  %vm2107 = vweird.f32 %v2101
  %vm2108 = vweird.f32 %v2102
  %vm2109 = vmor %vm2107, %vm2108
  %v2110 = vsel %vm2109, %v2102, %v2106
  %v2111 = vand.u32 2147483647, %v2101
  %vm2112 = vcmp.eq.f32.partialorder %v2111, 8.507059e+37
  %v2113 = vand.u32 %v2101, 2147483648
  %v2114 = vor.u32 1.1754944e-38, %v2113
  %v2115 = vsel %vm2112, %v2114, %v2110
  %v2116 = vmul.f32 1.0, %v2115
  %v2117 = vtanh.pop %v2097
  %v2118 = vmul.f32 %v2116, %v2064
  %2120 = vrot.lane.b32.xlu0 %v2117, 32
  %v2121 = vpop.permute.xlu0 %2120
  %v2123 = vmul.f32 %v2116, %v2121
  %2125 = vrot.lane.b32.xlu0 %v2123, 32
  %v2126 = vpop.permute.xlu0 %2125
  %v2128 = vadd.f32 %v2118, %v2126
  %v2129 = vtanh.pop %v2128
  %2131 = vrot.lane.b32.xlu0 %v2129, 32
  %v2132 = vpop.permute.xlu0 %2131
  %v2134 = vmul.f32 %v2116, %v2132
  %v2135 = vld [vmem:[%s918] sm:$0xff]
  %2137 = vrot.lane.b32.xlu0 %v2134, 64
  %v2138 = vpop.permute.xlu0 %2137
  %v2139 = vsel %vm72, %v2138, 0
  %2141 = vmatpush.msra.mxu0 0.0
  %2142 = vmatpush.msra.mxu0 0.0
  %2143 = vmatpush.msra.mxu0 0.0
  %2144 = vmatpush.msra.mxu0 0.0
  %2145 = vmatpush.msra.mxu0 0.0
  %2146 = vmatpush.msra.mxu0 0.0
  %2147 = vmatpush.msra.mxu0 0.0
  %2148 = vmatpush.msra.mxu0 0.0
  %2149 = vmatpush.msra.mxu0 0.0
  %2150 = vmatpush.msra.mxu0 0.0
  %2151 = vmatpush.msra.mxu0 0.0
  %2152 = vmatpush.msra.mxu0 0.0
  %2153 = vmatpush.msra.mxu0 %v1947
  %2154 = vmatpush.msra.mxu0 %v1946
  %2155 = vmatpush.msra.mxu0 %v1945
  %2156 = vmatpush.msra.mxu0 %v1944
  %2157 = vmatmul.f32.gmra.mxu0 %v2139
  %v2158 = vpop.f32.mrf.mxu0
  %v2159 = vadd.f32 0.0, %v2158
  %2160 = vdwg.mxu0
  %v2161 = vadd.f32 %v2135, %v2159
  %v2162 = vxor.u32 %v2161, 2147483648
  %v2163 = vmul.f32 %v2162, 1.442695
  %v2164 = vpow.pop %v2163
  %v2165 = vadd.f32 %v2164, 1.0
  %v2166 = vrcp.pop %v2165
  %v2167 = vmul.f32 %v2165, %v2166
  %v2168 = vsub.f32 1.0, %v2167
  %v2169 = vmul.f32 %v2166, %v2168
  %v2170 = vadd.f32 %v2166, %v2169
  %vm2171 = vweird.f32 %v2165
  %vm2172 = vweird.f32 %v2166
  %vm2173 = vmor %vm2171, %vm2172
  %v2174 = vsel %vm2173, %v2166, %v2170
  %v2175 = vand.u32 2147483647, %v2165
  %vm2176 = vcmp.eq.f32.partialorder %v2175, 8.507059e+37
  %v2177 = vand.u32 %v2165, 2147483648
  %v2178 = vor.u32 1.1754944e-38, %v2177
  %v2179 = vsel %vm2176, %v2178, %v2174
  %v2180 = vmul.f32 1.0, %v2179
  %v2181 = vtanh.pop %v2161
  %v2182 = vmul.f32 %v2180, %v2128
  %2184 = vrot.lane.b32.xlu0 %v2181, 32
  %v2185 = vpop.permute.xlu0 %2184
  %v2187 = vmul.f32 %v2180, %v2185
  %2189 = vrot.lane.b32.xlu0 %v2187, 32
  %v2190 = vpop.permute.xlu0 %2189
  %v2192 = vadd.f32 %v2182, %v2190
  %v2193 = vtanh.pop %v2192
  %2195 = vrot.lane.b32.xlu0 %v2193, 32
  %v2196 = vpop.permute.xlu0 %2195
  %v2198 = vmul.f32 %v2180, %v2196
  %v2199 = vld [vmem:[%s983] sm:$0xff]
  %2201 = vrot.lane.b32.xlu0 %v2198, 64
  %v2202 = vpop.permute.xlu0 %2201
  %v2203 = vsel %vm72, %v2202, 0
  %2205 = vmatpush.msra.mxu0 0.0
  %2206 = vmatpush.msra.mxu0 0.0
  %2207 = vmatpush.msra.mxu0 0.0
  %2208 = vmatpush.msra.mxu0 0.0
  %2209 = vmatpush.msra.mxu0 0.0
  %2210 = vmatpush.msra.mxu0 0.0
  %2211 = vmatpush.msra.mxu0 0.0
  %2212 = vmatpush.msra.mxu0 0.0
  %2213 = vmatpush.msra.mxu0 0.0
  %2214 = vmatpush.msra.mxu0 0.0
  %2215 = vmatpush.msra.mxu0 0.0
  %2216 = vmatpush.msra.mxu0 0.0
  %2217 = vmatpush.msra.mxu0 %v1947
  %2218 = vmatpush.msra.mxu0 %v1946
  %2219 = vmatpush.msra.mxu0 %v1945
  %2220 = vmatpush.msra.mxu0 %v1944
  %2221 = vmatmul.f32.gmra.mxu0 %v2203
  %v2222 = vpop.f32.mrf.mxu0
  %v2223 = vadd.f32 0.0, %v2222
  %2224 = vdwg.mxu0
  %v2225 = vadd.f32 %v2199, %v2223
  %v2226 = vxor.u32 %v2225, 2147483648
  %v2227 = vmul.f32 %v2226, 1.442695
  %v2228 = vpow.pop %v2227
  %v2229 = vadd.f32 %v2228, 1.0
  %v2230 = vrcp.pop %v2229
  %v2231 = vmul.f32 %v2229, %v2230
  %v2232 = vsub.f32 1.0, %v2231
  %v2233 = vmul.f32 %v2230, %v2232
  %v2234 = vadd.f32 %v2230, %v2233
  %vm2235 = vweird.f32 %v2229
  %vm2236 = vweird.f32 %v2230
  %vm2237 = vmor %vm2235, %vm2236
  %v2238 = vsel %vm2237, %v2230, %v2234
  %v2239 = vand.u32 2147483647, %v2229
  %vm2240 = vcmp.eq.f32.partialorder %v2239, 8.507059e+37
  %v2241 = vand.u32 %v2229, 2147483648
  %v2242 = vor.u32 1.1754944e-38, %v2241
  %v2243 = vsel %vm2240, %v2242, %v2238
  %v2244 = vmul.f32 1.0, %v2243
  %v2245 = vtanh.pop %v2225
  %v2246 = vmul.f32 %v2244, %v2192
  %2248 = vrot.lane.b32.xlu0 %v2245, 32
  %v2249 = vpop.permute.xlu0 %2248
  %v2251 = vmul.f32 %v2244, %v2249
  %2253 = vrot.lane.b32.xlu0 %v2251, 32
  %v2254 = vpop.permute.xlu0 %2253
  %v2256 = vadd.f32 %v2246, %v2254
  %v2257 = vtanh.pop %v2256
  %2259 = vrot.lane.b32.xlu0 %v2257, 32
  %v2260 = vpop.permute.xlu0 %2259
  %v2262 = vmul.f32 %v2244, %v2260
  %v2263 = vld [vmem:[%s1048] sm:$0xff]
  %2265 = vrot.lane.b32.xlu0 %v2262, 64
  %v2266 = vpop.permute.xlu0 %2265
  %v2267 = vsel %vm72, %v2266, 0
  %2269 = vmatpush.msra.mxu0 0.0
  %2270 = vmatpush.msra.mxu0 0.0
  %2271 = vmatpush.msra.mxu0 0.0
  %2272 = vmatpush.msra.mxu0 0.0
  %2273 = vmatpush.msra.mxu0 0.0
  %2274 = vmatpush.msra.mxu0 0.0
  %2275 = vmatpush.msra.mxu0 0.0
  %2276 = vmatpush.msra.mxu0 0.0
  %2277 = vmatpush.msra.mxu0 0.0
  %2278 = vmatpush.msra.mxu0 0.0
  %2279 = vmatpush.msra.mxu0 0.0
  %2280 = vmatpush.msra.mxu0 0.0
  %2281 = vmatpush.msra.mxu0 %v1947
  %2282 = vmatpush.msra.mxu0 %v1946
  %2283 = vmatpush.msra.mxu0 %v1945
  %2284 = vmatpush.msra.mxu0 %v1944
  %2285 = vmatmul.f32.gmra.mxu0 %v2267
  %v2286 = vpop.f32.mrf.mxu0
  %v2287 = vadd.f32 0.0, %v2286
  %2288 = vdwg.mxu0
  %v2289 = vadd.f32 %v2263, %v2287
  %v2290 = vxor.u32 %v2289, 2147483648
  %v2291 = vmul.f32 %v2290, 1.442695
  %v2292 = vpow.pop %v2291
  %v2293 = vadd.f32 %v2292, 1.0
  %v2294 = vrcp.pop %v2293
  %v2295 = vmul.f32 %v2293, %v2294
  %v2296 = vsub.f32 1.0, %v2295
  %v2297 = vmul.f32 %v2294, %v2296
  %v2298 = vadd.f32 %v2294, %v2297
  %vm2299 = vweird.f32 %v2293
  %vm2300 = vweird.f32 %v2294
  %vm2301 = vmor %vm2299, %vm2300
  %v2302 = vsel %vm2301, %v2294, %v2298
  %v2303 = vand.u32 2147483647, %v2293
  %vm2304 = vcmp.eq.f32.partialorder %v2303, 8.507059e+37
  %v2305 = vand.u32 %v2293, 2147483648
  %v2306 = vor.u32 1.1754944e-38, %v2305
  %v2307 = vsel %vm2304, %v2306, %v2302
  %v2308 = vmul.f32 1.0, %v2307
  %v2309 = vtanh.pop %v2289
  %v2310 = vmul.f32 %v2308, %v2256
  %2312 = vrot.lane.b32.xlu0 %v2309, 32
  %v2313 = vpop.permute.xlu0 %2312
  %v2315 = vmul.f32 %v2308, %v2313
  %2317 = vrot.lane.b32.xlu0 %v2315, 32
  %v2318 = vpop.permute.xlu0 %2317
  %v2320 = vadd.f32 %v2310, %v2318
  %v2321 = vtanh.pop %v2320
  %2323 = vrot.lane.b32.xlu0 %v2321, 32
  %v2324 = vpop.permute.xlu0 %2323
  %v2326 = vmul.f32 %v2308, %v2324
  %v2327 = vld [vmem:[%s1113] sm:$0xff]
  %2329 = vrot.lane.b32.xlu0 %v2326, 64
  %v2330 = vpop.permute.xlu0 %2329
  %v2331 = vsel %vm72, %v2330, 0
  %2333 = vmatpush.msra.mxu0 0.0
  %2334 = vmatpush.msra.mxu0 0.0
  %2335 = vmatpush.msra.mxu0 0.0
  %2336 = vmatpush.msra.mxu0 0.0
  %2337 = vmatpush.msra.mxu0 0.0
  %2338 = vmatpush.msra.mxu0 0.0
  %2339 = vmatpush.msra.mxu0 0.0
  %2340 = vmatpush.msra.mxu0 0.0
  %2341 = vmatpush.msra.mxu0 0.0
  %2342 = vmatpush.msra.mxu0 0.0
  %2343 = vmatpush.msra.mxu0 0.0
  %2344 = vmatpush.msra.mxu0 0.0
  %2345 = vmatpush.msra.mxu0 %v1947
  %2346 = vmatpush.msra.mxu0 %v1946
  %2347 = vmatpush.msra.mxu0 %v1945
  %2348 = vmatpush.msra.mxu0 %v1944
  %2349 = vmatmul.f32.gmra.mxu0 %v2331
  %v2350 = vpop.f32.mrf.mxu0
  %v2351 = vadd.f32 0.0, %v2350
  %2352 = vdwg.mxu0
  %v2353 = vadd.f32 %v2327, %v2351
  %v2354 = vxor.u32 %v2353, 2147483648
  %v2355 = vmul.f32 %v2354, 1.442695
  %v2356 = vpow.pop %v2355
  %v2357 = vadd.f32 %v2356, 1.0
  %v2358 = vrcp.pop %v2357
  %v2359 = vmul.f32 %v2357, %v2358
  %v2360 = vsub.f32 1.0, %v2359
  %v2361 = vmul.f32 %v2358, %v2360
  %v2362 = vadd.f32 %v2358, %v2361
  %vm2363 = vweird.f32 %v2357
  %vm2364 = vweird.f32 %v2358
  %vm2365 = vmor %vm2363, %vm2364
  %v2366 = vsel %vm2365, %v2358, %v2362
  %v2367 = vand.u32 2147483647, %v2357
  %vm2368 = vcmp.eq.f32.partialorder %v2367, 8.507059e+37
  %v2369 = vand.u32 %v2357, 2147483648
  %v2370 = vor.u32 1.1754944e-38, %v2369
  %v2371 = vsel %vm2368, %v2370, %v2366
  %v2372 = vmul.f32 1.0, %v2371
  %v2373 = vtanh.pop %v2353
  %v2374 = vmul.f32 %v2372, %v2320
  %2376 = vrot.lane.b32.xlu0 %v2373, 32
  %v2377 = vpop.permute.xlu0 %2376
  %v2379 = vmul.f32 %v2372, %v2377
  %2381 = vrot.lane.b32.xlu0 %v2379, 32
  %v2382 = vpop.permute.xlu0 %2381
  %v2384 = vadd.f32 %v2374, %v2382
  %v2385 = vtanh.pop %v2384
  %2387 = vrot.lane.b32.xlu0 %v2385, 32
  %v2388 = vpop.permute.xlu0 %2387
  %v2390 = vmul.f32 %v2372, %v2388
  %v2391 = vld [vmem:[#allocation3] sm:$0xff]
  %2393 = vrot.lane.b32.xlu0 %v2390, 64
  %v2394 = vpop.permute.xlu0 %2393
  %v2395 = vsel %vm72, %v2394, 0
  %2397 = vmatpush.msra.mxu0 0.0
  %2398 = vmatpush.msra.mxu0 0.0
  %2399 = vmatpush.msra.mxu0 0.0
  %2400 = vmatpush.msra.mxu0 0.0
  %2401 = vmatpush.msra.mxu0 0.0
  %2402 = vmatpush.msra.mxu0 0.0
  %2403 = vmatpush.msra.mxu0 0.0
  %2404 = vmatpush.msra.mxu0 0.0
  %2405 = vmatpush.msra.mxu0 0.0
  %2406 = vmatpush.msra.mxu0 0.0
  %2407 = vmatpush.msra.mxu0 0.0
  %2408 = vmatpush.msra.mxu0 0.0
  %2409 = vmatpush.msra.mxu0 %v1947
  %2410 = vmatpush.msra.mxu0 %v1946
  %2411 = vmatpush.msra.mxu0 %v1945
  %2412 = vmatpush.msra.mxu0 %v1944
  %2413 = vmatmul.f32.gmra.mxu0 %v2395
  %v2414 = vpop.f32.mrf.mxu0
  %v2415 = vadd.f32 0.0, %v2414
  %2416 = vdwg.mxu0
  %v2417 = vadd.f32 %v2391, %v2415
  %v2418 = vxor.u32 %v2417, 2147483648
  %v2419 = vmul.f32 %v2418, 1.442695
  %v2420 = vpow.pop %v2419
  %v2421 = vadd.f32 %v2420, 1.0
  %v2422 = vrcp.pop %v2421
  %v2423 = vmul.f32 %v2421, %v2422
  %v2424 = vsub.f32 1.0, %v2423
  %v2425 = vmul.f32 %v2422, %v2424
  %v2426 = vadd.f32 %v2422, %v2425
  %vm2427 = vweird.f32 %v2421
  %vm2428 = vweird.f32 %v2422
  %vm2429 = vmor %vm2427, %vm2428
  %v2430 = vsel %vm2429, %v2422, %v2426
  %v2431 = vand.u32 2147483647, %v2421
  %vm2432 = vcmp.eq.f32.partialorder %v2431, 8.507059e+37
  %v2433 = vand.u32 %v2421, 2147483648
  %v2434 = vor.u32 1.1754944e-38, %v2433
  %v2435 = vsel %vm2432, %v2434, %v2430
  %v2436 = vmul.f32 1.0, %v2435
  %v2437 = vtanh.pop %v2417
  %v2438 = vmul.f32 %v2436, %v2384
  %2440 = vrot.lane.b32.xlu0 %v2437, 32
  %v2441 = vpop.permute.xlu0 %2440
  %v2443 = vmul.f32 %v2436, %v2441
  %2445 = vrot.lane.b32.xlu0 %v2443, 32
  %v2446 = vpop.permute.xlu0 %2445
  %v2448 = vadd.f32 %v2438, %v2446
  %v2449 = vtanh.pop %v2448
  %2451 = vrot.lane.b32.xlu0 %v2449, 32
  %v2452 = vpop.permute.xlu0 %2451
  %v2454 = vmul.f32 %v2436, %v2452
  %2457 = vrot.lane.b32.xlu0 %v2454, 96
  %v2458 = vpop.permute.xlu0 %2457
  %2460 = vrot.lane.b32.xlu0 %v2006, 32
  %v2461 = vpop.permute.xlu0 %2460
  %v2463 = vsel %vm72, %v1499, %v2458
  %v2464 = vsel %vm1298, %v2463, %v1943
  %vm2465 = vcmask 785408
  %v2466 = vsel %vm2465, %v2464, %v2461
  %v2467 = vld [vmem:[%s13] sm:$0xff]
  %v2468 = vld [vmem:[%s13 + $0x8] sm:$0xff]
  %v2469 = vld [vmem:[%s13 + $0x10] sm:$0xff]
  %v2470 = vld [vmem:[%s13 + $0x18] sm:$0xff]
  %v2471 = vld [vmem:[%s13 + $0x20] sm:$0xff]
  %v2472 = vld [vmem:[%s13 + $0x28] sm:$0xff]
  %v2473 = vld [vmem:[%s13 + $0x30] sm:$0xff]
  %v2474 = vld [vmem:[%s13 + $0x38] sm:$0xff]
  %v2475 = vld [vmem:[%s13 + $0x40] sm:$0xff]
  %v2476 = vld [vmem:[%s13 + $0x48] sm:$0xff]
  %v2477 = vld [vmem:[%s13 + $0x50] sm:$0xff]
  %v2478 = vld [vmem:[%s13 + $0x58] sm:$0xff]
  %v2479 = vld [vmem:[%s13 + $0x60] sm:$0xff]
  %v2480 = vld [vmem:[%s13 + $0x68] sm:$0xff]
  %v2481 = vld [vmem:[%s13 + $0x70] sm:$0xff]
  %v2482 = vld [vmem:[%s13 + $0x78] sm:$0xff]
  %v2483 = vld [vmem:[%s14] sm:$0x1]
  %v2485 = vperm.slane %v2483, 0
  %2487 = vmatpush.msra.mxu0 %v2482
  %2488 = vmatpush.msra.mxu0 %v2481
  %2489 = vmatpush.msra.mxu0 %v2480
  %2490 = vmatpush.msra.mxu0 %v2479
  %2491 = vmatpush.msra.mxu0 %v2478
  %2492 = vmatpush.msra.mxu0 %v2477
  %2493 = vmatpush.msra.mxu0 %v2476
  %2494 = vmatpush.msra.mxu0 %v2475
  %2495 = vmatpush.msra.mxu0 %v2474
  %2496 = vmatpush.msra.mxu0 %v2473
  %2497 = vmatpush.msra.mxu0 %v2472
  %2498 = vmatpush.msra.mxu0 %v2471
  %2499 = vmatpush.msra.mxu0 %v2470
  %2500 = vmatpush.msra.mxu0 %v2469
  %2501 = vmatpush.msra.mxu0 %v2468
  %2502 = vmatpush.msra.mxu0 %v2467
  %2503 = vmatmul.f32.gmra.mxu0 %v2466
  %v2504 = vpop.f32.mrf.mxu0
  %v2505 = vadd.f32 %v2485, %v2504
  %2506 = vdwg.mxu0
  %v2507 = vld [vmem:[%s15] sm:$0xff]
  %v2508 = vld [vmem:[%s15 + $0x8] sm:$0xff]
  %v2509 = vld [vmem:[%s15 + $0x10] sm:$0xff]
  %v2510 = vld [vmem:[%s15 + $0x18] sm:$0xff]
  %v2511 = vld [vmem:[%s15 + $0x20] sm:$0xff]
  %v2512 = vld [vmem:[%s15 + $0x28] sm:$0xff]
  %v2513 = vld [vmem:[%s15 + $0x30] sm:$0xff]
  %v2514 = vld [vmem:[%s15 + $0x38] sm:$0xff]
  %v2515 = vld [vmem:[%s15 + $0x40] sm:$0xff]
  %v2516 = vld [vmem:[%s15 + $0x48] sm:$0xff]
  %v2517 = vld [vmem:[%s15 + $0x50] sm:$0xff]
  %v2518 = vld [vmem:[%s15 + $0x58] sm:$0xff]
  %v2519 = vld [vmem:[%s15 + $0x60] sm:$0xff]
  %v2520 = vld [vmem:[%s15 + $0x68] sm:$0xff]
  %v2521 = vld [vmem:[%s15 + $0x70] sm:$0xff]
  %v2522 = vld [vmem:[%s15 + $0x78] sm:$0xff]
  %v2523 = vld [vmem:[%s16] sm:$0x1]
  %v2525 = vperm.slane %v2523, 0
  %2527 = vmatpush.msra.mxu0 %v2522
  %2528 = vmatpush.msra.mxu0 %v2521
  %2529 = vmatpush.msra.mxu0 %v2520
  %2530 = vmatpush.msra.mxu0 %v2519
  %2531 = vmatpush.msra.mxu0 %v2518
  %2532 = vmatpush.msra.mxu0 %v2517
  %2533 = vmatpush.msra.mxu0 %v2516
  %2534 = vmatpush.msra.mxu0 %v2515
  %2535 = vmatpush.msra.mxu0 %v2514
  %2536 = vmatpush.msra.mxu0 %v2513
  %2537 = vmatpush.msra.mxu0 %v2512
  %2538 = vmatpush.msra.mxu0 %v2511
  %2539 = vmatpush.msra.mxu0 %v2510
  %2540 = vmatpush.msra.mxu0 %v2509
  %2541 = vmatpush.msra.mxu0 %v2508
  %2542 = vmatpush.msra.mxu0 %v2507
  %2543 = vmatmul.f32.gmra.mxu0 %v2505
  %v2544 = vpop.f32.mrf.mxu0
  %v2545 = vadd.f32 %v2525, %v2544
  %2546 = vdwg.mxu0
  %v2547 = vlaneseq
  %v2548 = vand.u32 %v2547, 127
  %vm2549 = vcmp.lt.s32.totalorder %v2548, 3
  %v2550 = vsel %vm2549, %v2545, -1e+30
  %2551 = vmax.xlane.f32.xlu0 %v2550
  %v2552 = vpop.xlane.xlu0 %2551
  %v2553 = vsub.f32 %v2550, %v2552
  %v2554 = vmul.f32 %v2553, 1.442695
  %v2555 = vpow.pop %v2554
  %2556 = vadd.xlane.f32.xlu0 %v2555
  %v2557 = vpop.xlane.xlu0 %2556
  %v2558 = vlog2.pop %v2557
  %v2559 = vmul.f32 %v2558, 0.6931472
  %v2560 = vsub.f32 %v2553, %v2559
  %2561 = vst [vmem:[%s17] sm:$0xff] %v2560
  // Predicated region
  $region70: #{lsrnn_forward.1} parent=0 // pred_check
    _
  $region71: #{lsrnn_forward.1} parent=0 // pred_check_branch
    %2563 = sbr.rel (0) target = $region73
  $region72: #{lsrnn_forward.1} parent=0 // pred_region
    _
  $region73: #{lsrnn_forward.1} parent=0 // pred_fallthru
    _
  // Predicated region
  $region74: #{lsrnn_forward.1} parent=0 // pred_check
    _
  $region75: #{lsrnn_forward.1} parent=0 // pred_check_branch
    %2565 = sbr.rel (0) target = $region77
  $region76: #{lsrnn_forward.1} parent=0 // pred_region
    _
  $region77: #{lsrnn_forward.1} parent=0 // pred_fallthru
    _

</llo_original>
